<compile_context>
chip_gen: v7x
topology: tpu7x:2x2x1
jax: 0.10.0
libtpu: 0.0.40
codegen_flags: <defaults>
</compile_context>

<pallas_src>
import functools
import re

import jax
import jax.numpy as jnp
from jax import lax
from jax.experimental import pallas as pl
from jax.experimental.pallas import tpu as pltpu


def _round_up(x, m):
    return ((x + m - 1) // m) * m


@functools.lru_cache(maxsize=1)
def _tpu_generation():
    try:
        kind = jax.devices()[0].device_kind.lower()
        m = re.search(r"v(\d+)", kind)
        if m:
            return int(m.group(1))
    except Exception:
        pass
    return 0


@functools.lru_cache(maxsize=1)
def _vmem_capacity_bytes():
    """Physical per-core VMEM (generation aware, with safe fallbacks)."""
    try:
        info = pltpu.get_tpu_info()
        for attr in ("vmem_capacity_bytes", "vmem_bytes", "vmem_size_bytes"):
            v = getattr(info, attr, None)
            if v:
                return int(v)
    except Exception:
        pass
    gen = _tpu_generation()
    if gen in (5, 6):
        return 128 * 2**20
    return 64 * 2**20          # v7x / unknown: be conservative


@functools.lru_cache(maxsize=1)
def _roll_is_usable():
    """Probe that pltpu.roll on the sublane axis lowers and matches jnp.roll."""
    def k(x_ref, o_ref):
        o_ref[...] = pltpu.roll(x_ref[...], shift=19, axis=1)

    x = jnp.arange(16 * 24 * 128, dtype=jnp.float32).reshape(16, 24, 128)
    try:
        y = pl.pallas_call(k, out_shape=jax.ShapeDtypeStruct(x.shape, x.dtype))(x)
        return bool(jnp.array_equal(y, jnp.roll(x, 19, axis=1)))
    except Exception:
        return False


@functools.lru_cache(maxsize=1)
def _buffered1_usable():
    """Probe that pipeline_mode=pl.Buffered(1) compiles & is correct for a
    grid-invariant (weight-like) operand."""
    def k(x_ref, w_ref, o_ref):
        o_ref[...] = x_ref[...] + w_ref[...]

    x = jnp.arange(2 * 16 * 128, dtype=jnp.float32).reshape(2, 16, 128)
    w = jnp.full((8, 128), 3.0, jnp.float32)
    try:
        y = pl.pallas_call(
            k,
            out_shape=jax.ShapeDtypeStruct((2, 16, 128), jnp.float32),
            grid=(2, 2),
            in_specs=[pl.BlockSpec((1, 8, 128), lambda b, i: (b, i, 0)),
                      pl.BlockSpec((8, 128), lambda b, i: (0, 0),
                                   pipeline_mode=pl.Buffered(1))],
            out_specs=pl.BlockSpec((1, 8, 128), lambda b, i: (b, i, 0)),
        )(x, w)
        return bool(jnp.allclose(y, x + 3.0))
    except Exception:
        return False


def _strip_vmem_bytes(th, w, wtot, cp, hp, *, weight_bufs=2, h1_bytes=4):
    """Rough per-strip VMEM estimate (pipelined IO blocks + weights + live)."""
    f32, bf16 = 4, 2
    io = 2 * f32 * cp * (th * wtot + 8 * wtot + th * w)           # double-buffered blocks
    wts = weight_bufs * (bf16 * 2 * cp * hp) + 2 * f32 * (56 * cp + hp)
    scratch = f32 * (th + 6) * wtot * cp                          # xwin scratch
    live = f32 * cp * th * (wtot + 4 * w) + th * w * hp * (h1_bytes + bf16)
    return int(1.4 * (io + wts + scratch + live))


def _pick_tile_h(B, H, W, Wtot, Cp, Hdp, budget_bytes, **est_kw):
    cap = max(8, _round_up(H, 8))
    keep_two = _tpu_generation() >= 7       # v7x: keep both TensorCores busy
    best = 8
    for th in (8, 16, 32, 64, 128, 256):
        if th > cap:
            break
        if _strip_vmem_bytes(th, W, Wtot, Cp, Hdp, **est_kw) > budget_bytes:
            break
        if keep_two and B * (-(-H // th)) < 2 and B * (-(-H // best)) >= 2:
            break
        best = th
    return best


def _tree_sum(terms):
    while len(terms) > 1:
        nxt = [terms[i] + terms[i + 1] for i in range(0, len(terms) - 1, 2)]
        if len(terms) % 2:
            nxt.append(terms[-1])
        terms = nxt
    return terms[0]


def _convnext_block_kernel(xa_ref, xb_ref, wdw_ref, bdw_ref,
                           lnw_ref, lnb_ref, w1_ref, b1_ref, w2_ref, b2_ref,
                           gamma_ref, o_ref, xwin_ref, *,
                           true_c, use_roll, bf16_h1, exact_gelu):
    # xa_ref : (1, TH, Wtot, Cp)  body rows of the spatially padded input
    # xb_ref : (1, 8,  Wtot, Cp)  next strip -> first 6 rows are the dwconv halo
    # o_ref  : (1, TH, W,    Cp)
    # xwin_ref: VMEM scratch (TH+6, Wtot, Cp) f32 holding the full conv window
    _, TH, W, Cp = o_ref.shape
    Wtot = xa_ref.shape[2]

    # Assemble the conv window in the persistent VMEM scratch (no concat temp).
    xwin_ref[0:TH] = xa_ref[0]
    xwin_ref[TH:TH + 6] = xb_ref[0, 0:6]
    xwin = xwin_ref[...]                               # (TH+6, Wtot, Cp) f32
    wdw = wdw_ref[...]                                 # (7, 7, Cp) f32

    # ---- depthwise 7x7 conv, f32 accumulation -------------------------------
    # 7 sublane rolls (XLU) hoisted out of the kh loop; rolled window is cropped
    # to W columns BEFORE the multiply-adds; the 7 kh-terms per kw are tree-summed
    # so the running accumulator is only touched 7 times (not 49).
    cols = []
    for kw in range(7):
        if use_roll:
            xs = xwin if kw == 0 else pltpu.roll(xwin, shift=Wtot - kw, axis=1)
            xs = xs[:, 0:W, :]
        else:
            xs = xwin[:, kw:kw + W, :]
        cols.append(_tree_sum([xs[kh:kh + TH] * wdw[kh, kw] for kh in range(7)]))
    acc = _tree_sum(cols) + bdw_ref[0]                 # (TH, W, Cp)

    # ---- LayerNorm over the true C channels (centered, PyTorch-style) -------
    inv_c = 1.0 / float(true_c)
    mean = jnp.sum(acc, axis=-1, keepdims=True) * inv_c
    xc = acc - mean
    if Cp != true_c:
        # Padded lanes of acc are 0 -> xc would be -mean there; mask them out of
        # the variance so statistics cover only the true channels.
        lane = lax.broadcasted_iota(jnp.int32, (1, Cp), 1)
        xc = jnp.where(lane < true_c, xc, 0.0)
    var = jnp.sum(xc * xc, axis=-1, keepdims=True) * inv_c
    xn = xc * lax.rsqrt(var + 1e-6) * lnw_ref[0] + lnb_ref[0]   # padded lanes -> 0

    # ---- MLP: bf16 operands on the MXU, f32 accumulation ---------------------
    xf = xn.reshape(TH * W, Cp).astype(jnp.bfloat16)
    h1 = jnp.dot(xf, w1_ref[...], preferred_element_type=jnp.float32)
    if bf16_h1:
        # v6e/v7x: bias + GELU on bf16 VALUs (halves the widest live tensor).
        h1 = h1.astype(jnp.bfloat16) + b1_ref[0].astype(jnp.bfloat16)
        h1 = jax.nn.gelu(h1, approximate=not exact_gelu)
    else:
        h1 = jax.nn.gelu(h1 + b1_ref[0], approximate=not exact_gelu)
        h1 = h1.astype(jnp.bfloat16)
    h2 = jnp.dot(h1, w2_ref[...], preferred_element_type=jnp.float32) + b2_ref[0]

    # ---- layer scale (gamma) + residual (read back from the conv window) -----
    shortcut = xwin_ref[3:TH + 3, 3:W + 3, :]          # original pixels, exact f32
    y = h2.reshape(TH, W, Cp) * gamma_ref[0] + shortcut
    o_ref[0] = y.astype(o_ref.dtype)


def convnext_block_pallas(x_nchw, params, *, tile_h=None, exact_gelu=False):
    """x_nchw: (B, C, H, W). Returns (B, C, H, W) float32."""
    wdw, bdw, lnw, lnb, w1, b1, w2, b2, gamma = params
    x_nchw = x_nchw.astype(jnp.float32)
    B, C, H, W = x_nchw.shape
    hidden = w1.shape[1]

    Cp = _round_up(C, 128)                 # lane-dense channels
    Hdp = _round_up(hidden, 128)           # lane-dense MLP hidden dim
    Wtot = _round_up(W + 6, 8)             # 3 + W + right pad (>=3), sublane aligned
    wr = Wtot - (W + 3)

    use_buf1 = _buffered1_usable()
    bf16_h1 = _tpu_generation() >= 6       # bf16 VALUs only on v6e and later
    vmem_cap = _vmem_capacity_bytes()
    budget = int(0.72 * (vmem_cap - 8 * 2**20))   # ~40 MiB on v7x, ~86 MiB on v5e/v6e
    est_kw = dict(weight_bufs=1 if use_buf1 else 2, h1_bytes=2 if bf16_h1 else 4)

    TH = int(tile_h) if tile_h else _pick_tile_h(B, H, W, Wtot, Cp, Hdp, budget, **est_kw)
    assert TH % 8 == 0 and TH >= 8, "tile_h must be a positive multiple of 8"
    Hout = _round_up(H, TH)
    nH = Hout // TH

    # ---- parameters: pad channel / hidden dims with zeros (keeps padded lanes 0)
    wdw_p = jnp.pad(wdw, ((0, 0), (0, 0), (0, Cp - C))).astype(jnp.float32)
    bdw_p = jnp.pad(bdw, (0, Cp - C)).reshape(1, Cp).astype(jnp.float32)
    lnw_p = jnp.pad(lnw, (0, Cp - C)).reshape(1, Cp).astype(jnp.float32)
    lnb_p = jnp.pad(lnb, (0, Cp - C)).reshape(1, Cp).astype(jnp.float32)
    w1_p = jnp.pad(w1, ((0, Cp - C), (0, Hdp - hidden))).astype(jnp.bfloat16)
    b1_p = jnp.pad(b1, (0, Hdp - hidden)).reshape(1, Hdp).astype(jnp.float32)
    w2_p = jnp.pad(w2, ((0, Hdp - hidden), (0, Cp - C))).astype(jnp.bfloat16)
    b2_p = jnp.pad(b2, (0, Cp - C)).reshape(1, Cp).astype(jnp.float32)
    gamma_p = jnp.pad(gamma, (0, Cp - C)).reshape(1, Cp).astype(jnp.float32)

    # ---- activations: single fused pad (NHWC, channel pad + spatial halo) -----
    # rows: 3 (conv pad) + Hout + 5 (conv pad + halo-block slack) = Hout + 8
    x_nhwc = jnp.transpose(x_nchw, (0, 2, 3, 1))                       # (B,H,W,C)
    xpad = jnp.pad(x_nhwc, ((0, 0), (3, (Hout - H) + 5), (3, wr), (0, Cp - C)))

    est = _strip_vmem_bytes(TH, W, Wtot, Cp, Hdp, **est_kw)
    vmem_limit = int(min(vmem_cap - 8 * 2**20, max(32 * 2**20, 2 * est)))

    kernel = functools.partial(_convnext_block_kernel, true_c=C,
                               use_roll=_roll_is_usable(),
                               bf16_h1=bf16_h1, exact_gelu=exact_gelu)

    def build_and_run(buf1):
        wt_kw = {"pipeline_mode": pl.Buffered(1)} if buf1 else {}
        grid_spec = pltpu.PrefetchScalarGridSpec(
            num_scalar_prefetch=0,
            grid=(B, nH),
            in_specs=[
                pl.BlockSpec((1, TH, Wtot, Cp), lambda b, i: (b, i, 0, 0)),        # body rows
                pl.BlockSpec((1, 8, Wtot, Cp),
                             lambda b, i: (b, (i + 1) * (TH // 8), 0, 0)),         # 6-row halo
                pl.BlockSpec((7, 7, Cp), lambda b, i: (0, 0, 0)),                  # dw weight
                pl.BlockSpec((1, Cp), lambda b, i: (0, 0)),                        # dw bias
                pl.BlockSpec((1, Cp), lambda b, i: (0, 0)),                        # ln weight
                pl.BlockSpec((1, Cp), lambda b, i: (0, 0)),                        # ln bias
                pl.BlockSpec((Cp, Hdp), lambda b, i: (0, 0), **wt_kw),             # fc1 w (bf16)
                pl.BlockSpec((1, Hdp), lambda b, i: (0, 0)),                       # fc1 b
                pl.BlockSpec((Hdp, Cp), lambda b, i: (0, 0), **wt_kw),             # fc2 w (bf16)
                pl.BlockSpec((1, Cp), lambda b, i: (0, 0)),                        # fc2 b
                pl.BlockSpec((1, Cp), lambda b, i: (0, 0)),                        # gamma
            ],
            out_specs=pl.BlockSpec((1, TH, W, Cp), lambda b, i: (b, i, 0, 0)),
            scratch_shapes=[pltpu.VMEM((TH + 6, Wtot, Cp), jnp.float32)],
        )
        return pl.pallas_call(
            kernel,
            out_shape=jax.ShapeDtypeStruct((B, Hout, W, Cp), jnp.float32),
            grid_spec=grid_spec,
            compiler_params=pltpu.CompilerParams(
                dimension_semantics=("parallel", "parallel"),
                vmem_limit_bytes=vmem_limit),
        )(xpad, xpad, wdw_p, bdw_p, lnw_p, lnb_p, w1_p, b1_p, w2_p, b2_p, gamma_p)

    if use_buf1:
        try:
            out_p = build_and_run(True)
        except Exception:
            out_p = build_and_run(False)
    else:
        out_p = build_and_run(False)

    return jnp.transpose(out_p[:, :H, :, :C], (0, 3, 1, 2))


def convnext_block_ref(x_nchw, params):
    """Plain-JAX reference mirroring the PyTorch forward exactly (all f32, erf GELU)."""
    wdw, bdw, lnw, lnb, w1, b1, w2, b2, gamma = params
    B, C, H, W = x_nchw.shape
    w_oihw = jnp.transpose(wdw, (2, 0, 1))[:, None, :, :]
    dw = lax.conv_general_dilated(
        x_nchw, w_oihw, window_strides=(1, 1), padding=((3, 3), (3, 3)),
        dimension_numbers=("NCHW", "OIHW", "NCHW"), feature_group_count=C)
    dw = dw + bdw.reshape(1, C, 1, 1)
    xl = jnp.transpose(dw, (0, 2, 3, 1))
    mean = jnp.mean(xl, axis=-1, keepdims=True)
    var = jnp.mean((xl - mean) ** 2, axis=-1, keepdims=True)
    xl = (xl - mean) * lax.rsqrt(var + 1e-6) * lnw + lnb
    h = jax.nn.gelu(xl @ w1 + b1, approximate=False)
    y = h @ w2 + b2
    y = jnp.transpose(y, (0, 3, 1, 2)) * gamma.reshape(1, C, 1, 1)
    return y + x_nchw


def make_params(key, dim, mlp_ratio=4, ls_init_value=1e-6):
    hidden = int(mlp_ratio * dim)
    ks = jax.random.split(key, 8)
    wdw = jax.random.normal(ks[0], (7, 7, dim), jnp.float32) * 0.05    # [kh, kw, c]
    bdw = jax.random.normal(ks[1], (dim,), jnp.float32) * 0.05
    lnw = jnp.ones((dim,), jnp.float32)
    lnb = jnp.zeros((dim,), jnp.float32)
    w1 = jax.random.normal(ks[2], (dim, hidden), jnp.float32) * 0.05   # fc1.weight.T
    b1 = jax.random.normal(ks[3], (hidden,), jnp.float32) * 0.05
    w2 = jax.random.normal(ks[4], (hidden, dim), jnp.float32) * 0.05   # fc2.weight.T
    b2 = jax.random.normal(ks[5], (dim,), jnp.float32) * 0.05
    gamma = ls_init_value * jnp.ones((dim,), jnp.float32)              # layer scale
    return (wdw, bdw, lnw, lnb, w1, b1, w2, b2, gamma)


if __name__ == "__main__":
    B, C, H, W = 2, 8, 16, 16
    key = jax.random.PRNGKey(0)
    kx, kp = jax.random.split(key)
    x = jax.random.normal(kx, (B, C, H, W), jnp.float32)

    # ls_init=1e-6 is the module default (branch nearly invisible -> tight tol,
    # validates the exact f32 residual path); ls_init=1.0 makes the MLP branch
    # visible so the bf16-MXU / tanh-GELU path is validated at looser tolerance.
    for ls_init, tol in ((1e-6, 1e-4), (1.0, 3e-2)):
        params = make_params(kp, C, ls_init_value=ls_init)
        ref = jax.block_until_ready(convnext_block_ref(x, params))
        for th in (8, None):   # 8 -> two H-strips (exercises the halo); None -> auto
            out = jax.block_until_ready(convnext_block_pallas(x, params, tile_h=th))
            assert out.shape == (B, C, H, W)
            err = float(jnp.max(jnp.abs(out - ref)))
            assert err < tol, f"mismatch vs reference: ls={ls_init} tile_h={th} err={err}"
    print("KERNEL_OK")
</pallas_src>

<mosaic_0001>
module attributes {stable_mosaic.version = 11 : i64} {
  func.func @k(%arg0: i32, %arg1: i32, %arg2: memref<1x8x128xf32, #tpu.memory_space<vmem>>, %arg3: memref<8x128xf32, #tpu.memory_space<vmem>>, %arg4: memref<1x8x128xf32, #tpu.memory_space<vmem>>) attributes {dimension_semantics = [#tpu.dimension_semantics<arbitrary>, #tpu.dimension_semantics<arbitrary>], iteration_bounds = array<i64: 2, 2>, scalar_prefetch = 0 : i64, scratch_operands = 0 : i64, tpu.core_type = #tpu.core_type<tc>, window_params = [{transform_indices = @transform_0, window_bounds = array<i64: 1, 8, 128>}, {pipeline_mode = #tpu.pipeline_mode<synchronous>, transform_indices = @transform_1, window_bounds = array<i64: 8, 128>}, {transform_indices = @transform_2, window_bounds = array<i64: 1, 8, 128>}]} {
    %c0 = arith.constant 0 : index
    %c0_0 = arith.constant 0 : index
    %c0_1 = arith.constant 0 : index
    %0 = vector.load %arg2[%c0, %c0_0, %c0_1] : memref<1x8x128xf32, #tpu.memory_space<vmem>>, vector<1x8x128xf32>
    %c0_2 = arith.constant 0 : index
    %c0_3 = arith.constant 0 : index
    %1 = vector.load %arg3[%c0_2, %c0_3] : memref<8x128xf32, #tpu.memory_space<vmem>>, vector<8x128xf32>
    %2 = vector.shape_cast %1 : vector<8x128xf32> to vector<1x8x128xf32>
    %3 = arith.addf %0, %2 : vector<1x8x128xf32>
    %c0_4 = arith.constant 0 : index
    %c0_5 = arith.constant 0 : index
    %c0_6 = arith.constant 0 : index
    %4 = vector.load %arg4[%c0_4, %c0_5, %c0_6] : memref<1x8x128xf32, #tpu.memory_space<vmem>>, vector<1x8x128xf32>
    tpu.vector_store %arg4[%c0_4, %c0_5, %c0_6], %3 {strides = array<i32>} : memref<1x8x128xf32, #tpu.memory_space<vmem>>, vector<1x8x128xf32>,
    return
  }
  func.func @transform_0(%arg0: i32, %arg1: i32) -> (i32, i32, i32) {
    %c0_i32 = arith.constant 0 : i32
    %c0_i32_0 = arith.constant 0 : i32
    return %arg0, %arg1, %c0_i32 : i32, i32, i32
  }
  func.func @transform_1(%arg0: i32, %arg1: i32) -> (i32, i32) {
    %c0_i32 = arith.constant 0 : i32
    %c0_i32_0 = arith.constant 0 : i32
    %c0_i32_1 = arith.constant 0 : i32
    return %c0_i32, %c0_i32_0 : i32, i32
  }
  func.func @transform_2(%arg0: i32, %arg1: i32) -> (i32, i32, i32) {
    %c0_i32 = arith.constant 0 : i32
    %c0_i32_0 = arith.constant 0 : i32
    return %arg0, %arg1, %c0_i32 : i32, i32, i32
  }
}

module attributes {stable_mosaic.version = 11 : i64} {
  func.func @k(%arg0: memref<16x24x128xf32, #tpu.memory_space<vmem>>, %arg1: memref<16x24x128xf32, #tpu.memory_space<vmem>>) attributes {dimension_semantics = [], scalar_prefetch = 0 : i64, scratch_operands = 0 : i64, tpu.core_type = #tpu.core_type<tc>} {
    %c0 = arith.constant 0 : index
    %c0_0 = arith.constant 0 : index
    %c0_1 = arith.constant 0 : index
    %0 = vector.load %arg0[%c0, %c0_0, %c0_1] : memref<16x24x128xf32, #tpu.memory_space<vmem>>, vector<16x24x128xf32>
    %c19_i32 = arith.constant 19 : i32
    %1 = tpu.dynamic_rotate %0 by %c19_i32 dim 1 : vector<16x24x128xf32>, i32 -> vector<16x24x128xf32>
    %c0_2 = arith.constant 0 : index
    %c0_3 = arith.constant 0 : index
    %c0_4 = arith.constant 0 : index
    %2 = vector.load %arg1[%c0_2, %c0_3, %c0_4] : memref<16x24x128xf32, #tpu.memory_space<vmem>>, vector<16x24x128xf32>
    tpu.vector_store %arg1[%c0_2, %c0_3, %c0_4], %1 {strides = array<i32>} : memref<16x24x128xf32, #tpu.memory_space<vmem>>, vector<16x24x128xf32>,
    return
  }
}

module attributes {stable_mosaic.version = 11 : i64} {
  func.func @_convnext_block_kernel(%arg0: i32, %arg1: i32, %arg2: memref<1x8x24x128xf32, #tpu.memory_space<vmem>>, %arg3: memref<1x8x24x128xf32, #tpu.memory_space<vmem>>, %arg4: memref<7x7x128xf32, #tpu.memory_space<vmem>>, %arg5: memref<1x128xf32, #tpu.memory_space<vmem>>, %arg6: memref<1x128xf32, #tpu.memory_space<vmem>>, %arg7: memref<1x128xf32, #tpu.memory_space<vmem>>, %arg8: memref<128x128xbf16, #tpu.memory_space<vmem>>, %arg9: memref<1x128xf32, #tpu.memory_space<vmem>>, %arg10: memref<128x128xbf16, #tpu.memory_space<vmem>>, %arg11: memref<1x128xf32, #tpu.memory_space<vmem>>, %arg12: memref<1x128xf32, #tpu.memory_space<vmem>>, %arg13: memref<1x8x16x128xf32, #tpu.memory_space<vmem>>, %arg14: memref<14x24x128xf32, #tpu.memory_space<vmem>>) attributes {dimension_semantics = [#tpu.dimension_semantics<parallel>, #tpu.dimension_semantics<parallel>], iteration_bounds = array<i64: 2, 2>, scalar_prefetch = 0 : i64, scratch_operands = 1 : i64, tpu.core_type = #tpu.core_type<tc>, window_params = [{transform_indices = @transform_0, window_bounds = array<i64: 1, 8, 24, 128>}, {transform_indices = @transform_1, window_bounds = array<i64: 1, 8, 24, 128>}, {pipeline_mode = #tpu.pipeline_mode<synchronous>, transform_indices = @transform_2, window_bounds = array<i64: 7, 7, 128>}, {pipeline_mode = #tpu.pipeline_mode<synchronous>, transform_indices = @transform_3, window_bounds = array<i64: 1, 128>}, {pipeline_mode = #tpu.pipeline_mode<synchronous>, transform_indices = @transform_4, window_bounds = array<i64: 1, 128>}, {pipeline_mode = #tpu.pipeline_mode<synchronous>, transform_indices = @transform_5, window_bounds = array<i64: 1, 128>}, {pipeline_mode = #tpu.pipeline_mode<synchronous>, transform_indices = @transform_6, window_bounds = array<i64: 128, 128>}, {pipeline_mode = #tpu.pipeline_mode<synchronous>, transform_indices = @transform_7, window_bounds = array<i64: 1, 128>}, {pipeline_mode = #tpu.pipeline_mode<synchronous>, transform_indices = @transform_8, window_bounds = array<i64: 128, 128>}, {pipeline_mode = #tpu.pipeline_mode<synchronous>, transform_indices = @transform_9, window_bounds = array<i64: 1, 128>}, {pipeline_mode = #tpu.pipeline_mode<synchronous>, transform_indices = @transform_10, window_bounds = array<i64: 1, 128>}, {transform_indices = @transform_11, window_bounds = array<i64: 1, 8, 16, 128>}]} {
    %c0 = arith.constant 0 : index
    %c0_0 = arith.constant 0 : index
    %c0_1 = arith.constant 0 : index
    %c0_2 = arith.constant 0 : index
    %0 = vector.load %arg2[%c0, %c0_0, %c0_1, %c0_2] : memref<1x8x24x128xf32, #tpu.memory_space<vmem>>, vector<1x8x24x128xf32>
    %1 = vector.shape_cast %0 : vector<1x8x24x128xf32> to vector<8x24x128xf32>
    %c0_3 = arith.constant 0 : index
    %c0_4 = arith.constant 0 : index
    %c0_5 = arith.constant 0 : index
    %2 = vector.load %arg14[%c0_3, %c0_4, %c0_5] : memref<14x24x128xf32, #tpu.memory_space<vmem>>, vector<8x24x128xf32>
    tpu.vector_store %arg14[%c0_3, %c0_4, %c0_5], %1 {strides = array<i32>} : memref<14x24x128xf32, #tpu.memory_space<vmem>>, vector<8x24x128xf32>,
    %c0_6 = arith.constant 0 : index
    %c0_7 = arith.constant 0 : index
    %c0_8 = arith.constant 0 : index
    %c0_9 = arith.constant 0 : index
    %3 = vector.load %arg3[%c0_6, %c0_7, %c0_8, %c0_9] : memref<1x8x24x128xf32, #tpu.memory_space<vmem>>, vector<1x6x24x128xf32>
    %4 = vector.shape_cast %3 : vector<1x6x24x128xf32> to vector<6x24x128xf32>
    %c8 = arith.constant 8 : index
    %c0_10 = arith.constant 0 : index
    %c0_11 = arith.constant 0 : index
    %5 = vector.load %arg14[%c8, %c0_10, %c0_11] : memref<14x24x128xf32, #tpu.memory_space<vmem>>, vector<6x24x128xf32>
    tpu.vector_store %arg14[%c8, %c0_10, %c0_11], %4 {strides = array<i32>} : memref<14x24x128xf32, #tpu.memory_space<vmem>>, vector<6x24x128xf32>,
    %c0_12 = arith.constant 0 : index
    %c0_13 = arith.constant 0 : index
    %c0_14 = arith.constant 0 : index
    %6 = vector.load %arg14[%c0_12, %c0_13, %c0_14] : memref<14x24x128xf32, #tpu.memory_space<vmem>>, vector<14x24x128xf32>
    %c0_15 = arith.constant 0 : index
    %c0_16 = arith.constant 0 : index
    %c0_17 = arith.constant 0 : index
    %7 = vector.load %arg4[%c0_15, %c0_16, %c0_17] : memref<7x7x128xf32, #tpu.memory_space<vmem>>, vector<7x7x128xf32>
    %8 = vector.extract_strided_slice %6 {offsets = [0, 0, 0], sizes = [14, 16, 128], strides = [1, 1, 1]} : vector<14x24x128xf32> to vector<14x16x128xf32>
    %9 = vector.extract_strided_slice %8 {offsets = [0, 0, 0], sizes = [8, 16, 128], strides = [1, 1, 1]} : vector<14x16x128xf32> to vector<8x16x128xf32>
    %10 = vector.extract_strided_slice %7 {offsets = [0, 0, 0], sizes = [1, 1, 128], strides = [1, 1, 1]} : vector<7x7x128xf32> to vector<1x1x128xf32>
    %11 = vector.shape_cast %10 : vector<1x1x128xf32> to vector<128xf32>
    %12 = vector.shape_cast %11 : vector<128xf32> to vector<1x1x128xf32>
    %13 = vector.broadcast %12 : vector<1x1x128xf32> to vector<8x16x128xf32>
    %14 = arith.mulf %9, %13 : vector<8x16x128xf32>
    %15 = vector.extract_strided_slice %8 {offsets = [1, 0, 0], sizes = [8, 16, 128], strides = [1, 1, 1]} : vector<14x16x128xf32> to vector<8x16x128xf32>
    %16 = vector.extract_strided_slice %7 {offsets = [1, 0, 0], sizes = [1, 1, 128], strides = [1, 1, 1]} : vector<7x7x128xf32> to vector<1x1x128xf32>
    %17 = vector.shape_cast %16 : vector<1x1x128xf32> to vector<128xf32>
    %18 = vector.shape_cast %17 : vector<128xf32> to vector<1x1x128xf32>
    %19 = vector.broadcast %18 : vector<1x1x128xf32> to vector<8x16x128xf32>
    %20 = arith.mulf %15, %19 : vector<8x16x128xf32>
    %21 = vector.extract_strided_slice %8 {offsets = [2, 0, 0], sizes = [8, 16, 128], strides = [1, 1, 1]} : vector<14x16x128xf32> to vector<8x16x128xf32>
    %22 = vector.extract_strided_slice %7 {offsets = [2, 0, 0], sizes = [1, 1, 128], strides = [1, 1, 1]} : vector<7x7x128xf32> to vector<1x1x128xf32>
    %23 = vector.shape_cast %22 : vector<1x1x128xf32> to vector<128xf32>
    %24 = vector.shape_cast %23 : vector<128xf32> to vector<1x1x128xf32>
    %25 = vector.broadcast %24 : vector<1x1x128xf32> to vector<8x16x128xf32>
    %26 = arith.mulf %21, %25 : vector<8x16x128xf32>
    %27 = vector.extract_strided_slice %8 {offsets = [3, 0, 0], sizes = [8, 16, 128], strides = [1, 1, 1]} : vector<14x16x128xf32> to vector<8x16x128xf32>
    %28 = vector.extract_strided_slice %7 {offsets = [3, 0, 0], sizes = [1, 1, 128], strides = [1, 1, 1]} : vector<7x7x128xf32> to vector<1x1x128xf32>
    %29 = vector.shape_cast %28 : vector<1x1x128xf32> to vector<128xf32>
    %30 = vector.shape_cast %29 : vector<128xf32> to vector<1x1x128xf32>
    %31 = vector.broadcast %30 : vector<1x1x128xf32> to vector<8x16x128xf32>
    %32 = arith.mulf %27, %31 : vector<8x16x128xf32>
    %33 = vector.extract_strided_slice %8 {offsets = [4, 0, 0], sizes = [8, 16, 128], strides = [1, 1, 1]} : vector<14x16x128xf32> to vector<8x16x128xf32>
    %34 = vector.extract_strided_slice %7 {offsets = [4, 0, 0], sizes = [1, 1, 128], strides = [1, 1, 1]} : vector<7x7x128xf32> to vector<1x1x128xf32>
    %35 = vector.shape_cast %34 : vector<1x1x128xf32> to vector<128xf32>
    %36 = vector.shape_cast %35 : vector<128xf32> to vector<1x1x128xf32>
    %37 = vector.broadcast %36 : vector<1x1x128xf32> to vector<8x16x128xf32>
    %38 = arith.mulf %33, %37 : vector<8x16x128xf32>
    %39 = vector.extract_strided_slice %8 {offsets = [5, 0, 0], sizes = [8, 16, 128], strides = [1, 1, 1]} : vector<14x16x128xf32> to vector<8x16x128xf32>
    %40 = vector.extract_strided_slice %7 {offsets = [5, 0, 0], sizes = [1, 1, 128], strides = [1, 1, 1]} : vector<7x7x128xf32> to vector<1x1x128xf32>
    %41 = vector.shape_cast %40 : vector<1x1x128xf32> to vector<128xf32>
    %42 = vector.shape_cast %41 : vector<128xf32> to vector<1x1x128xf32>
    %43 = vector.broadcast %42 : vector<1x1x128xf32> to vector<8x16x128xf32>
    %44 = arith.mulf %39, %43 : vector<8x16x128xf32>
    %45 = vector.extract_strided_slice %8 {offsets = [6, 0, 0], sizes = [8, 16, 128], strides = [1, 1, 1]} : vector<14x16x128xf32> to vector<8x16x128xf32>
    %46 = vector.extract_strided_slice %7 {offsets = [6, 0, 0], sizes = [1, 1, 128], strides = [1, 1, 1]} : vector<7x7x128xf32> to vector<1x1x128xf32>
    %47 = vector.shape_cast %46 : vector<1x1x128xf32> to vector<128xf32>
    %48 = vector.shape_cast %47 : vector<128xf32> to vector<1x1x128xf32>
    %49 = vector.broadcast %48 : vector<1x1x128xf32> to vector<8x16x128xf32>
    %50 = arith.mulf %45, %49 : vector<8x16x128xf32>
    %51 = arith.addf %14, %20 : vector<8x16x128xf32>
    %52 = arith.addf %26, %32 : vector<8x16x128xf32>
    %53 = arith.addf %38, %44 : vector<8x16x128xf32>
    %54 = arith.addf %51, %52 : vector<8x16x128xf32>
    %55 = arith.addf %53, %50 : vector<8x16x128xf32>
    %56 = arith.addf %54, %55 : vector<8x16x128xf32>
    %57 = vector.extract_strided_slice %6 {offsets = [0, 1, 0], sizes = [14, 16, 128], strides = [1, 1, 1]} : vector<14x24x128xf32> to vector<14x16x128xf32>
    %58 = vector.extract_strided_slice %57 {offsets = [0, 0, 0], sizes = [8, 16, 128], strides = [1, 1, 1]} : vector<14x16x128xf32> to vector<8x16x128xf32>
    %59 = vector.extract_strided_slice %7 {offsets = [0, 1, 0], sizes = [1, 1, 128], strides = [1, 1, 1]} : vector<7x7x128xf32> to vector<1x1x128xf32>
    %60 = vector.shape_cast %59 : vector<1x1x128xf32> to vector<128xf32>
    %61 = vector.shape_cast %60 : vector<128xf32> to vector<1x1x128xf32>
    %62 = vector.broadcast %61 : vector<1x1x128xf32> to vector<8x16x128xf32>
    %63 = arith.mulf %58, %62 : vector<8x16x128xf32>
    %64 = vector.extract_strided_slice %57 {offsets = [1, 0, 0], sizes = [8, 16, 128], strides = [1, 1, 1]} : vector<14x16x128xf32> to vector<8x16x128xf32>
    %65 = vector.extract_strided_slice %7 {offsets = [1, 1, 0], sizes = [1, 1, 128], strides = [1, 1, 1]} : vector<7x7x128xf32> to vector<1x1x128xf32>
    %66 = vector.shape_cast %65 : vector<1x1x128xf32> to vector<128xf32>
    %67 = vector.shape_cast %66 : vector<128xf32> to vector<1x1x128xf32>
    %68 = vector.broadcast %67 : vector<1x1x128xf32> to vector<8x16x128xf32>
    %69 = arith.mulf %64, %68 : vector<8x16x128xf32>
    %70 = vector.extract_strided_slice %57 {offsets = [2, 0, 0], sizes = [8, 16, 128], strides = [1, 1, 1]} : vector<14x16x128xf32> to vector<8x16x128xf32>
    %71 = vector.extract_strided_slice %7 {offsets = [2, 1, 0], sizes = [1, 1, 128], strides = [1, 1, 1]} : vector<7x7x128xf32> to vector<1x1x128xf32>
    %72 = vector.shape_cast %71 : vector<1x1x128xf32> to vector<128xf32>
    %73 = vector.shape_cast %72 : vector<128xf32> to vector<1x1x128xf32>
    %74 = vector.broadcast %73 : vector<1x1x128xf32> to vector<8x16x128xf32>
    %75 = arith.mulf %70, %74 : vector<8x16x128xf32>
    %76 = vector.extract_strided_slice %57 {offsets = [3, 0, 0], sizes = [8, 16, 128], strides = [1, 1, 1]} : vector<14x16x128xf32> to vector<8x16x128xf32>
    %77 = vector.extract_strided_slice %7 {offsets = [3, 1, 0], sizes = [1, 1, 128], strides = [1, 1, 1]} : vector<7x7x128xf32> to vector<1x1x128xf32>
    %78 = vector.shape_cast %77 : vector<1x1x128xf32> to vector<128xf32>
    %79 = vector.shape_cast %78 : vector<128xf32> to vector<1x1x128xf32>
    %80 = vector.broadcast %79 : vector<1x1x128xf32> to vector<8x16x128xf32>
    %81 = arith.mulf %76, %80 : vector<8x16x128xf32>
    %82 = vector.extract_strided_slice %57 {offsets = [4, 0, 0], sizes = [8, 16, 128], strides = [1, 1, 1]} : vector<14x16x128xf32> to vector<8x16x128xf32>
    %83 = vector.extract_strided_slice %7 {offsets = [4, 1, 0], sizes = [1, 1, 128], strides = [1, 1, 1]} : vector<7x7x128xf32> to vector<1x1x128xf32>
    %84 = vector.shape_cast %83 : vector<1x1x128xf32> to vector<128xf32>
    %85 = vector.shape_cast %84 : vector<128xf32> to vector<1x1x128xf32>
    %86 = vector.broadcast %85 : vector<1x1x128xf32> to vector<8x16x128xf32>
    %87 = arith.mulf %82, %86 : vector<8x16x128xf32>
    %88 = vector.extract_strided_slice %57 {offsets = [5, 0, 0], sizes = [8, 16, 128], strides = [1, 1, 1]} : vector<14x16x128xf32> to vector<8x16x128xf32>
    %89 = vector.extract_strided_slice %7 {offsets = [5, 1, 0], sizes = [1, 1, 128], strides = [1, 1, 1]} : vector<7x7x128xf32> to vector<1x1x128xf32>
    %90 = vector.shape_cast %89 : vector<1x1x128xf32> to vector<128xf32>
    %91 = vector.shape_cast %90 : vector<128xf32> to vector<1x1x128xf32>
    %92 = vector.broadcast %91 : vector<1x1x128xf32> to vector<8x16x128xf32>
    %93 = arith.mulf %88, %92 : vector<8x16x128xf32>
    %94 = vector.extract_strided_slice %57 {offsets = [6, 0, 0], sizes = [8, 16, 128], strides = [1, 1, 1]} : vector<14x16x128xf32> to vector<8x16x128xf32>
    %95 = vector.extract_strided_slice %7 {offsets = [6, 1, 0], sizes = [1, 1, 128], strides = [1, 1, 1]} : vector<7x7x128xf32> to vector<1x1x128xf32>
    %96 = vector.shape_cast %95 : vector<1x1x128xf32> to vector<128xf32>
    %97 = vector.shape_cast %96 : vector<128xf32> to vector<1x1x128xf32>
    %98 = vector.broadcast %97 : vector<1x1x128xf32> to vector<8x16x128xf32>
    %99 = arith.mulf %94, %98 : vector<8x16x128xf32>
    %100 = arith.addf %63, %69 : vector<8x16x128xf32>
    %101 = arith.addf %75, %81 : vector<8x16x128xf32>
    %102 = arith.addf %87, %93 : vector<8x16x128xf32>
    %103 = arith.addf %100, %101 : vector<8x16x128xf32>
    %104 = arith.addf %102, %99 : vector<8x16x128xf32>
    %105 = arith.addf %103, %104 : vector<8x16x128xf32>
    %106 = vector.extract_strided_slice %6 {offsets = [0, 2, 0], sizes = [14, 16, 128], strides = [1, 1, 1]} : vector<14x24x128xf32> to vector<14x16x128xf32>
    %107 = vector.extract_strided_slice %106 {offsets = [0, 0, 0], sizes = [8, 16, 128], strides = [1, 1, 1]} : vector<14x16x128xf32> to vector<8x16x128xf32>
    %108 = vector.extract_strided_slice %7 {offsets = [0, 2, 0], sizes = [1, 1, 128], strides = [1, 1, 1]} : vector<7x7x128xf32> to vector<1x1x128xf32>
    %109 = vector.shape_cast %108 : vector<1x1x128xf32> to vector<128xf32>
    %110 = vector.shape_cast %109 : vector<128xf32> to vector<1x1x128xf32>
    %111 = vector.broadcast %110 : vector<1x1x128xf32> to vector<8x16x128xf32>
    %112 = arith.mulf %107, %111 : vector<8x16x128xf32>
    %113 = vector.extract_strided_slice %106 {offsets = [1, 0, 0], sizes = [8, 16, 128], strides = [1, 1, 1]} : vector<14x16x128xf32> to vector<8x16x128xf32>
    %114 = vector.extract_strided_slice %7 {offsets = [1, 2, 0], sizes = [1, 1, 128], strides = [1, 1, 1]} : vector<7x7x128xf32> to vector<1x1x128xf32>
    %115 = vector.shape_cast %114 : vector<1x1x128xf32> to vector<128xf32>
    %116 = vector.shape_cast %115 : vector<128xf32> to vector<1x1x128xf32>
    %117 = vector.broadcast %116 : vector<1x1x128xf32> to vector<8x16x128xf32>
    %118 = arith.mulf %113, %117 : vector<8x16x128xf32>
    %119 = vector.extract_strided_slice %106 {offsets = [2, 0, 0], sizes = [8, 16, 128], strides = [1, 1, 1]} : vector<14x16x128xf32> to vector<8x16x128xf32>
    %120 = vector.extract_strided_slice %7 {offsets = [2, 2, 0], sizes = [1, 1, 128], strides = [1, 1, 1]} : vector<7x7x128xf32> to vector<1x1x128xf32>
    %121 = vector.shape_cast %120 : vector<1x1x128xf32> to vector<128xf32>
    %122 = vector.shape_cast %121 : vector<128xf32> to vector<1x1x128xf32>
    %123 = vector.broadcast %122 : vector<1x1x128xf32> to vector<8x16x128xf32>
    %124 = arith.mulf %119, %123 : vector<8x16x128xf32>
    %125 = vector.extract_strided_slice %106 {offsets = [3, 0, 0], sizes = [8, 16, 128], strides = [1, 1, 1]} : vector<14x16x128xf32> to vector<8x16x128xf32>
    %126 = vector.extract_strided_slice %7 {offsets = [3, 2, 0], sizes = [1, 1, 128], strides = [1, 1, 1]} : vector<7x7x128xf32> to vector<1x1x128xf32>
    %127 = vector.shape_cast %126 : vector<1x1x128xf32> to vector<128xf32>
    %128 = vector.shape_cast %127 : vector<128xf32> to vector<1x1x128xf32>
    %129 = vector.broadcast %128 : vector<1x1x128xf32> to vector<8x16x128xf32>
    %130 = arith.mulf %125, %129 : vector<8x16x128xf32>
    %131 = vector.extract_strided_slice %106 {offsets = [4, 0, 0], sizes = [8, 16, 128], strides = [1, 1, 1]} : vector<14x16x128xf32> to vector<8x16x128xf32>
    %132 = vector.extract_strided_slice %7 {offsets = [4, 2, 0], sizes = [1, 1, 128], strides = [1, 1, 1]} : vector<7x7x128xf32> to vector<1x1x128xf32>
    %133 = vector.shape_cast %132 : vector<1x1x128xf32> to vector<128xf32>
    %134 = vector.shape_cast %133 : vector<128xf32> to vector<1x1x128xf32>
    %135 = vector.broadcast %134 : vector<1x1x128xf32> to vector<8x16x128xf32>
    %136 = arith.mulf %131, %135 : vector<8x16x128xf32>
    %137 = vector.extract_strided_slice %106 {offsets = [5, 0, 0], sizes = [8, 16, 128], strides = [1, 1, 1]} : vector<14x16x128xf32> to vector<8x16x128xf32>
    %138 = vector.extract_strided_slice %7 {offsets = [5, 2, 0], sizes = [1, 1, 128], strides = [1, 1, 1]} : vector<7x7x128xf32> to vector<1x1x128xf32>
    %139 = vector.shape_cast %138 : vector<1x1x128xf32> to vector<128xf32>
    %140 = vector.shape_cast %139 : vector<128xf32> to vector<1x1x128xf32>
    %141 = vector.broadcast %140 : vector<1x1x128xf32> to vector<8x16x128xf32>
    %142 = arith.mulf %137, %141 : vector<8x16x128xf32>
    %143 = vector.extract_strided_slice %106 {offsets = [6, 0, 0], sizes = [8, 16, 128], strides = [1, 1, 1]} : vector<14x16x128xf32> to vector<8x16x128xf32>
    %144 = vector.extract_strided_slice %7 {offsets = [6, 2, 0], sizes = [1, 1, 128], strides = [1, 1, 1]} : vector<7x7x128xf32> to vector<1x1x128xf32>
    %145 = vector.shape_cast %144 : vector<1x1x128xf32> to vector<128xf32>
    %146 = vector.shape_cast %145 : vector<128xf32> to vector<1x1x128xf32>
    %147 = vector.broadcast %146 : vector<1x1x128xf32> to vector<8x16x128xf32>
    %148 = arith.mulf %143, %147 : vector<8x16x128xf32>
    %149 = arith.addf %112, %118 : vector<8x16x128xf32>
    %150 = arith.addf %124, %130 : vector<8x16x128xf32>
    %151 = arith.addf %136, %142 : vector<8x16x128xf32>
    %152 = arith.addf %149, %150 : vector<8x16x128xf32>
    %153 = arith.addf %151, %148 : vector<8x16x128xf32>
    %154 = arith.addf %152, %153 : vector<8x16x128xf32>
    %155 = vector.extract_strided_slice %6 {offsets = [0, 3, 0], sizes = [14, 16, 128], strides = [1, 1, 1]} : vector<14x24x128xf32> to vector<14x16x128xf32>
    %156 = vector.extract_strided_slice %155 {offsets = [0, 0, 0], sizes = [8, 16, 128], strides = [1, 1, 1]} : vector<14x16x128xf32> to vector<8x16x128xf32>
    %157 = vector.extract_strided_slice %7 {offsets = [0, 3, 0], sizes = [1, 1, 128], strides = [1, 1, 1]} : vector<7x7x128xf32> to vector<1x1x128xf32>
    %158 = vector.shape_cast %157 : vector<1x1x128xf32> to vector<128xf32>
    %159 = vector.shape_cast %158 : vector<128xf32> to vector<1x1x128xf32>
    %160 = vector.broadcast %159 : vector<1x1x128xf32> to vector<8x16x128xf32>
    %161 = arith.mulf %156, %160 : vector<8x16x128xf32>
    %162 = vector.extract_strided_slice %155 {offsets = [1, 0, 0], sizes = [8, 16, 128], strides = [1, 1, 1]} : vector<14x16x128xf32> to vector<8x16x128xf32>
    %163 = vector.extract_strided_slice %7 {offsets = [1, 3, 0], sizes = [1, 1, 128], strides = [1, 1, 1]} : vector<7x7x128xf32> to vector<1x1x128xf32>
    %164 = vector.shape_cast %163 : vector<1x1x128xf32> to vector<128xf32>
    %165 = vector.shape_cast %164 : vector<128xf32> to vector<1x1x128xf32>
    %166 = vector.broadcast %165 : vector<1x1x128xf32> to vector<8x16x128xf32>
    %167 = arith.mulf %162, %166 : vector<8x16x128xf32>
    %168 = vector.extract_strided_slice %155 {offsets = [2, 0, 0], sizes = [8, 16, 128], strides = [1, 1, 1]} : vector<14x16x128xf32> to vector<8x16x128xf32>
    %169 = vector.extract_strided_slice %7 {offsets = [2, 3, 0], sizes = [1, 1, 128], strides = [1, 1, 1]} : vector<7x7x128xf32> to vector<1x1x128xf32>
    %170 = vector.shape_cast %169 : vector<1x1x128xf32> to vector<128xf32>
    %171 = vector.shape_cast %170 : vector<128xf32> to vector<1x1x128xf32>
    %172 = vector.broadcast %171 : vector<1x1x128xf32> to vector<8x16x128xf32>
    %173 = arith.mulf %168, %172 : vector<8x16x128xf32>
    %174 = vector.extract_strided_slice %155 {offsets = [3, 0, 0], sizes = [8, 16, 128], strides = [1, 1, 1]} : vector<14x16x128xf32> to vector<8x16x128xf32>
    %175 = vector.extract_strided_slice %7 {offsets = [3, 3, 0], sizes = [1, 1, 128], strides = [1, 1, 1]} : vector<7x7x128xf32> to vector<1x1x128xf32>
    %176 = vector.shape_cast %175 : vector<1x1x128xf32> to vector<128xf32>
    %177 = vector.shape_cast %176 : vector<128xf32> to vector<1x1x128xf32>
    %178 = vector.broadcast %177 : vector<1x1x128xf32> to vector<8x16x128xf32>
    %179 = arith.mulf %174, %178 : vector<8x16x128xf32>
    %180 = vector.extract_strided_slice %155 {offsets = [4, 0, 0], sizes = [8, 16, 128], strides = [1, 1, 1]} : vector<14x16x128xf32> to vector<8x16x128xf32>
    %181 = vector.extract_strided_slice %7 {offsets = [4, 3, 0], sizes = [1, 1, 128], strides = [1, 1, 1]} : vector<7x7x128xf32> to vector<1x1x128xf32>
    %182 = vector.shape_cast %181 : vector<1x1x128xf32> to vector<128xf32>
    %183 = vector.shape_cast %182 : vector<128xf32> to vector<1x1x128xf32>
    %184 = vector.broadcast %183 : vector<1x1x128xf32> to vector<8x16x128xf32>
    %185 = arith.mulf %180, %184 : vector<8x16x128xf32>
    %186 = vector.extract_strided_slice %155 {offsets = [5, 0, 0], sizes = [8, 16, 128], strides = [1, 1, 1]} : vector<14x16x128xf32> to vector<8x16x128xf32>
    %187 = vector.extract_strided_slice %7 {offsets = [5, 3, 0], sizes = [1, 1, 128], strides = [1, 1, 1]} : vector<7x7x128xf32> to vector<1x1x128xf32>
    %188 = vector.shape_cast %187 : vector<1x1x128xf32> to vector<128xf32>
    %189 = vector.shape_cast %188 : vector<128xf32> to vector<1x1x128xf32>
    %190 = vector.broadcast %189 : vector<1x1x128xf32> to vector<8x16x128xf32>
    %191 = arith.mulf %186, %190 : vector<8x16x128xf32>
    %192 = vector.extract_strided_slice %155 {offsets = [6, 0, 0], sizes = [8, 16, 128], strides = [1, 1, 1]} : vector<14x16x128xf32> to vector<8x16x128xf32>
    %193 = vector.extract_strided_slice %7 {offsets = [6, 3, 0], sizes = [1, 1, 128], strides = [1, 1, 1]} : vector<7x7x128xf32> to vector<1x1x128xf32>
    %194 = vector.shape_cast %193 : vector<1x1x128xf32> to vector<128xf32>
    %195 = vector.shape_cast %194 : vector<128xf32> to vector<1x1x128xf32>
    %196 = vector.broadcast %195 : vector<1x1x128xf32> to vector<8x16x128xf32>
    %197 = arith.mulf %192, %196 : vector<8x16x128xf32>
    %198 = arith.addf %161, %167 : vector<8x16x128xf32>
    %199 = arith.addf %173, %179 : vector<8x16x128xf32>
    %200 = arith.addf %185, %191 : vector<8x16x128xf32>
    %201 = arith.addf %198, %199 : vector<8x16x128xf32>
    %202 = arith.addf %200, %197 : vector<8x16x128xf32>
    %203 = arith.addf %201, %202 : vector<8x16x128xf32>
    %204 = vector.extract_strided_slice %6 {offsets = [0, 4, 0], sizes = [14, 16, 128], strides = [1, 1, 1]} : vector<14x24x128xf32> to vector<14x16x128xf32>
    %205 = vector.extract_strided_slice %204 {offsets = [0, 0, 0], sizes = [8, 16, 128], strides = [1, 1, 1]} : vector<14x16x128xf32> to vector<8x16x128xf32>
    %206 = vector.extract_strided_slice %7 {offsets = [0, 4, 0], sizes = [1, 1, 128], strides = [1, 1, 1]} : vector<7x7x128xf32> to vector<1x1x128xf32>
    %207 = vector.shape_cast %206 : vector<1x1x128xf32> to vector<128xf32>
    %208 = vector.shape_cast %207 : vector<128xf32> to vector<1x1x128xf32>
    %209 = vector.broadcast %208 : vector<1x1x128xf32> to vector<8x16x128xf32>
    %210 = arith.mulf %205, %209 : vector<8x16x128xf32>
    %211 = vector.extract_strided_slice %204 {offsets = [1, 0, 0], sizes = [8, 16, 128], strides = [1, 1, 1]} : vector<14x16x128xf32> to vector<8x16x128xf32>
    %212 = vector.extract_strided_slice %7 {offsets = [1, 4, 0], sizes = [1, 1, 128], strides = [1, 1, 1]} : vector<7x7x128xf32> to vector<1x1x128xf32>
    %213 = vector.shape_cast %212 : vector<1x1x128xf32> to vector<128xf32>
    %214 = vector.shape_cast %213 : vector<128xf32> to vector<1x1x128xf32>
    %215 = vector.broadcast %214 : vector<1x1x128xf32> to vector<8x16x128xf32>
    %216 = arith.mulf %211, %215 : vector<8x16x128xf32>
    %217 = vector.extract_strided_slice %204 {offsets = [2, 0, 0], sizes = [8, 16, 128], strides = [1, 1, 1]} : vector<14x16x128xf32> to vector<8x16x128xf32>
    %218 = vector.extract_strided_slice %7 {offsets = [2, 4, 0], sizes = [1, 1, 128], strides = [1, 1, 1]} : vector<7x7x128xf32> to vector<1x1x128xf32>
    %219 = vector.shape_cast %218 : vector<1x1x128xf32> to vector<128xf32>
    %220 = vector.shape_cast %219 : vector<128xf32> to vector<1x1x128xf32>
    %221 = vector.broadcast %220 : vector<1x1x128xf32> to vector<8x16x128xf32>
    %222 = arith.mulf %217, %221 : vector<8x16x128xf32>
    %223 = vector.extract_strided_slice %204 {offsets = [3, 0, 0], sizes = [8, 16, 128], strides = [1, 1, 1]} : vector<14x16x128xf32> to vector<8x16x128xf32>
    %224 = vector.extract_strided_slice %7 {offsets = [3, 4, 0], sizes = [1, 1, 128], strides = [1, 1, 1]} : vector<7x7x128xf32> to vector<1x1x128xf32>
    %225 = vector.shape_cast %224 : vector<1x1x128xf32> to vector<128xf32>
    %226 = vector.shape_cast %225 : vector<128xf32> to vector<1x1x128xf32>
    %227 = vector.broadcast %226 : vector<1x1x128xf32> to vector<8x16x128xf32>
    %228 = arith.mulf %223, %227 : vector<8x16x128xf32>
    %229 = vector.extract_strided_slice %204 {offsets = [4, 0, 0], sizes = [8, 16, 128], strides = [1, 1, 1]} : vector<14x16x128xf32> to vector<8x16x128xf32>
    %230 = vector.extract_strided_slice %7 {offsets = [4, 4, 0], sizes = [1, 1, 128], strides = [1, 1, 1]} : vector<7x7x128xf32> to vector<1x1x128xf32>
    %231 = vector.shape_cast %230 : vector<1x1x128xf32> to vector<128xf32>
    %232 = vector.shape_cast %231 : vector<128xf32> to vector<1x1x128xf32>
    %233 = vector.broadcast %232 : vector<1x1x128xf32> to vector<8x16x128xf32>
    %234 = arith.mulf %229, %233 : vector<8x16x128xf32>
    %235 = vector.extract_strided_slice %204 {offsets = [5, 0, 0], sizes = [8, 16, 128], strides = [1, 1, 1]} : vector<14x16x128xf32> to vector<8x16x128xf32>
    %236 = vector.extract_strided_slice %7 {offsets = [5, 4, 0], sizes = [1, 1, 128], strides = [1, 1, 1]} : vector<7x7x128xf32> to vector<1x1x128xf32>
    %237 = vector.shape_cast %236 : vector<1x1x128xf32> to vector<128xf32>
    %238 = vector.shape_cast %237 : vector<128xf32> to vector<1x1x128xf32>
    %239 = vector.broadcast %238 : vector<1x1x128xf32> to vector<8x16x128xf32>
    %240 = arith.mulf %235, %239 : vector<8x16x128xf32>
    %241 = vector.extract_strided_slice %204 {offsets = [6, 0, 0], sizes = [8, 16, 128], strides = [1, 1, 1]} : vector<14x16x128xf32> to vector<8x16x128xf32>
    %242 = vector.extract_strided_slice %7 {offsets = [6, 4, 0], sizes = [1, 1, 128], strides = [1, 1, 1]} : vector<7x7x128xf32> to vector<1x1x128xf32>
    %243 = vector.shape_cast %242 : vector<1x1x128xf32> to vector<128xf32>
    %244 = vector.shape_cast %243 : vector<128xf32> to vector<1x1x128xf32>
    %245 = vector.broadcast %244 : vector<1x1x128xf32> to vector<8x16x128xf32>
    %246 = arith.mulf %241, %245 : vector<8x16x128xf32>
    %247 = arith.addf %210, %216 : vector<8x16x128xf32>
    %248 = arith.addf %222, %228 : vector<8x16x128xf32>
    %249 = arith.addf %234, %240 : vector<8x16x128xf32>
    %250 = arith.addf %247, %248 : vector<8x16x128xf32>
    %251 = arith.addf %249, %246 : vector<8x16x128xf32>
    %252 = arith.addf %250, %251 : vector<8x16x128xf32>
    %253 = vector.extract_strided_slice %6 {offsets = [0, 5, 0], sizes = [14, 16, 128], strides = [1, 1, 1]} : vector<14x24x128xf32> to vector<14x16x128xf32>
    %254 = vector.extract_strided_slice %253 {offsets = [0, 0, 0], sizes = [8, 16, 128], strides = [1, 1, 1]} : vector<14x16x128xf32> to vector<8x16x128xf32>
    %255 = vector.extract_strided_slice %7 {offsets = [0, 5, 0], sizes = [1, 1, 128], strides = [1, 1, 1]} : vector<7x7x128xf32> to vector<1x1x128xf32>
    %256 = vector.shape_cast %255 : vector<1x1x128xf32> to vector<128xf32>
    %257 = vector.shape_cast %256 : vector<128xf32> to vector<1x1x128xf32>
    %258 = vector.broadcast %257 : vector<1x1x128xf32> to vector<8x16x128xf32>
    %259 = arith.mulf %254, %258 : vector<8x16x128xf32>
    %260 = vector.extract_strided_slice %253 {offsets = [1, 0, 0], sizes = [8, 16, 128], strides = [1, 1, 1]} : vector<14x16x128xf32> to vector<8x16x128xf32>
    %261 = vector.extract_strided_slice %7 {offsets = [1, 5, 0], sizes = [1, 1, 128], strides = [1, 1, 1]} : vector<7x7x128xf32> to vector<1x1x128xf32>
    %262 = vector.shape_cast %261 : vector<1x1x128xf32> to vector<128xf32>
    %263 = vector.shape_cast %262 : vector<128xf32> to vector<1x1x128xf32>
    %264 = vector.broadcast %263 : vector<1x1x128xf32> to vector<8x16x128xf32>
    %265 = arith.mulf %260, %264 : vector<8x16x128xf32>
    %266 = vector.extract_strided_slice %253 {offsets = [2, 0, 0], sizes = [8, 16, 128], strides = [1, 1, 1]} : vector<14x16x128xf32> to vector<8x16x128xf32>
    %267 = vector.extract_strided_slice %7 {offsets = [2, 5, 0], sizes = [1, 1, 128], strides = [1, 1, 1]} : vector<7x7x128xf32> to vector<1x1x128xf32>
    %268 = vector.shape_cast %267 : vector<1x1x128xf32> to vector<128xf32>
    %269 = vector.shape_cast %268 : vector<128xf32> to vector<1x1x128xf32>
    %270 = vector.broadcast %269 : vector<1x1x128xf32> to vector<8x16x128xf32>
    %271 = arith.mulf %266, %270 : vector<8x16x128xf32>
    %272 = vector.extract_strided_slice %253 {offsets = [3, 0, 0], sizes = [8, 16, 128], strides = [1, 1, 1]} : vector<14x16x128xf32> to vector<8x16x128xf32>
    %273 = vector.extract_strided_slice %7 {offsets = [3, 5, 0], sizes = [1, 1, 128], strides = [1, 1, 1]} : vector<7x7x128xf32> to vector<1x1x128xf32>
    %274 = vector.shape_cast %273 : vector<1x1x128xf32> to vector<128xf32>
    %275 = vector.shape_cast %274 : vector<128xf32> to vector<1x1x128xf32>
    %276 = vector.broadcast %275 : vector<1x1x128xf32> to vector<8x16x128xf32>
    %277 = arith.mulf %272, %276 : vector<8x16x128xf32>
    %278 = vector.extract_strided_slice %253 {offsets = [4, 0, 0], sizes = [8, 16, 128], strides = [1, 1, 1]} : vector<14x16x128xf32> to vector<8x16x128xf32>
    %279 = vector.extract_strided_slice %7 {offsets = [4, 5, 0], sizes = [1, 1, 128], strides = [1, 1, 1]} : vector<7x7x128xf32> to vector<1x1x128xf32>
    %280 = vector.shape_cast %279 : vector<1x1x128xf32> to vector<128xf32>
    %281 = vector.shape_cast %280 : vector<128xf32> to vector<1x1x128xf32>
    %282 = vector.broadcast %281 : vector<1x1x128xf32> to vector<8x16x128xf32>
    %283 = arith.mulf %278, %282 : vector<8x16x128xf32>
    %284 = vector.extract_strided_slice %253 {offsets = [5, 0, 0], sizes = [8, 16, 128], strides = [1, 1, 1]} : vector<14x16x128xf32> to vector<8x16x128xf32>
    %285 = vector.extract_strided_slice %7 {offsets = [5, 5, 0], sizes = [1, 1, 128], strides = [1, 1, 1]} : vector<7x7x128xf32> to vector<1x1x128xf32>
    %286 = vector.shape_cast %285 : vector<1x1x128xf32> to vector<128xf32>
    %287 = vector.shape_cast %286 : vector<128xf32> to vector<1x1x128xf32>
    %288 = vector.broadcast %287 : vector<1x1x128xf32> to vector<8x16x128xf32>
    %289 = arith.mulf %284, %288 : vector<8x16x128xf32>
    %290 = vector.extract_strided_slice %253 {offsets = [6, 0, 0], sizes = [8, 16, 128], strides = [1, 1, 1]} : vector<14x16x128xf32> to vector<8x16x128xf32>
    %291 = vector.extract_strided_slice %7 {offsets = [6, 5, 0], sizes = [1, 1, 128], strides = [1, 1, 1]} : vector<7x7x128xf32> to vector<1x1x128xf32>
    %292 = vector.shape_cast %291 : vector<1x1x128xf32> to vector<128xf32>
    %293 = vector.shape_cast %292 : vector<128xf32> to vector<1x1x128xf32>
    %294 = vector.broadcast %293 : vector<1x1x128xf32> to vector<8x16x128xf32>
    %295 = arith.mulf %290, %294 : vector<8x16x128xf32>
    %296 = arith.addf %259, %265 : vector<8x16x128xf32>
    %297 = arith.addf %271, %277 : vector<8x16x128xf32>
    %298 = arith.addf %283, %289 : vector<8x16x128xf32>
    %299 = arith.addf %296, %297 : vector<8x16x128xf32>
    %300 = arith.addf %298, %295 : vector<8x16x128xf32>
    %301 = arith.addf %299, %300 : vector<8x16x128xf32>
    %302 = vector.extract_strided_slice %6 {offsets = [0, 6, 0], sizes = [14, 16, 128], strides = [1, 1, 1]} : vector<14x24x128xf32> to vector<14x16x128xf32>
    %303 = vector.extract_strided_slice %302 {offsets = [0, 0, 0], sizes = [8, 16, 128], strides = [1, 1, 1]} : vector<14x16x128xf32> to vector<8x16x128xf32>
    %304 = vector.extract_strided_slice %7 {offsets = [0, 6, 0], sizes = [1, 1, 128], strides = [1, 1, 1]} : vector<7x7x128xf32> to vector<1x1x128xf32>
    %305 = vector.shape_cast %304 : vector<1x1x128xf32> to vector<128xf32>
    %306 = vector.shape_cast %305 : vector<128xf32> to vector<1x1x128xf32>
    %307 = vector.broadcast %306 : vector<1x1x128xf32> to vector<8x16x128xf32>
    %308 = arith.mulf %303, %307 : vector<8x16x128xf32>
    %309 = vector.extract_strided_slice %302 {offsets = [1, 0, 0], sizes = [8, 16, 128], strides = [1, 1, 1]} : vector<14x16x128xf32> to vector<8x16x128xf32>
    %310 = vector.extract_strided_slice %7 {offsets = [1, 6, 0], sizes = [1, 1, 128], strides = [1, 1, 1]} : vector<7x7x128xf32> to vector<1x1x128xf32>
    %311 = vector.shape_cast %310 : vector<1x1x128xf32> to vector<128xf32>
    %312 = vector.shape_cast %311 : vector<128xf32> to vector<1x1x128xf32>
    %313 = vector.broadcast %312 : vector<1x1x128xf32> to vector<8x16x128xf32>
    %314 = arith.mulf %309, %313 : vector<8x16x128xf32>
    %315 = vector.extract_strided_slice %302 {offsets = [2, 0, 0], sizes = [8, 16, 128], strides = [1, 1, 1]} : vector<14x16x128xf32> to vector<8x16x128xf32>
    %316 = vector.extract_strided_slice %7 {offsets = [2, 6, 0], sizes = [1, 1, 128], strides = [1, 1, 1]} : vector<7x7x128xf32> to vector<1x1x128xf32>
    %317 = vector.shape_cast %316 : vector<1x1x128xf32> to vector<128xf32>
    %318 = vector.shape_cast %317 : vector<128xf32> to vector<1x1x128xf32>
    %319 = vector.broadcast %318 : vector<1x1x128xf32> to vector<8x16x128xf32>
    %320 = arith.mulf %315, %319 : vector<8x16x128xf32>
    %321 = vector.extract_strided_slice %302 {offsets = [3, 0, 0], sizes = [8, 16, 128], strides = [1, 1, 1]} : vector<14x16x128xf32> to vector<8x16x128xf32>
    %322 = vector.extract_strided_slice %7 {offsets = [3, 6, 0], sizes = [1, 1, 128], strides = [1, 1, 1]} : vector<7x7x128xf32> to vector<1x1x128xf32>
    %323 = vector.shape_cast %322 : vector<1x1x128xf32> to vector<128xf32>
    %324 = vector.shape_cast %323 : vector<128xf32> to vector<1x1x128xf32>
    %325 = vector.broadcast %324 : vector<1x1x128xf32> to vector<8x16x128xf32>
    %326 = arith.mulf %321, %325 : vector<8x16x128xf32>
    %327 = vector.extract_strided_slice %302 {offsets = [4, 0, 0], sizes = [8, 16, 128], strides = [1, 1, 1]} : vector<14x16x128xf32> to vector<8x16x128xf32>
    %328 = vector.extract_strided_slice %7 {offsets = [4, 6, 0], sizes = [1, 1, 128], strides = [1, 1, 1]} : vector<7x7x128xf32> to vector<1x1x128xf32>
    %329 = vector.shape_cast %328 : vector<1x1x128xf32> to vector<128xf32>
    %330 = vector.shape_cast %329 : vector<128xf32> to vector<1x1x128xf32>
    %331 = vector.broadcast %330 : vector<1x1x128xf32> to vector<8x16x128xf32>
    %332 = arith.mulf %327, %331 : vector<8x16x128xf32>
    %333 = vector.extract_strided_slice %302 {offsets = [5, 0, 0], sizes = [8, 16, 128], strides = [1, 1, 1]} : vector<14x16x128xf32> to vector<8x16x128xf32>
    %334 = vector.extract_strided_slice %7 {offsets = [5, 6, 0], sizes = [1, 1, 128], strides = [1, 1, 1]} : vector<7x7x128xf32> to vector<1x1x128xf32>
    %335 = vector.shape_cast %334 : vector<1x1x128xf32> to vector<128xf32>
    %336 = vector.shape_cast %335 : vector<128xf32> to vector<1x1x128xf32>
    %337 = vector.broadcast %336 : vector<1x1x128xf32> to vector<8x16x128xf32>
    %338 = arith.mulf %333, %337 : vector<8x16x128xf32>
    %339 = vector.extract_strided_slice %302 {offsets = [6, 0, 0], sizes = [8, 16, 128], strides = [1, 1, 1]} : vector<14x16x128xf32> to vector<8x16x128xf32>
    %340 = vector.extract_strided_slice %7 {offsets = [6, 6, 0], sizes = [1, 1, 128], strides = [1, 1, 1]} : vector<7x7x128xf32> to vector<1x1x128xf32>
    %341 = vector.shape_cast %340 : vector<1x1x128xf32> to vector<128xf32>
    %342 = vector.shape_cast %341 : vector<128xf32> to vector<1x1x128xf32>
    %343 = vector.broadcast %342 : vector<1x1x128xf32> to vector<8x16x128xf32>
    %344 = arith.mulf %339, %343 : vector<8x16x128xf32>
    %345 = arith.addf %308, %314 : vector<8x16x128xf32>
    %346 = arith.addf %320, %326 : vector<8x16x128xf32>
    %347 = arith.addf %332, %338 : vector<8x16x128xf32>
    %348 = arith.addf %345, %346 : vector<8x16x128xf32>
    %349 = arith.addf %347, %344 : vector<8x16x128xf32>
    %350 = arith.addf %348, %349 : vector<8x16x128xf32>
    %351 = arith.addf %56, %105 : vector<8x16x128xf32>
    %352 = arith.addf %154, %203 : vector<8x16x128xf32>
    %353 = arith.addf %252, %301 : vector<8x16x128xf32>
    %354 = arith.addf %351, %352 : vector<8x16x128xf32>
    %355 = arith.addf %353, %350 : vector<8x16x128xf32>
    %356 = arith.addf %354, %355 : vector<8x16x128xf32>
    %c0_18 = arith.constant 0 : index
    %c0_19 = arith.constant 0 : index
    %357 = vector.load %arg5[%c0_18, %c0_19] : memref<1x128xf32, #tpu.memory_space<vmem>>, vector<1x128xf32>
    %358 = vector.shape_cast %357 : vector<1x128xf32> to vector<128xf32>
    %359 = vector.shape_cast %358 : vector<128xf32> to vector<1x1x128xf32>
    %360 = vector.broadcast %359 : vector<1x1x128xf32> to vector<8x16x128xf32>
    %361 = arith.addf %356, %360 : vector<8x16x128xf32>
    %cst = arith.constant dense<0.000000e+00> : vector<8x16xf32>
    %362 = vector.multi_reduction <add>, %361, %cst [2] : vector<8x16x128xf32> to vector<8x16xf32>
    %363 = vector.shape_cast %362 : vector<8x16xf32> to vector<8x16x1xf32>
    %cst_20 = arith.constant 1.250000e-01 : f32
    %364 = vector.broadcast %cst_20 : f32 to vector<8x16x1xf32>
    %365 = arith.mulf %363, %364 : vector<8x16x1xf32>
    %366 = vector.broadcast %365 : vector<8x16x1xf32> to vector<8x16x128xf32>
    %367 = arith.subf %361, %366 : vector<8x16x128xf32>
    %368 = tpu.iota {dimensions = array<i32: 1>} : vector<1x128xi32>
    %c8_i32 = arith.constant 8 : i32
    %369 = vector.broadcast %c8_i32 : i32 to vector<1x128xi32>
    %370 = arith.cmpi slt, %368, %369 : vector<1x128xi32>
    %cst_21 = arith.constant 0.000000e+00 : f32
    %371 = vector.shape_cast %370 : vector<1x128xi1> to vector<1x1x128xi1>
    %372 = vector.broadcast %371 : vector<1x1x128xi1> to vector<8x16x128xi1>
    %373 = vector.broadcast %cst_21 : f32 to vector<8x16x128xf32>
    %374 = arith.select %372, %367, %373 : vector<8x16x128xi1>, vector<8x16x128xf32>
    %375 = arith.mulf %374, %374 : vector<8x16x128xf32>
    %cst_22 = arith.constant dense<0.000000e+00> : vector<8x16xf32>
    %376 = vector.multi_reduction <add>, %375, %cst_22 [2] : vector<8x16x128xf32> to vector<8x16xf32>
    %377 = vector.shape_cast %376 : vector<8x16xf32> to vector<8x16x1xf32>
    %cst_23 = arith.constant 1.250000e-01 : f32
    %378 = vector.broadcast %cst_23 : f32 to vector<8x16x1xf32>
    %379 = arith.mulf %377, %378 : vector<8x16x1xf32>
    %cst_24 = arith.constant 9.99999997E-7 : f32
    %380 = vector.broadcast %cst_24 : f32 to vector<8x16x1xf32>
    %381 = arith.addf %379, %380 : vector<8x16x1xf32>
    %382 = math.rsqrt %381 : vector<8x16x1xf32>
    %383 = vector.broadcast %382 : vector<8x16x1xf32> to vector<8x16x128xf32>
    %384 = arith.mulf %374, %383 : vector<8x16x128xf32>
    %c0_25 = arith.constant 0 : index
    %c0_26 = arith.constant 0 : index
    %385 = vector.load %arg6[%c0_25, %c0_26] : memref<1x128xf32, #tpu.memory_space<vmem>>, vector<1x128xf32>
    %386 = vector.shape_cast %385 : vector<1x128xf32> to vector<128xf32>
    %387 = vector.shape_cast %386 : vector<128xf32> to vector<1x1x128xf32>
    %388 = vector.broadcast %387 : vector<1x1x128xf32> to vector<8x16x128xf32>
    %389 = arith.mulf %384, %388 : vector<8x16x128xf32>
    %c0_27 = arith.constant 0 : index
    %c0_28 = arith.constant 0 : index
    %390 = vector.load %arg7[%c0_27, %c0_28] : memref<1x128xf32, #tpu.memory_space<vmem>>, vector<1x128xf32>
    %391 = vector.shape_cast %390 : vector<1x128xf32> to vector<128xf32>
    %392 = vector.shape_cast %391 : vector<128xf32> to vector<1x1x128xf32>
    %393 = vector.broadcast %392 : vector<1x1x128xf32> to vector<8x16x128xf32>
    %394 = arith.addf %389, %393 : vector<8x16x128xf32>
    %395 = vector.shape_cast %394 : vector<8x16x128xf32> to vector<128x128xf32>
    %396 = arith.truncf %395 : vector<128x128xf32> to vector<128x128xbf16>
    %c0_29 = arith.constant 0 : index
    %c0_30 = arith.constant 0 : index
    %397 = vector.load %arg8[%c0_29, %c0_30] : memref<128x128xbf16, #tpu.memory_space<vmem>>, vector<128x128xbf16>
    %cst_31 = arith.constant dense<0.000000e+00> : vector<128x128xf32>
    %398 = tpu.matmul %396, %397, %cst_31 {dimension_numbers = #tpu.dot_dimension_numbers<[1], [0], [0], [1], [0, 0, 1, 1], [], []>} : vector<128x128xbf16>, vector<128x128xbf16>, vector<128x128xf32> -> vector<128x128xf32>
    %c0_32 = arith.constant 0 : index
    %c0_33 = arith.constant 0 : index
    %399 = vector.load %arg9[%c0_32, %c0_33] : memref<1x128xf32, #tpu.memory_space<vmem>>, vector<1x128xf32>
    %400 = vector.shape_cast %399 : vector<1x128xf32> to vector<128xf32>
    %401 = vector.shape_cast %400 : vector<128xf32> to vector<1x128xf32>
    %402 = vector.broadcast %401 : vector<1x128xf32> to vector<128x128xf32>
    %403 = arith.addf %398, %402 : vector<128x128xf32>
    %404 = arith.mulf %403, %403 : vector<128x128xf32>
    %405 = arith.mulf %403, %404 : vector<128x128xf32>
    %cst_34 = arith.constant 4.471500e-02 : f32
    %406 = vector.broadcast %cst_34 : f32 to vector<128x128xf32>
    %407 = arith.mulf %406, %405 : vector<128x128xf32>
    %408 = arith.addf %403, %407 : vector<128x128xf32>
    %cst_35 = arith.constant 0.797884583 : f32
    %409 = vector.broadcast %cst_35 : f32 to vector<128x128xf32>
    %410 = arith.mulf %409, %408 : vector<128x128xf32>
    %411 = math.tanh %410 : vector<128x128xf32>
    %cst_36 = arith.constant 1.000000e+00 : f32
    %412 = vector.broadcast %cst_36 : f32 to vector<128x128xf32>
    %413 = arith.addf %412, %411 : vector<128x128xf32>
    %cst_37 = arith.constant 5.000000e-01 : f32
    %414 = vector.broadcast %cst_37 : f32 to vector<128x128xf32>
    %415 = arith.mulf %414, %413 : vector<128x128xf32>
    %416 = arith.mulf %403, %415 : vector<128x128xf32>
    %417 = arith.truncf %416 : vector<128x128xf32> to vector<128x128xbf16>
    %c0_38 = arith.constant 0 : index
    %c0_39 = arith.constant 0 : index
    %418 = vector.load %arg10[%c0_38, %c0_39] : memref<128x128xbf16, #tpu.memory_space<vmem>>, vector<128x128xbf16>
    %cst_40 = arith.constant dense<0.000000e+00> : vector<128x128xf32>
    %419 = tpu.matmul %417, %418, %cst_40 {dimension_numbers = #tpu.dot_dimension_numbers<[1], [0], [0], [1], [0, 0, 1, 1], [], []>} : vector<128x128xbf16>, vector<128x128xbf16>, vector<128x128xf32> -> vector<128x128xf32>
    %c0_41 = arith.constant 0 : index
    %c0_42 = arith.constant 0 : index
    %420 = vector.load %arg11[%c0_41, %c0_42] : memref<1x128xf32, #tpu.memory_space<vmem>>, vector<1x128xf32>
    %421 = vector.shape_cast %420 : vector<1x128xf32> to vector<128xf32>
    %422 = vector.shape_cast %421 : vector<128xf32> to vector<1x128xf32>
    %423 = vector.broadcast %422 : vector<1x128xf32> to vector<128x128xf32>
    %424 = arith.addf %419, %423 : vector<128x128xf32>
    %c3 = arith.constant 3 : index
    %c3_43 = arith.constant 3 : index
    %c0_44 = arith.constant 0 : index
    %425 = vector.load %arg14[%c3, %c3_43, %c0_44] : memref<14x24x128xf32, #tpu.memory_space<vmem>>, vector<8x16x128xf32>
    %426 = vector.shape_cast %424 : vector<128x128xf32> to vector<8x16x128xf32>
    %c0_45 = arith.constant 0 : index
    %c0_46 = arith.constant 0 : index
    %427 = vector.load %arg12[%c0_45, %c0_46] : memref<1x128xf32, #tpu.memory_space<vmem>>, vector<1x128xf32>
    %428 = vector.shape_cast %427 : vector<1x128xf32> to vector<128xf32>
    %429 = vector.shape_cast %428 : vector<128xf32> to vector<1x1x128xf32>
    %430 = vector.broadcast %429 : vector<1x1x128xf32> to vector<8x16x128xf32>
    %431 = arith.mulf %426, %430 : vector<8x16x128xf32>
    %432 = arith.addf %431, %425 : vector<8x16x128xf32>
    %c0_47 = arith.constant 0 : index
    %c0_48 = arith.constant 0 : index
    %c0_49 = arith.constant 0 : index
    %c0_50 = arith.constant 0 : index
    %433 = vector.load %arg13[%c0_47, %c0_48, %c0_49, %c0_50] : memref<1x8x16x128xf32, #tpu.memory_space<vmem>>, vector<1x8x16x128xf32>
    %434 = vector.shape_cast %433 : vector<1x8x16x128xf32> to vector<8x16x128xf32>
    %435 = vector.shape_cast %432 : vector<8x16x128xf32> to vector<1x8x16x128xf32>
    tpu.vector_store %arg13[%c0_47, %c0_48, %c0_49, %c0_50], %435 {strides = array<i32>} : memref<1x8x16x128xf32, #tpu.memory_space<vmem>>, vector<1x8x16x128xf32>,
    return
  }
  func.func @transform_0(%arg0: i32, %arg1: i32) -> (i32, i32, i32, i32) {
    %c0_i32 = arith.constant 0 : i32
    %c0_i32_0 = arith.constant 0 : i32
    %c0_i32_1 = arith.constant 0 : i32
    return %arg0, %arg1, %c0_i32, %c0_i32_0 : i32, i32, i32, i32
  }
  func.func @transform_1(%arg0: i32, %arg1: i32) -> (i32, i32, i32, i32) {
    %c1_i32 = arith.constant 1 : i32
    %0 = arith.addi %arg1, %c1_i32 : i32
    %c1_i32_0 = arith.constant 1 : i32
    %1 = arith.muli %0, %c1_i32_0 : i32
    %c0_i32 = arith.constant 0 : i32
    %c0_i32_1 = arith.constant 0 : i32
    %c0_i32_2 = arith.constant 0 : i32
    return %arg0, %1, %c0_i32, %c0_i32_1 : i32, i32, i32, i32
  }
  func.func @transform_2(%arg0: i32, %arg1: i32) -> (i32, i32, i32) {
    %c0_i32 = arith.constant 0 : i32
    %c0_i32_0 = arith.constant 0 : i32
    %c0_i32_1 = arith.constant 0 : i32
    %c0_i32_2 = arith.constant 0 : i32
    return %c0_i32, %c0_i32_0, %c0_i32_1 : i32, i32, i32
  }
  func.func @transform_3(%arg0: i32, %arg1: i32) -> (i32, i32) {
    %c0_i32 = arith.constant 0 : i32
    %c0_i32_0 = arith.constant 0 : i32
    %c0_i32_1 = arith.constant 0 : i32
    return %c0_i32, %c0_i32_0 : i32, i32
  }
  func.func @transform_4(%arg0: i32, %arg1: i32) -> (i32, i32) {
    %c0_i32 = arith.constant 0 : i32
    %c0_i32_0 = arith.constant 0 : i32
    %c0_i32_1 = arith.constant 0 : i32
    return %c0_i32, %c0_i32_0 : i32, i32
  }
  func.func @transform_5(%arg0: i32, %arg1: i32) -> (i32, i32) {
    %c0_i32 = arith.constant 0 : i32
    %c0_i32_0 = arith.constant 0 : i32
    %c0_i32_1 = arith.constant 0 : i32
    return %c0_i32, %c0_i32_0 : i32, i32
  }
  func.func @transform_6(%arg0: i32, %arg1: i32) -> (i32, i32) {
    %c0_i32 = arith.constant 0 : i32
    %c0_i32_0 = arith.constant 0 : i32
    %c0_i32_1 = arith.constant 0 : i32
    return %c0_i32, %c0_i32_0 : i32, i32
  }
  func.func @transform_7(%arg0: i32, %arg1: i32) -> (i32, i32) {
    %c0_i32 = arith.constant 0 : i32
    %c0_i32_0 = arith.constant 0 : i32
    %c0_i32_1 = arith.constant 0 : i32
    return %c0_i32, %c0_i32_0 : i32, i32
  }
  func.func @transform_8(%arg0: i32, %arg1: i32) -> (i32, i32) {
    %c0_i32 = arith.constant 0 : i32
    %c0_i32_0 = arith.constant 0 : i32
    %c0_i32_1 = arith.constant 0 : i32
    return %c0_i32, %c0_i32_0 : i32, i32
  }
  func.func @transform_9(%arg0: i32, %arg1: i32) -> (i32, i32) {
    %c0_i32 = arith.constant 0 : i32
    %c0_i32_0 = arith.constant 0 : i32
    %c0_i32_1 = arith.constant 0 : i32
    return %c0_i32, %c0_i32_0 : i32, i32
  }
  func.func @transform_10(%arg0: i32, %arg1: i32) -> (i32, i32) {
    %c0_i32 = arith.constant 0 : i32
    %c0_i32_0 = arith.constant 0 : i32
    %c0_i32_1 = arith.constant 0 : i32
    return %c0_i32, %c0_i32_0 : i32, i32
  }
  func.func @transform_11(%arg0: i32, %arg1: i32) -> (i32, i32, i32, i32) {
    %c0_i32 = arith.constant 0 : i32
    %c0_i32_0 = arith.constant 0 : i32
    %c0_i32_1 = arith.constant 0 : i32
    return %arg0, %arg1, %c0_i32, %c0_i32_0 : i32, i32, i32, i32
  }
}

</mosaic_0001>

<llo_original>
// kernel: tpu_custom_call.1
$region0: #{tpu_custom_call.1}
  #allocation0 [shape = 'u32[]', space=smem, size = 0x4, offset = 0x4, fixed_abs, tag = 'smem constant byte address 0x4 - core index']
  #allocation1 [shape = 'u32[144,128]{1,0:T(1,128)}', space=vmem, size = 0x12000, scoped, tag = 'internal scratch']
  %s0 = inlined_call_operand.hbm [shape: f32[2,16,128], index: 0, kind: input, shape index: {}]
  %s1 = inlined_call_operand.hbm [shape: f32[8,128], index: 1, kind: input, shape index: {}]
  %s2 = inlined_call_operand.hbm [shape: f32[2,16,128], index: 2, kind: output, shape index: {}]
  %s3 = sld [smem:[#allocation0]]
  $region49: #{tpu_custom_call.1} parent=0
    _
  %s5 = ssub.s32 1, %s3
  %s6 = scalar_select 0, %s5, %s3
  $region1: #{tpu_custom_call.1} parent=0
    #allocation2 [shape = 'u8[8192]{0}', space=vmem, size = 0x2000, scoped, tag = 'input window, operand 0']
    #allocation3 [shape = 's32[2]{0}', space=sflag, size = 0x8, scoped, tag = 'scoped memory for tpu_custom_call.1']
    #allocation4 [shape = 's32[2]{0}', space=sflag, size = 0x8, scoped, tag = 'scoped memory for tpu_custom_call.1']
    #allocation5 [shape = 'u8[4096]{0}', space=vmem, size = 0x1000, scoped, tag = 'input window, operand 1, single buffered']
    #allocation6 [shape = 's32[1]{0}', space=sflag, size = 0x4, scoped, tag = 'scoped memory for tpu_custom_call.1']
    #allocation7 [shape = 'u8[8192]{0}', space=vmem, size = 0x2000, scoped, tag = 'output window, operand 0']
    %7 = vsyncpa [#allocation3], 0
    %s8 = scalar_lea.sflag [#allocation3], 1
    %9 = vsyncpa %s8, 0
    %10 = vsyncpa [#allocation6], 0
    %11 = vsyncpa [#allocation4], 0
    %s12 = scalar_lea.sflag [#allocation4], 1
    %13 = vsyncpa %s12, 0
    loop: start=0, step=1, limit=6
    $region2: #{tpu_custom_call.1} parent=1 // loop_pre_header
      _
    $region3: #{tpu_custom_call.1} parent=1 // loop_header
      %s15 = sphi 0, %s19
      %p16 = scmp.ge.s32.totalorder %s15, 6
      %s22 = sphi 0, %s34
      %s23 = sphi 0, %s30
      %s24 = sphi 0, %s22
      %s25 = sphi 0, %s23
      %s26 = sphi 0, %s24
      %s27 = sphi 0, %s25
      %s39 = sphi 0, %s41
      %s42 = sphi 0, %s39
      %s43 = sphi 0, %s42
      %s59 = sphi 0, %s43
      %s63 = sphi 0, %s63
      %s65 = sphi 0, %s63
      %s66 = sphi 0, %s65
      %s80 = sphi 0, %s66
      %s88 = sphi 0, %s90
      %s91 = sphi 0, %s88
      %s92 = sphi 0, %s91
      %s108 = sphi 0, %s92
    $region4: #{tpu_custom_call.1} parent=1 // loop_header_branch
      %18 = sbr.rel (%p16) target = $region8
    $region5: #{tpu_custom_call.1} parent=1 // loop_body
      %s20 = ssub.s32 %s15, 1
      %s21 = ssub.s32 %s15, 2
      %s28 = sadd.s32 1, %s23
      %p29 = scmp.ge.s32.totalorder %s28, 2
      %s30 = scalar_select %p29, 0, %s28
      %s31 = sadd.s32 1, %s22
      %s32 = scalar_select %p29, %s31, %s22
      %p33 = scmp.ge.s32.totalorder %s32, 2
      %s34 = scalar_select %p33, 0, %s32
      %s35 = ssub.s32 %s22, %s34
      %s36 = ssub.s32 %s23, %s30
      %s37 = sor.u32 %s35, %s36
      %p38 = scmp.eq.s32.totalorder %s37, 0
      %s40 = sadd.s32 %s39, 1
      %s41 = scalar_select %p38, %s39, %s40
      %p44 = pneg %p38
      %p45 = scmp.eq.s32.totalorder %s15, 3
      %p46 = por %p44, %p45
      %p47 = scmp.ne.s32.totalorder %s39, %s42
      %p48 = scmp.eq.s32.totalorder %s15, 0
      %p49 = por %p47, %p48
      %p50 = scmp.ne.s32.totalorder %s39, %s42
      %p51 = scmp.eq.s32.totalorder %s20, 3
      %p52 = por %p50, %p51
      %p53 = scmp.ne.s32.totalorder %s42, %s43
      %p54 = scmp.eq.s32.totalorder %s20, 0
      %p55 = por %p53, %p54
      %p56 = scmp.ne.s32.totalorder %s42, %s43
      %p57 = scmp.eq.s32.totalorder %s21, 3
      %p58 = por %p56, %p57
      %p60 = scmp.ne.s32.totalorder %s43, %s59
      %p61 = scmp.eq.s32.totalorder %s21, 0
      %p62 = por %p60, %p61
      %s64 = sadd.s32 %s63, 1
      %p67 = scmp.eq.s32.totalorder %s15, 3
      %p68 = scmp.ne.s32.totalorder %s63, %s65
      %p69 = scmp.eq.s32.totalorder %s15, 0
      %p70 = por %p68, %p69
      %p71 = scmp.ne.s32.totalorder %s63, %s65
      %p72 = scmp.eq.s32.totalorder %s20, 3
      %p73 = por %p71, %p72
      %p74 = scmp.ne.s32.totalorder %s65, %s66
      %p75 = scmp.eq.s32.totalorder %s20, 0
      %p76 = por %p74, %p75
      %p77 = scmp.ne.s32.totalorder %s65, %s66
      %p78 = scmp.eq.s32.totalorder %s21, 3
      %p79 = por %p77, %p78
      %p81 = scmp.ne.s32.totalorder %s66, %s80
      %p82 = scmp.eq.s32.totalorder %s21, 0
      %p83 = por %p81, %p82
      %s84 = ssub.s32 %s22, %s34
      %s85 = ssub.s32 %s23, %s30
      %s86 = sor.u32 %s84, %s85
      %p87 = scmp.eq.s32.totalorder %s86, 0
      %s89 = sadd.s32 %s88, 1
      %s90 = scalar_select %p87, %s88, %s89
      %p93 = pneg %p87
      %p94 = scmp.eq.s32.totalorder %s15, 3
      %p95 = por %p93, %p94
      %p96 = scmp.ne.s32.totalorder %s88, %s91
      %p97 = scmp.eq.s32.totalorder %s15, 0
      %p98 = por %p96, %p97
      %p99 = scmp.ne.s32.totalorder %s88, %s91
      %p100 = scmp.eq.s32.totalorder %s20, 3
      %p101 = por %p99, %p100
      %p102 = scmp.ne.s32.totalorder %s91, %s92
      %p103 = scmp.eq.s32.totalorder %s20, 0
      %p104 = por %p102, %p103
      %p105 = scmp.ne.s32.totalorder %s91, %s92
      %p106 = scmp.eq.s32.totalorder %s21, 3
      %p107 = por %p105, %p106
      %p109 = scmp.ne.s32.totalorder %s92, %s108
      %p110 = scmp.eq.s32.totalorder %s21, 0
      %p111 = por %p109, %p110
      %p112 = scmp.le.s32.totalorder 1, %s15
      %p113 = scmp.lt.s32.totalorder %s15, 5
      %p114 = pnand %p112, %p113
      %p115 = pneg %p114
      // Predicated region
      $region9: #{tpu_custom_call.1} parent=5 // pred_check
        _
      $region10: #{tpu_custom_call.1} parent=5 // pred_check_branch
        %117 = sbr.rel (%p114) target = $region12
      $region11: #{tpu_custom_call.1} parent=5 // pred_region
        %s118 = ssub.s32 %s15, 1
        // Predicated region
        $region13: #{tpu_custom_call.1} parent=11 // pred_check
          %p119 = pneg %p76
        $region14: #{tpu_custom_call.1} parent=11 // pred_check_branch
          %121 = sbr.rel (%p119) target = $region16
        $region15: #{tpu_custom_call.1} parent=11 // pred_region
          %s123 = ssub.s32 128, 128
          %124 = vsyncadd [#allocation6], %s123
          %s126 = sshll.u32 [#allocation5], 4
          %s127 = int_to_ptr.vmem [resolvable:$true] %s126
          %129 = dma.hbm_to_vmem [thread:$0]  %s1, 128, %s127, [#allocation6]
        $region16: #{tpu_custom_call.1} parent=11 // pred_fallthru
          _
      $region12: #{tpu_custom_call.1} parent=5 // pred_fallthru
        _
      %p130 = scmp.lt.s32.totalorder %s15, 4
      // Predicated region
      $region17: #{tpu_custom_call.1} parent=5 // pred_check
        %p131 = pneg %p130
      $region18: #{tpu_custom_call.1} parent=5 // pred_check_branch
        %133 = sbr.rel (%p131) target = $region20
      $region19: #{tpu_custom_call.1} parent=5 // pred_region
        // Predicated region
        $region21: #{tpu_custom_call.1} parent=19 // pred_check
          %p134 = pneg %p49
        $region22: #{tpu_custom_call.1} parent=19 // pred_check_branch
          %136 = sbr.rel (%p134) target = $region24
        $region23: #{tpu_custom_call.1} parent=19 // pred_region
          %s137 = sand.u32 %s39, 1
          %s138 = scalar_lea.sflag [#allocation3], %s137
          %s139 = sand.u32 %s39, 1
          %s140 = smul.addr %s139, 8
          %s141 = scalar_lea.vmem [#allocation2], %s140
          %s143 = ssub.s32 128, 128
          %144 = vsyncadd %s138, %s143
          %s145 = smul.addr %s22, 2
          %s146 = sadd.s32 %s23, %s145
          %s147 = smul.addr %s146, 128
          %s148 = scalar_lea.hbm %s0, %s147
          %s150 = sshll.u32 %s141, 4
          %s151 = int_to_ptr.vmem [resolvable:$true] %s150
          %153 = dma.hbm_to_vmem [thread:$0]  %s148, 128, %s151, %s138
        $region24: #{tpu_custom_call.1} parent=19 // pred_fallthru
          _
      $region20: #{tpu_custom_call.1} parent=5 // pred_fallthru
        _
      %p154 = scmp.le.s32.totalorder 1, %s15
      %p155 = scmp.lt.s32.totalorder %s15, 5
      %p156 = pnand %p154, %p155
      %p157 = pneg %p156
      // Predicated region
      $region25: #{tpu_custom_call.1} parent=5 // pred_check
        _
      $region26: #{tpu_custom_call.1} parent=5 // pred_check_branch
        %159 = sbr.rel (%p156) target = $region28
      $region27: #{tpu_custom_call.1} parent=5 // pred_region
        %s160 = ssub.s32 %s15, 1
        %s161 = sand.u32 %s42, 1
        %s162 = scalar_lea.sflag [#allocation3], %s161
        %s163 = sand.u32 %s42, 1
        %s164 = smul.addr %s163, 8
        %s165 = scalar_lea.vmem [#allocation2], %s164
        // Predicated region
        $region29: #{tpu_custom_call.1} parent=27 // pred_check
          %p166 = pneg %p55
        $region30: #{tpu_custom_call.1} parent=27 // pred_check_branch
          %168 = sbr.rel (%p166) target = $region32
        $region31: #{tpu_custom_call.1} parent=27 // pred_region
          %169 = dma.done %s162, 128
        $region32: #{tpu_custom_call.1} parent=27 // pred_fallthru
          _
        // Predicated region
        $region33: #{tpu_custom_call.1} parent=27 // pred_check
          %p170 = pneg %p76
        $region34: #{tpu_custom_call.1} parent=27 // pred_check_branch
          %172 = sbr.rel (%p170) target = $region36
        $region35: #{tpu_custom_call.1} parent=27 // pred_region
          %173 = dma.done [#allocation6], 128
        $region36: #{tpu_custom_call.1} parent=27 // pred_fallthru
          _
        %s174 = sand.u32 %s42, 1
        %s175 = scalar_lea.sflag [#allocation3], %s174
        %s176 = sand.u32 %s42, 1
        %s177 = smul.addr %s176, 8
        %s178 = scalar_lea.vmem [#allocation2], %s177
        %p179 = pneg %p55
        %p180 = pneg %p52
        %p181 = pneg %p76
        %p182 = pneg %p73
        %p183 = pneg %p104
        %p184 = pneg %p101
        %s185 = sand.u32 %s91, 1
        %s186 = scalar_lea.sflag [#allocation4], %s185
        %s187 = sand.u32 %s91, 1
        %s188 = smul.addr %s187, 8
        %s189 = scalar_lea.vmem [#allocation7], %s188
        %v190 = vld [vmem:[%s165] sm:$0xff]
        %v191 = vld [vmem:[#allocation5] sm:$0xff]
        %v192 = vadd.f32 %v190, %v191
        %193 = vst [vmem:[%s189] sm:$0xff] %v192
        %s194 = sand.u32 %s91, 1
        %s195 = scalar_lea.sflag [#allocation4], %s194
        %s196 = sand.u32 %s91, 1
        %s197 = smul.addr %s196, 8
        %s198 = scalar_lea.vmem [#allocation7], %s197
        // Predicated region
        $region37: #{tpu_custom_call.1} parent=27 // pred_check
          %p199 = pneg %p101
        $region38: #{tpu_custom_call.1} parent=27 // pred_check_branch
          %201 = sbr.rel (%p199) target = $region40
        $region39: #{tpu_custom_call.1} parent=27 // pred_region
          %s203 = ssub.s32 128, 128
          %204 = vsyncadd %s195, %s203
          %s205 = smul.addr %s24, 2
          %s206 = sadd.s32 %s25, %s205
          %s207 = smul.addr %s206, 128
          %s208 = scalar_lea.hbm %s2, %s207
          %s210 = sshll.u32 %s198, 4
          %s211 = int_to_ptr.vmem [resolvable:$true] %s210
          %213 = dma.vmem_to_hbm [thread:$0]  %s211, 128, %s208, %s195
        $region40: #{tpu_custom_call.1} parent=27 // pred_fallthru
          _
      $region28: #{tpu_custom_call.1} parent=5 // pred_fallthru
        _
      %p214 = scmp.le.s32.totalorder 2, %s15
      // Predicated region
      $region41: #{tpu_custom_call.1} parent=5 // pred_check
        %p215 = pneg %p214
      $region42: #{tpu_custom_call.1} parent=5 // pred_check_branch
        %217 = sbr.rel (%p215) target = $region44
      $region43: #{tpu_custom_call.1} parent=5 // pred_region
        %s218 = ssub.s32 %s15, 2
        // Predicated region
        $region45: #{tpu_custom_call.1} parent=43 // pred_check
          %p219 = pneg %p107
        $region46: #{tpu_custom_call.1} parent=43 // pred_check_branch
          %221 = sbr.rel (%p219) target = $region48
        $region47: #{tpu_custom_call.1} parent=43 // pred_region
          %s222 = sand.u32 %s92, 1
          %s223 = scalar_lea.sflag [#allocation4], %s222
          %s224 = sand.u32 %s92, 1
          %s225 = smul.addr %s224, 8
          %s226 = scalar_lea.vmem [#allocation7], %s225
          %227 = dma.done %s223, 128
        $region48: #{tpu_custom_call.1} parent=43 // pred_fallthru
          _
      $region44: #{tpu_custom_call.1} parent=5 // pred_fallthru
        _
    $region6: #{tpu_custom_call.1} parent=1 // loop_footer
      %s19 = sadd.s32 1, %s15
    $region7: #{tpu_custom_call.1} parent=1 // loop_footer_branch
      %14 = sbr.rel target = $region3
    $region8: #{tpu_custom_call.1} parent=1 // loop_exit
      _
    %228 = vsyncpa [#allocation3], 1
    %s229 = scalar_lea.sflag [#allocation3], 1
    %230 = vsyncpa %s229, 1
    %231 = vsyncpa [#allocation6], 1
    %232 = vsyncpa [#allocation4], 1
    %s233 = scalar_lea.sflag [#allocation4], 1
    %234 = vsyncpa %s233, 1

// kernel: tpu_custom_call.1
$region0: #{tpu_custom_call.1}
  #allocation0 [shape = 'u32[]', space=smem, size = 0x4, offset = 0x4, fixed_abs, tag = 'smem constant byte address 0x4 - core index']
  #allocation1 [shape = 'u32[144,128]{1,0:T(1,128)}', space=vmem, size = 0x12000, scoped, tag = 'internal scratch']
  %s0 = inlined_call_operand.hbm [shape: f32[16,24,128], index: 0, kind: input, shape index: {}]
  %s1 = inlined_call_operand.hbm [shape: f32[16,24,128], index: 1, kind: output, shape index: {}]
  %s2 = sld [smem:[#allocation0]]
  $region18: #{tpu_custom_call.1} parent=0
    _
  %s4 = ssub.s32 1, %s2
  %s5 = scalar_select 0, %s4, %s2
  $region1: #{tpu_custom_call.1} parent=0
    #allocation2 [shape = 'u8[196608]{0}', space=vmem, size = 0x30000, scoped, tag = 'input window, operand 0, single buffered']
    #allocation3 [shape = 's32[1]{0}', space=sflag, size = 0x4, scoped, tag = 'scoped memory for tpu_custom_call.1']
    #allocation4 [shape = 's32[1]{0}', space=sflag, size = 0x4, scoped, tag = 'scoped memory for tpu_custom_call.1']
    #allocation5 [shape = 'u8[196608]{0}', space=vmem, size = 0x30000, scoped, tag = 'output window, operand 0, single buffered']
    %6 = vsyncpa [#allocation3], 0
    %7 = vsyncpa [#allocation4], 0
    // Predicated region
    $region2: #{tpu_custom_call.1} parent=1 // pred_check
      _
    $region3: #{tpu_custom_call.1} parent=1 // pred_check_branch
      %9 = sbr.rel (0) target = $region5
    $region4: #{tpu_custom_call.1} parent=1 // pred_region
      %s11 = ssub.s32 6144, 6144
      %12 = vsyncadd [#allocation3], %s11
      %s13 = sshll.u32 [#allocation2], 4
      %s14 = int_to_ptr.vmem [resolvable:$true] %s13
      %19 = dma.hbm_to_vmem [thread:$0]  %s0, 6144, %s14, [#allocation3], 128, 128, 8
    $region5: #{tpu_custom_call.1} parent=1 // pred_fallthru
      _
    // Predicated region
    $region6: #{tpu_custom_call.1} parent=1 // pred_check
      _
    $region7: #{tpu_custom_call.1} parent=1 // pred_check_branch
      %21 = sbr.rel (0) target = $region9
    $region8: #{tpu_custom_call.1} parent=1 // pred_region
      %22 = dma.done [#allocation3], 6144
    $region9: #{tpu_custom_call.1} parent=1 // pred_fallthru
      _
    %v23 = vld [vmem:[#allocation2] sm:$0xff]
    %v24 = vld [vmem:[#allocation2 + $0x8] sm:$0xff]
    %v25 = vld [vmem:[#allocation2 + $0x10] sm:$0xff]
    %v26 = vld [vmem:[#allocation2 + $0x18] sm:$0xff]
    %v27 = vld [vmem:[#allocation2 + $0x20] sm:$0xff]
    %v28 = vld [vmem:[#allocation2 + $0x28] sm:$0xff]
    %v29 = vld [vmem:[#allocation2 + $0x30] sm:$0xff]
    %v30 = vld [vmem:[#allocation2 + $0x38] sm:$0xff]
    %v31 = vld [vmem:[#allocation2 + $0x40] sm:$0xff]
    %v32 = vld [vmem:[#allocation2 + $0x48] sm:$0xff]
    %v33 = vld [vmem:[#allocation2 + $0x50] sm:$0xff]
    %v34 = vld [vmem:[#allocation2 + $0x58] sm:$0xff]
    %v35 = vld [vmem:[#allocation2 + $0x60] sm:$0xff]
    %v36 = vld [vmem:[#allocation2 + $0x68] sm:$0xff]
    %v37 = vld [vmem:[#allocation2 + $0x70] sm:$0xff]
    %v38 = vld [vmem:[#allocation2 + $0x78] sm:$0xff]
    %v39 = vld [vmem:[#allocation2 + $0x80] sm:$0xff]
    %v40 = vld [vmem:[#allocation2 + $0x88] sm:$0xff]
    %v41 = vld [vmem:[#allocation2 + $0x90] sm:$0xff]
    %v42 = vld [vmem:[#allocation2 + $0x98] sm:$0xff]
    %v43 = vld [vmem:[#allocation2 + $0xa0] sm:$0xff]
    %v44 = vld [vmem:[#allocation2 + $0xa8] sm:$0xff]
    %v45 = vld [vmem:[#allocation2 + $0xb0] sm:$0xff]
    %v46 = vld [vmem:[#allocation2 + $0xb8] sm:$0xff]
    %v47 = vld [vmem:[#allocation2 + $0xc0] sm:$0xff]
    %v48 = vld [vmem:[#allocation2 + $0xc8] sm:$0xff]
    %v49 = vld [vmem:[#allocation2 + $0xd0] sm:$0xff]
    %v50 = vld [vmem:[#allocation2 + $0xd8] sm:$0xff]
    %v51 = vld [vmem:[#allocation2 + $0xe0] sm:$0xff]
    %v52 = vld [vmem:[#allocation2 + $0xe8] sm:$0xff]
    %v53 = vld [vmem:[#allocation2 + $0xf0] sm:$0xff]
    %v54 = vld [vmem:[#allocation2 + $0xf8] sm:$0xff]
    %v55 = vld [vmem:[#allocation2 + $0x100] sm:$0xff]
    %v56 = vld [vmem:[#allocation2 + $0x108] sm:$0xff]
    %v57 = vld [vmem:[#allocation2 + $0x110] sm:$0xff]
    %v58 = vld [vmem:[#allocation2 + $0x118] sm:$0xff]
    %v59 = vld [vmem:[#allocation2 + $0x120] sm:$0xff]
    %v60 = vld [vmem:[#allocation2 + $0x128] sm:$0xff]
    %v61 = vld [vmem:[#allocation2 + $0x130] sm:$0xff]
    %v62 = vld [vmem:[#allocation2 + $0x138] sm:$0xff]
    %v63 = vld [vmem:[#allocation2 + $0x140] sm:$0xff]
    %v64 = vld [vmem:[#allocation2 + $0x148] sm:$0xff]
    %v65 = vld [vmem:[#allocation2 + $0x150] sm:$0xff]
    %v66 = vld [vmem:[#allocation2 + $0x158] sm:$0xff]
    %v67 = vld [vmem:[#allocation2 + $0x160] sm:$0xff]
    %v68 = vld [vmem:[#allocation2 + $0x168] sm:$0xff]
    %v69 = vld [vmem:[#allocation2 + $0x170] sm:$0xff]
    %v70 = vld [vmem:[#allocation2 + $0x178] sm:$0xff]
    %v71 = vrot.slane %v23, 5
    %v72 = vrot.slane %v26, 5
    %v73 = vrot.slane %v29, 5
    %v74 = vrot.slane %v32, 5
    %v75 = vrot.slane %v35, 5
    %v76 = vrot.slane %v38, 5
    %v77 = vrot.slane %v41, 5
    %v78 = vrot.slane %v44, 5
    %v79 = vrot.slane %v47, 5
    %v80 = vrot.slane %v50, 5
    %v81 = vrot.slane %v53, 5
    %v82 = vrot.slane %v56, 5
    %v83 = vrot.slane %v59, 5
    %v84 = vrot.slane %v62, 5
    %v85 = vrot.slane %v65, 5
    %v86 = vrot.slane %v68, 5
    %v87 = vrot.slane %v24, 5
    %v88 = vrot.slane %v27, 5
    %v89 = vrot.slane %v30, 5
    %v90 = vrot.slane %v33, 5
    %v91 = vrot.slane %v36, 5
    %v92 = vrot.slane %v39, 5
    %v93 = vrot.slane %v42, 5
    %v94 = vrot.slane %v45, 5
    %v95 = vrot.slane %v48, 5
    %v96 = vrot.slane %v51, 5
    %v97 = vrot.slane %v54, 5
    %v98 = vrot.slane %v57, 5
    %v99 = vrot.slane %v60, 5
    %v100 = vrot.slane %v63, 5
    %v101 = vrot.slane %v66, 5
    %v102 = vrot.slane %v69, 5
    %v103 = vrot.slane %v25, 5
    %v104 = vrot.slane %v28, 5
    %v105 = vrot.slane %v31, 5
    %v106 = vrot.slane %v34, 5
    %v107 = vrot.slane %v37, 5
    %v108 = vrot.slane %v40, 5
    %v109 = vrot.slane %v43, 5
    %v110 = vrot.slane %v46, 5
    %v111 = vrot.slane %v49, 5
    %v112 = vrot.slane %v52, 5
    %v113 = vrot.slane %v55, 5
    %v114 = vrot.slane %v58, 5
    %v115 = vrot.slane %v61, 5
    %v116 = vrot.slane %v64, 5
    %v117 = vrot.slane %v67, 5
    %v118 = vrot.slane %v70, 5
    %v119 = vlaneseq
    %v120 = vshrl.u32 %v119, 7
    %vm121 = vcmp.lt.s32.totalorder %v120, 3
    %v122 = vsel %vm121, %v87, %v103
    %v123 = vsel %vm121, %v88, %v104
    %v124 = vsel %vm121, %v89, %v105
    %v125 = vsel %vm121, %v90, %v106
    %v126 = vsel %vm121, %v91, %v107
    %v127 = vsel %vm121, %v92, %v108
    %v128 = vsel %vm121, %v93, %v109
    %v129 = vsel %vm121, %v94, %v110
    %v130 = vsel %vm121, %v95, %v111
    %v131 = vsel %vm121, %v96, %v112
    %v132 = vsel %vm121, %v97, %v113
    %v133 = vsel %vm121, %v98, %v114
    %v134 = vsel %vm121, %v99, %v115
    %v135 = vsel %vm121, %v100, %v116
    %v136 = vsel %vm121, %v101, %v117
    %v137 = vsel %vm121, %v102, %v118
    %v138 = vsel %vm121, %v71, %v87
    %v139 = vsel %vm121, %v72, %v88
    %v140 = vsel %vm121, %v73, %v89
    %v141 = vsel %vm121, %v74, %v90
    %v142 = vsel %vm121, %v75, %v91
    %v143 = vsel %vm121, %v76, %v92
    %v144 = vsel %vm121, %v77, %v93
    %v145 = vsel %vm121, %v78, %v94
    %v146 = vsel %vm121, %v79, %v95
    %v147 = vsel %vm121, %v80, %v96
    %v148 = vsel %vm121, %v81, %v97
    %v149 = vsel %vm121, %v82, %v98
    %v150 = vsel %vm121, %v83, %v99
    %v151 = vsel %vm121, %v84, %v100
    %v152 = vsel %vm121, %v85, %v101
    %v153 = vsel %vm121, %v86, %v102
    %v154 = vsel %vm121, %v103, %v71
    %v155 = vsel %vm121, %v104, %v72
    %v156 = vsel %vm121, %v105, %v73
    %v157 = vsel %vm121, %v106, %v74
    %v158 = vsel %vm121, %v107, %v75
    %v159 = vsel %vm121, %v108, %v76
    %v160 = vsel %vm121, %v109, %v77
    %v161 = vsel %vm121, %v110, %v78
    %v162 = vsel %vm121, %v111, %v79
    %v163 = vsel %vm121, %v112, %v80
    %v164 = vsel %vm121, %v113, %v81
    %v165 = vsel %vm121, %v114, %v82
    %v166 = vsel %vm121, %v115, %v83
    %v167 = vsel %vm121, %v116, %v84
    %v168 = vsel %vm121, %v117, %v85
    %v169 = vsel %vm121, %v118, %v86
    %170 = vst [vmem:[#allocation5] sm:$0xff] %v138
    %171 = vst [vmem:[#allocation5 + $0x8] sm:$0xff] %v122
    %172 = vst [vmem:[#allocation5 + $0x10] sm:$0xff] %v154
    %173 = vst [vmem:[#allocation5 + $0x18] sm:$0xff] %v139
    %174 = vst [vmem:[#allocation5 + $0x20] sm:$0xff] %v123
    %175 = vst [vmem:[#allocation5 + $0x28] sm:$0xff] %v155
    %176 = vst [vmem:[#allocation5 + $0x30] sm:$0xff] %v140
    %177 = vst [vmem:[#allocation5 + $0x38] sm:$0xff] %v124
    %178 = vst [vmem:[#allocation5 + $0x40] sm:$0xff] %v156
    %179 = vst [vmem:[#allocation5 + $0x48] sm:$0xff] %v141
    %180 = vst [vmem:[#allocation5 + $0x50] sm:$0xff] %v125
    %181 = vst [vmem:[#allocation5 + $0x58] sm:$0xff] %v157
    %182 = vst [vmem:[#allocation5 + $0x60] sm:$0xff] %v142
    %183 = vst [vmem:[#allocation5 + $0x68] sm:$0xff] %v126
    %184 = vst [vmem:[#allocation5 + $0x70] sm:$0xff] %v158
    %185 = vst [vmem:[#allocation5 + $0x78] sm:$0xff] %v143
    %186 = vst [vmem:[#allocation5 + $0x80] sm:$0xff] %v127
    %187 = vst [vmem:[#allocation5 + $0x88] sm:$0xff] %v159
    %188 = vst [vmem:[#allocation5 + $0x90] sm:$0xff] %v144
    %189 = vst [vmem:[#allocation5 + $0x98] sm:$0xff] %v128
    %190 = vst [vmem:[#allocation5 + $0xa0] sm:$0xff] %v160
    %191 = vst [vmem:[#allocation5 + $0xa8] sm:$0xff] %v145
    %192 = vst [vmem:[#allocation5 + $0xb0] sm:$0xff] %v129
    %193 = vst [vmem:[#allocation5 + $0xb8] sm:$0xff] %v161
    %194 = vst [vmem:[#allocation5 + $0xc0] sm:$0xff] %v146
    %195 = vst [vmem:[#allocation5 + $0xc8] sm:$0xff] %v130
    %196 = vst [vmem:[#allocation5 + $0xd0] sm:$0xff] %v162
    %197 = vst [vmem:[#allocation5 + $0xd8] sm:$0xff] %v147
    %198 = vst [vmem:[#allocation5 + $0xe0] sm:$0xff] %v131
    %199 = vst [vmem:[#allocation5 + $0xe8] sm:$0xff] %v163
    %200 = vst [vmem:[#allocation5 + $0xf0] sm:$0xff] %v148
    %201 = vst [vmem:[#allocation5 + $0xf8] sm:$0xff] %v132
    %202 = vst [vmem:[#allocation5 + $0x100] sm:$0xff] %v164
    %203 = vst [vmem:[#allocation5 + $0x108] sm:$0xff] %v149
    %204 = vst [vmem:[#allocation5 + $0x110] sm:$0xff] %v133
    %205 = vst [vmem:[#allocation5 + $0x118] sm:$0xff] %v165
    %206 = vst [vmem:[#allocation5 + $0x120] sm:$0xff] %v150
    %207 = vst [vmem:[#allocation5 + $0x128] sm:$0xff] %v134
    %208 = vst [vmem:[#allocation5 + $0x130] sm:$0xff] %v166
    %209 = vst [vmem:[#allocation5 + $0x138] sm:$0xff] %v151
    %210 = vst [vmem:[#allocation5 + $0x140] sm:$0xff] %v135
    %211 = vst [vmem:[#allocation5 + $0x148] sm:$0xff] %v167
    %212 = vst [vmem:[#allocation5 + $0x150] sm:$0xff] %v152
    %213 = vst [vmem:[#allocation5 + $0x158] sm:$0xff] %v136
    %214 = vst [vmem:[#allocation5 + $0x160] sm:$0xff] %v168
    %215 = vst [vmem:[#allocation5 + $0x168] sm:$0xff] %v153
    %216 = vst [vmem:[#allocation5 + $0x170] sm:$0xff] %v137
    %217 = vst [vmem:[#allocation5 + $0x178] sm:$0xff] %v169
    // Predicated region
    $region10: #{tpu_custom_call.1} parent=1 // pred_check
      _
    $region11: #{tpu_custom_call.1} parent=1 // pred_check_branch
      %219 = sbr.rel (0) target = $region13
    $region12: #{tpu_custom_call.1} parent=1 // pred_region
      %s221 = ssub.s32 6144, 6144
      %222 = vsyncadd [#allocation4], %s221
      %s223 = sshll.u32 [#allocation5], 4
      %s224 = int_to_ptr.vmem [resolvable:$true] %s223
      %229 = dma.vmem_to_hbm [thread:$0]  %s224, 6144, %s1, [#allocation4], 128, 128, 8
    $region13: #{tpu_custom_call.1} parent=1 // pred_fallthru
      _
    // Predicated region
    $region14: #{tpu_custom_call.1} parent=1 // pred_check
      _
    $region15: #{tpu_custom_call.1} parent=1 // pred_check_branch
      %231 = sbr.rel (0) target = $region17
    $region16: #{tpu_custom_call.1} parent=1 // pred_region
      %232 = dma.done [#allocation4], 6144
    $region17: #{tpu_custom_call.1} parent=1 // pred_fallthru
      _
    %233 = vsyncpa [#allocation3], 1
    %234 = vsyncpa [#allocation4], 1

// kernel: tpu_custom_call.1
$region0: #{tpu_custom_call.1}
  #allocation0 [shape = 'u32[]', space=smem, size = 0x4, offset = 0x4, fixed_abs, tag = 'smem constant byte address 0x4 - core index']
  #allocation1 [shape = 'u32[144,128]{1,0:T(1,128)}', space=vmem, size = 0x12000, scoped, tag = 'internal scratch']
  #allocation2 [shape = 'f32[14,24,128]{2,1,0:T(8,128)}', space=vmem, size = 0x2a000, scoped, tag = 'scratch operand']
  %s0 = inlined_call_operand.hbm [shape: f32[2,24,24,128], index: 0, kind: input, shape index: {}]
  %s1 = inlined_call_operand.hbm [shape: f32[2,24,24,128], index: 1, kind: input, shape index: {}]
  %s2 = inlined_call_operand.hbm [shape: f32[7,7,128], index: 2, kind: input, shape index: {}]
  %s3 = inlined_call_operand.vmem [shape: f32[1,128], index: 3, kind: input, shape index: {}]
  %s4 = inlined_call_operand.vmem [shape: f32[1,128], index: 4, kind: input, shape index: {}]
  %s5 = inlined_call_operand.vmem [shape: f32[1,128], index: 5, kind: input, shape index: {}]
  %s6 = inlined_call_operand.hbm [shape: bf16[128,128], index: 6, kind: input, shape index: {}]
  %s7 = inlined_call_operand.vmem [shape: f32[1,128], index: 7, kind: input, shape index: {}]
  %s8 = inlined_call_operand.hbm [shape: bf16[128,128], index: 8, kind: input, shape index: {}]
  %s9 = inlined_call_operand.vmem [shape: f32[1,128], index: 9, kind: input, shape index: {}]
  %s10 = inlined_call_operand.vmem [shape: f32[1,128], index: 10, kind: input, shape index: {}]
  %s11 = inlined_call_operand.hbm [shape: f32[2,16,16,128], index: 11, kind: output, shape index: {}]
  %s12 = sld [smem:[#allocation0]]
  $region97: #{tpu_custom_call.1} parent=0
    _
  %s14 = ssub.s32 1, %s12
  %s15 = scalar_select 0, %s14, %s12
  $region1: #{tpu_custom_call.1} parent=0
    #allocation3 [shape = 'u8[196608]{0}', space=vmem, size = 0x30000, scoped, tag = 'input window, operand 0']
    #allocation4 [shape = 's32[2]{0}', space=sflag, size = 0x8, scoped, tag = 'scoped memory for tpu_custom_call.1']
    #allocation5 [shape = 's32[2]{0}', space=sflag, size = 0x8, scoped, tag = 'scoped memory for tpu_custom_call.1']
    #allocation6 [shape = 'u8[196608]{0}', space=vmem, size = 0x30000, scoped, tag = 'input window, operand 1']
    #allocation7 [shape = 's32[2]{0}', space=sflag, size = 0x8, scoped, tag = 'scoped memory for tpu_custom_call.1']
    #allocation8 [shape = 'u8[28672]{0}', space=vmem, size = 0x7000, scoped, tag = 'input window, operand 2, single buffered']
    #allocation9 [shape = 'u8[32768]{0}', space=vmem, size = 0x8000, scoped, tag = 'input window, operand 6, single buffered']
    #allocation10 [shape = 's32[1]{0}', space=sflag, size = 0x4, scoped, tag = 'scoped memory for tpu_custom_call.1']
    #allocation11 [shape = 'u8[32768]{0}', space=vmem, size = 0x8000, scoped, tag = 'input window, operand 8, single buffered']
    #allocation12 [shape = 'u8[131072]{0}', space=vmem, size = 0x20000, scoped, tag = 'output window, operand 0']
    %16 = vsyncpa [#allocation4], 0
    %s17 = scalar_lea.sflag [#allocation4], 1
    %18 = vsyncpa %s17, 0
    %19 = vsyncpa [#allocation7], 0
    %s20 = scalar_lea.sflag [#allocation7], 1
    %21 = vsyncpa %s20, 0
    %22 = vsyncpa [#allocation10], 0
    %23 = vsyncpa [#allocation5], 0
    %s24 = scalar_lea.sflag [#allocation5], 1
    %25 = vsyncpa %s24, 0
    loop: start=0, step=1, limit=6
    $region2: #{tpu_custom_call.1} parent=1 // loop_pre_header
      _
    $region3: #{tpu_custom_call.1} parent=1 // loop_header
      %s27 = sphi 0, %s31
      %p28 = scmp.ge.s32.totalorder %s27, 6
      %s34 = sphi 0, %s46
      %s35 = sphi 0, %s42
      %s36 = sphi 0, %s34
      %s37 = sphi 0, %s35
      %s38 = sphi 0, %s36
      %s39 = sphi 0, %s37
      %s51 = sphi 0, %s53
      %s54 = sphi 0, %s51
      %s55 = sphi 0, %s54
      %s71 = sphi 0, %s55
      %s81 = sphi 0, %s83
      %s84 = sphi 0, %s81
      %s85 = sphi 0, %s84
      %s101 = sphi 0, %s85
      %s105 = sphi 0, %s105
      %s107 = sphi 0, %s105
      %s108 = sphi 0, %s107
      %s122 = sphi 0, %s108
      %s126 = sphi 0, %s126
      %s128 = sphi 0, %s126
      %s129 = sphi 0, %s128
      %s143 = sphi 0, %s129
      %s147 = sphi 0, %s147
      %s149 = sphi 0, %s147
      %s150 = sphi 0, %s149
      %s164 = sphi 0, %s150
      %s168 = sphi 0, %s168
      %s170 = sphi 0, %s168
      %s171 = sphi 0, %s170
      %s185 = sphi 0, %s171
      %s189 = sphi 0, %s189
      %s191 = sphi 0, %s189
      %s192 = sphi 0, %s191
      %s206 = sphi 0, %s192
      %s210 = sphi 0, %s210
      %s212 = sphi 0, %s210
      %s213 = sphi 0, %s212
      %s227 = sphi 0, %s213
      %s231 = sphi 0, %s231
      %s233 = sphi 0, %s231
      %s234 = sphi 0, %s233
      %s248 = sphi 0, %s234
      %s252 = sphi 0, %s252
      %s254 = sphi 0, %s252
      %s255 = sphi 0, %s254
      %s269 = sphi 0, %s255
      %s273 = sphi 0, %s273
      %s275 = sphi 0, %s273
      %s276 = sphi 0, %s275
      %s290 = sphi 0, %s276
      %s298 = sphi 0, %s300
      %s301 = sphi 0, %s298
      %s302 = sphi 0, %s301
      %s318 = sphi 0, %s302
    $region4: #{tpu_custom_call.1} parent=1 // loop_header_branch
      %30 = sbr.rel (%p28) target = $region8
    $region5: #{tpu_custom_call.1} parent=1 // loop_body
      %s32 = ssub.s32 %s27, 1
      %s33 = ssub.s32 %s27, 2
      %s40 = sadd.s32 1, %s35
      %p41 = scmp.ge.s32.totalorder %s40, 2
      %s42 = scalar_select %p41, 0, %s40
      %s43 = sadd.s32 1, %s34
      %s44 = scalar_select %p41, %s43, %s34
      %p45 = scmp.ge.s32.totalorder %s44, 2
      %s46 = scalar_select %p45, 0, %s44
      %s47 = ssub.s32 %s34, %s46
      %s48 = ssub.s32 %s35, %s42
      %s49 = sor.u32 %s47, %s48
      %p50 = scmp.eq.s32.totalorder %s49, 0
      %s52 = sadd.s32 %s51, 1
      %s53 = scalar_select %p50, %s51, %s52
      %p56 = pneg %p50
      %p57 = scmp.eq.s32.totalorder %s27, 3
      %p58 = por %p56, %p57
      %p59 = scmp.ne.s32.totalorder %s51, %s54
      %p60 = scmp.eq.s32.totalorder %s27, 0
      %p61 = por %p59, %p60
      %p62 = scmp.ne.s32.totalorder %s51, %s54
      %p63 = scmp.eq.s32.totalorder %s32, 3
      %p64 = por %p62, %p63
      %p65 = scmp.ne.s32.totalorder %s54, %s55
      %p66 = scmp.eq.s32.totalorder %s32, 0
      %p67 = por %p65, %p66
      %p68 = scmp.ne.s32.totalorder %s54, %s55
      %p69 = scmp.eq.s32.totalorder %s33, 3
      %p70 = por %p68, %p69
      %p72 = scmp.ne.s32.totalorder %s55, %s71
      %p73 = scmp.eq.s32.totalorder %s33, 0
      %p74 = por %p72, %p73
      %s75 = sadd.s32 %s35, 1
      %s76 = sadd.s32 %s42, 1
      %s77 = ssub.s32 %s34, %s46
      %s78 = ssub.s32 %s75, %s76
      %s79 = sor.u32 %s77, %s78
      %p80 = scmp.eq.s32.totalorder %s79, 0
      %s82 = sadd.s32 %s81, 1
      %s83 = scalar_select %p80, %s81, %s82
      %p86 = pneg %p80
      %p87 = scmp.eq.s32.totalorder %s27, 3
      %p88 = por %p86, %p87
      %p89 = scmp.ne.s32.totalorder %s81, %s84
      %p90 = scmp.eq.s32.totalorder %s27, 0
      %p91 = por %p89, %p90
      %p92 = scmp.ne.s32.totalorder %s81, %s84
      %p93 = scmp.eq.s32.totalorder %s32, 3
      %p94 = por %p92, %p93
      %p95 = scmp.ne.s32.totalorder %s84, %s85
      %p96 = scmp.eq.s32.totalorder %s32, 0
      %p97 = por %p95, %p96
      %p98 = scmp.ne.s32.totalorder %s84, %s85
      %p99 = scmp.eq.s32.totalorder %s33, 3
      %p100 = por %p98, %p99
      %p102 = scmp.ne.s32.totalorder %s85, %s101
      %p103 = scmp.eq.s32.totalorder %s33, 0
      %p104 = por %p102, %p103
      %s106 = sadd.s32 %s105, 1
      %p109 = scmp.eq.s32.totalorder %s27, 3
      %p110 = scmp.ne.s32.totalorder %s105, %s107
      %p111 = scmp.eq.s32.totalorder %s27, 0
      %p112 = por %p110, %p111
      %p113 = scmp.ne.s32.totalorder %s105, %s107
      %p114 = scmp.eq.s32.totalorder %s32, 3
      %p115 = por %p113, %p114
      %p116 = scmp.ne.s32.totalorder %s107, %s108
      %p117 = scmp.eq.s32.totalorder %s32, 0
      %p118 = por %p116, %p117
      %p119 = scmp.ne.s32.totalorder %s107, %s108
      %p120 = scmp.eq.s32.totalorder %s33, 3
      %p121 = por %p119, %p120
      %p123 = scmp.ne.s32.totalorder %s108, %s122
      %p124 = scmp.eq.s32.totalorder %s33, 0
      %p125 = por %p123, %p124
      %s127 = sadd.s32 %s126, 1
      %p130 = scmp.eq.s32.totalorder %s27, 3
      %p131 = scmp.ne.s32.totalorder %s126, %s128
      %p132 = scmp.eq.s32.totalorder %s27, 0
      %p133 = por %p131, %p132
      %p134 = scmp.ne.s32.totalorder %s126, %s128
      %p135 = scmp.eq.s32.totalorder %s32, 3
      %p136 = por %p134, %p135
      %p137 = scmp.ne.s32.totalorder %s128, %s129
      %p138 = scmp.eq.s32.totalorder %s32, 0
      %p139 = por %p137, %p138
      %p140 = scmp.ne.s32.totalorder %s128, %s129
      %p141 = scmp.eq.s32.totalorder %s33, 3
      %p142 = por %p140, %p141
      %p144 = scmp.ne.s32.totalorder %s129, %s143
      %p145 = scmp.eq.s32.totalorder %s33, 0
      %p146 = por %p144, %p145
      %s148 = sadd.s32 %s147, 1
      %p151 = scmp.eq.s32.totalorder %s27, 3
      %p152 = scmp.ne.s32.totalorder %s147, %s149
      %p153 = scmp.eq.s32.totalorder %s27, 0
      %p154 = por %p152, %p153
      %p155 = scmp.ne.s32.totalorder %s147, %s149
      %p156 = scmp.eq.s32.totalorder %s32, 3
      %p157 = por %p155, %p156
      %p158 = scmp.ne.s32.totalorder %s149, %s150
      %p159 = scmp.eq.s32.totalorder %s32, 0
      %p160 = por %p158, %p159
      %p161 = scmp.ne.s32.totalorder %s149, %s150
      %p162 = scmp.eq.s32.totalorder %s33, 3
      %p163 = por %p161, %p162
      %p165 = scmp.ne.s32.totalorder %s150, %s164
      %p166 = scmp.eq.s32.totalorder %s33, 0
      %p167 = por %p165, %p166
      %s169 = sadd.s32 %s168, 1
      %p172 = scmp.eq.s32.totalorder %s27, 3
      %p173 = scmp.ne.s32.totalorder %s168, %s170
      %p174 = scmp.eq.s32.totalorder %s27, 0
      %p175 = por %p173, %p174
      %p176 = scmp.ne.s32.totalorder %s168, %s170
      %p177 = scmp.eq.s32.totalorder %s32, 3
      %p178 = por %p176, %p177
      %p179 = scmp.ne.s32.totalorder %s170, %s171
      %p180 = scmp.eq.s32.totalorder %s32, 0
      %p181 = por %p179, %p180
      %p182 = scmp.ne.s32.totalorder %s170, %s171
      %p183 = scmp.eq.s32.totalorder %s33, 3
      %p184 = por %p182, %p183
      %p186 = scmp.ne.s32.totalorder %s171, %s185
      %p187 = scmp.eq.s32.totalorder %s33, 0
      %p188 = por %p186, %p187
      %s190 = sadd.s32 %s189, 1
      %p193 = scmp.eq.s32.totalorder %s27, 3
      %p194 = scmp.ne.s32.totalorder %s189, %s191
      %p195 = scmp.eq.s32.totalorder %s27, 0
      %p196 = por %p194, %p195
      %p197 = scmp.ne.s32.totalorder %s189, %s191
      %p198 = scmp.eq.s32.totalorder %s32, 3
      %p199 = por %p197, %p198
      %p200 = scmp.ne.s32.totalorder %s191, %s192
      %p201 = scmp.eq.s32.totalorder %s32, 0
      %p202 = por %p200, %p201
      %p203 = scmp.ne.s32.totalorder %s191, %s192
      %p204 = scmp.eq.s32.totalorder %s33, 3
      %p205 = por %p203, %p204
      %p207 = scmp.ne.s32.totalorder %s192, %s206
      %p208 = scmp.eq.s32.totalorder %s33, 0
      %p209 = por %p207, %p208
      %s211 = sadd.s32 %s210, 1
      %p214 = scmp.eq.s32.totalorder %s27, 3
      %p215 = scmp.ne.s32.totalorder %s210, %s212
      %p216 = scmp.eq.s32.totalorder %s27, 0
      %p217 = por %p215, %p216
      %p218 = scmp.ne.s32.totalorder %s210, %s212
      %p219 = scmp.eq.s32.totalorder %s32, 3
      %p220 = por %p218, %p219
      %p221 = scmp.ne.s32.totalorder %s212, %s213
      %p222 = scmp.eq.s32.totalorder %s32, 0
      %p223 = por %p221, %p222
      %p224 = scmp.ne.s32.totalorder %s212, %s213
      %p225 = scmp.eq.s32.totalorder %s33, 3
      %p226 = por %p224, %p225
      %p228 = scmp.ne.s32.totalorder %s213, %s227
      %p229 = scmp.eq.s32.totalorder %s33, 0
      %p230 = por %p228, %p229
      %s232 = sadd.s32 %s231, 1
      %p235 = scmp.eq.s32.totalorder %s27, 3
      %p236 = scmp.ne.s32.totalorder %s231, %s233
      %p237 = scmp.eq.s32.totalorder %s27, 0
      %p238 = por %p236, %p237
      %p239 = scmp.ne.s32.totalorder %s231, %s233
      %p240 = scmp.eq.s32.totalorder %s32, 3
      %p241 = por %p239, %p240
      %p242 = scmp.ne.s32.totalorder %s233, %s234
      %p243 = scmp.eq.s32.totalorder %s32, 0
      %p244 = por %p242, %p243
      %p245 = scmp.ne.s32.totalorder %s233, %s234
      %p246 = scmp.eq.s32.totalorder %s33, 3
      %p247 = por %p245, %p246
      %p249 = scmp.ne.s32.totalorder %s234, %s248
      %p250 = scmp.eq.s32.totalorder %s33, 0
      %p251 = por %p249, %p250
      %s253 = sadd.s32 %s252, 1
      %p256 = scmp.eq.s32.totalorder %s27, 3
      %p257 = scmp.ne.s32.totalorder %s252, %s254
      %p258 = scmp.eq.s32.totalorder %s27, 0
      %p259 = por %p257, %p258
      %p260 = scmp.ne.s32.totalorder %s252, %s254
      %p261 = scmp.eq.s32.totalorder %s32, 3
      %p262 = por %p260, %p261
      %p263 = scmp.ne.s32.totalorder %s254, %s255
      %p264 = scmp.eq.s32.totalorder %s32, 0
      %p265 = por %p263, %p264
      %p266 = scmp.ne.s32.totalorder %s254, %s255
      %p267 = scmp.eq.s32.totalorder %s33, 3
      %p268 = por %p266, %p267
      %p270 = scmp.ne.s32.totalorder %s255, %s269
      %p271 = scmp.eq.s32.totalorder %s33, 0
      %p272 = por %p270, %p271
      %s274 = sadd.s32 %s273, 1
      %p277 = scmp.eq.s32.totalorder %s27, 3
      %p278 = scmp.ne.s32.totalorder %s273, %s275
      %p279 = scmp.eq.s32.totalorder %s27, 0
      %p280 = por %p278, %p279
      %p281 = scmp.ne.s32.totalorder %s273, %s275
      %p282 = scmp.eq.s32.totalorder %s32, 3
      %p283 = por %p281, %p282
      %p284 = scmp.ne.s32.totalorder %s275, %s276
      %p285 = scmp.eq.s32.totalorder %s32, 0
      %p286 = por %p284, %p285
      %p287 = scmp.ne.s32.totalorder %s275, %s276
      %p288 = scmp.eq.s32.totalorder %s33, 3
      %p289 = por %p287, %p288
      %p291 = scmp.ne.s32.totalorder %s276, %s290
      %p292 = scmp.eq.s32.totalorder %s33, 0
      %p293 = por %p291, %p292
      %s294 = ssub.s32 %s34, %s46
      %s295 = ssub.s32 %s35, %s42
      %s296 = sor.u32 %s294, %s295
      %p297 = scmp.eq.s32.totalorder %s296, 0
      %s299 = sadd.s32 %s298, 1
      %s300 = scalar_select %p297, %s298, %s299
      %p303 = pneg %p297
      %p304 = scmp.eq.s32.totalorder %s27, 3
      %p305 = por %p303, %p304
      %p306 = scmp.ne.s32.totalorder %s298, %s301
      %p307 = scmp.eq.s32.totalorder %s27, 0
      %p308 = por %p306, %p307
      %p309 = scmp.ne.s32.totalorder %s298, %s301
      %p310 = scmp.eq.s32.totalorder %s32, 3
      %p311 = por %p309, %p310
      %p312 = scmp.ne.s32.totalorder %s301, %s302
      %p313 = scmp.eq.s32.totalorder %s32, 0
      %p314 = por %p312, %p313
      %p315 = scmp.ne.s32.totalorder %s301, %s302
      %p316 = scmp.eq.s32.totalorder %s33, 3
      %p317 = por %p315, %p316
      %p319 = scmp.ne.s32.totalorder %s302, %s318
      %p320 = scmp.eq.s32.totalorder %s33, 0
      %p321 = por %p319, %p320
      %p322 = scmp.le.s32.totalorder 1, %s27
      %p323 = scmp.lt.s32.totalorder %s27, 5
      %p324 = pnand %p322, %p323
      %p325 = pneg %p324
      // Predicated region
      $region9: #{tpu_custom_call.1} parent=5 // pred_check
        _
      $region10: #{tpu_custom_call.1} parent=5 // pred_check_branch
        %327 = sbr.rel (%p324) target = $region12
      $region11: #{tpu_custom_call.1} parent=5 // pred_region
        %s328 = ssub.s32 %s27, 1
        // Predicated region
        $region13: #{tpu_custom_call.1} parent=11 // pred_check
          %p329 = pneg %p118
        $region14: #{tpu_custom_call.1} parent=11 // pred_check_branch
          %331 = sbr.rel (%p329) target = $region16
        $region15: #{tpu_custom_call.1} parent=11 // pred_region
          %s333 = ssub.s32 896, 896
          %334 = vsyncadd [#allocation7], %s333
          %s335 = sshll.u32 [#allocation8], 4
          %s336 = int_to_ptr.vmem [resolvable:$true] %s335
          %341 = dma.hbm_to_vmem [thread:$0]  %s2, 896, %s336, [#allocation7], 128, 128, 8
        $region16: #{tpu_custom_call.1} parent=11 // pred_fallthru
          _
        // Predicated region
        $region17: #{tpu_custom_call.1} parent=11 // pred_check
          %p342 = pneg %p139
        $region18: #{tpu_custom_call.1} parent=11 // pred_check_branch
          %344 = sbr.rel (%p342) target = $region20
        $region19: #{tpu_custom_call.1} parent=11 // pred_region
          _
        $region20: #{tpu_custom_call.1} parent=11 // pred_fallthru
          _
        // Predicated region
        $region21: #{tpu_custom_call.1} parent=11 // pred_check
          %p345 = pneg %p160
        $region22: #{tpu_custom_call.1} parent=11 // pred_check_branch
          %347 = sbr.rel (%p345) target = $region24
        $region23: #{tpu_custom_call.1} parent=11 // pred_region
          _
        $region24: #{tpu_custom_call.1} parent=11 // pred_fallthru
          _
        // Predicated region
        $region25: #{tpu_custom_call.1} parent=11 // pred_check
          %p348 = pneg %p181
        $region26: #{tpu_custom_call.1} parent=11 // pred_check_branch
          %350 = sbr.rel (%p348) target = $region28
        $region27: #{tpu_custom_call.1} parent=11 // pred_region
          _
        $region28: #{tpu_custom_call.1} parent=11 // pred_fallthru
          _
        // Predicated region
        $region29: #{tpu_custom_call.1} parent=11 // pred_check
          %p351 = pneg %p202
        $region30: #{tpu_custom_call.1} parent=11 // pred_check_branch
          %353 = sbr.rel (%p351) target = $region32
        $region31: #{tpu_custom_call.1} parent=11 // pred_region
          %s355 = ssub.s32 1024, 1024
          %356 = vsyncadd [#allocation10], %s355
          %s357 = sshll.u32 [#allocation9], 4
          %s358 = int_to_ptr.vmem [resolvable:$true] %s357
          %363 = dma.hbm_to_vmem [thread:$0]  %s6, 1024, %s358, [#allocation10], 64, 64, 4
        $region32: #{tpu_custom_call.1} parent=11 // pred_fallthru
          _
        // Predicated region
        $region33: #{tpu_custom_call.1} parent=11 // pred_check
          %p364 = pneg %p223
        $region34: #{tpu_custom_call.1} parent=11 // pred_check_branch
          %366 = sbr.rel (%p364) target = $region36
        $region35: #{tpu_custom_call.1} parent=11 // pred_region
          _
        $region36: #{tpu_custom_call.1} parent=11 // pred_fallthru
          _
        // Predicated region
        $region37: #{tpu_custom_call.1} parent=11 // pred_check
          %p367 = pneg %p244
        $region38: #{tpu_custom_call.1} parent=11 // pred_check_branch
          %369 = sbr.rel (%p367) target = $region40
        $region39: #{tpu_custom_call.1} parent=11 // pred_region
          %s371 = ssub.s32 1024, 1024
          %372 = vsyncadd [#allocation10], %s371
          %s373 = sshll.u32 [#allocation11], 4
          %s374 = int_to_ptr.vmem [resolvable:$true] %s373
          %379 = dma.hbm_to_vmem [thread:$0]  %s8, 1024, %s374, [#allocation10], 64, 64, 4
        $region40: #{tpu_custom_call.1} parent=11 // pred_fallthru
          _
        // Predicated region
        $region41: #{tpu_custom_call.1} parent=11 // pred_check
          %p380 = pneg %p265
        $region42: #{tpu_custom_call.1} parent=11 // pred_check_branch
          %382 = sbr.rel (%p380) target = $region44
        $region43: #{tpu_custom_call.1} parent=11 // pred_region
          _
        $region44: #{tpu_custom_call.1} parent=11 // pred_fallthru
          _
        // Predicated region
        $region45: #{tpu_custom_call.1} parent=11 // pred_check
          %p383 = pneg %p286
        $region46: #{tpu_custom_call.1} parent=11 // pred_check_branch
          %385 = sbr.rel (%p383) target = $region48
        $region47: #{tpu_custom_call.1} parent=11 // pred_region
          _
        $region48: #{tpu_custom_call.1} parent=11 // pred_fallthru
          _
      $region12: #{tpu_custom_call.1} parent=5 // pred_fallthru
        _
      %p386 = scmp.lt.s32.totalorder %s27, 4
      // Predicated region
      $region49: #{tpu_custom_call.1} parent=5 // pred_check
        %p387 = pneg %p386
      $region50: #{tpu_custom_call.1} parent=5 // pred_check_branch
        %389 = sbr.rel (%p387) target = $region52
      $region51: #{tpu_custom_call.1} parent=5 // pred_region
        // Predicated region
        $region53: #{tpu_custom_call.1} parent=51 // pred_check
          %p390 = pneg %p61
        $region54: #{tpu_custom_call.1} parent=51 // pred_check_branch
          %392 = sbr.rel (%p390) target = $region56
        $region55: #{tpu_custom_call.1} parent=51 // pred_region
          %s393 = sand.u32 %s51, 1
          %s394 = scalar_lea.sflag [#allocation4], %s393
          %s395 = sand.u32 %s51, 1
          %s396 = smul.addr %s395, 192
          %s397 = scalar_lea.vmem [#allocation3], %s396
          %s398 = smul.u32 8, %s35
          %s400 = ssub.s32 3072, 3072
          %401 = vsyncadd %s394, %s400
          %s402 = smul.addr %s398, 3
          %s403 = smul.addr %s34, 72
          %s404 = sadd.s32 %s402, %s403
          %s405 = smul.addr %s404, 128
          %s406 = scalar_lea.hbm %s0, %s405
          %s407 = sshll.u32 %s397, 4
          %s408 = int_to_ptr.vmem [resolvable:$true] %s407
          %413 = dma.hbm_to_vmem [thread:$0]  %s406, 3072, %s408, %s394, 128, 128, 8
        $region56: #{tpu_custom_call.1} parent=51 // pred_fallthru
          _
        // Predicated region
        $region57: #{tpu_custom_call.1} parent=51 // pred_check
          %p414 = pneg %p91
        $region58: #{tpu_custom_call.1} parent=51 // pred_check_branch
          %416 = sbr.rel (%p414) target = $region60
        $region59: #{tpu_custom_call.1} parent=51 // pred_region
          %s417 = sand.u32 %s27, 1
          %s418 = scalar_lea.sflag [#allocation7], %s417
          %s419 = sand.u32 %s81, 1
          %s420 = smul.addr %s419, 192
          %s421 = scalar_lea.vmem [#allocation6], %s420
          %s422 = sadd.s32 %s35, 1
          %s423 = smul.u32 8, %s422
          %s425 = ssub.s32 3072, 3072
          %426 = vsyncadd %s418, %s425
          %s427 = smul.addr %s423, 3
          %s428 = smul.addr %s34, 72
          %s429 = sadd.s32 %s427, %s428
          %s430 = smul.addr %s429, 128
          %s431 = scalar_lea.hbm %s1, %s430
          %s432 = sshll.u32 %s421, 4
          %s433 = int_to_ptr.vmem [resolvable:$true] %s432
          %438 = dma.hbm_to_vmem [thread:$0]  %s431, 3072, %s433, %s418, 128, 128, 8
        $region60: #{tpu_custom_call.1} parent=51 // pred_fallthru
          _
      $region52: #{tpu_custom_call.1} parent=5 // pred_fallthru
        _
      %p439 = scmp.le.s32.totalorder 1, %s27
      %p440 = scmp.lt.s32.totalorder %s27, 5
      %p441 = pnand %p439, %p440
      %p442 = pneg %p441
      // Predicated region
      $region61: #{tpu_custom_call.1} parent=5 // pred_check
        _
      $region62: #{tpu_custom_call.1} parent=5 // pred_check_branch
        %444 = sbr.rel (%p441) target = $region64
      $region63: #{tpu_custom_call.1} parent=5 // pred_region
        %s445 = ssub.s32 %s27, 1
        %s446 = sand.u32 %s54, 1
        %s447 = scalar_lea.sflag [#allocation4], %s446
        %s448 = sand.u32 %s54, 1
        %s449 = smul.addr %s448, 192
        %s450 = scalar_lea.vmem [#allocation3], %s449
        // Predicated region
        $region65: #{tpu_custom_call.1} parent=63 // pred_check
          %p451 = pneg %p67
        $region66: #{tpu_custom_call.1} parent=63 // pred_check_branch
          %453 = sbr.rel (%p451) target = $region68
        $region67: #{tpu_custom_call.1} parent=63 // pred_region
          %454 = dma.done %s447, 3072
        $region68: #{tpu_custom_call.1} parent=63 // pred_fallthru
          _
        %s455 = sand.u32 %s32, 1
        %s456 = scalar_lea.sflag [#allocation7], %s455
        %s457 = sand.u32 %s84, 1
        %s458 = smul.addr %s457, 192
        %s459 = scalar_lea.vmem [#allocation6], %s458
        // Predicated region
        $region69: #{tpu_custom_call.1} parent=63 // pred_check
          %p460 = pneg %p97
        $region70: #{tpu_custom_call.1} parent=63 // pred_check_branch
          %462 = sbr.rel (%p460) target = $region72
        $region71: #{tpu_custom_call.1} parent=63 // pred_region
          %463 = dma.done %s456, 3072
        $region72: #{tpu_custom_call.1} parent=63 // pred_fallthru
          _
        // Predicated region
        $region73: #{tpu_custom_call.1} parent=63 // pred_check
          %p464 = pneg %p118
        $region74: #{tpu_custom_call.1} parent=63 // pred_check_branch
          %466 = sbr.rel (%p464) target = $region76
        $region75: #{tpu_custom_call.1} parent=63 // pred_region
          %467 = dma.done [#allocation7], 896
        $region76: #{tpu_custom_call.1} parent=63 // pred_fallthru
          _
        // Predicated region
        $region77: #{tpu_custom_call.1} parent=63 // pred_check
          %p468 = pneg %p202
        $region78: #{tpu_custom_call.1} parent=63 // pred_check_branch
          %470 = sbr.rel (%p468) target = $region80
        $region79: #{tpu_custom_call.1} parent=63 // pred_region
          %471 = dma.done [#allocation10], 1024
        $region80: #{tpu_custom_call.1} parent=63 // pred_fallthru
          _
        // Predicated region
        $region81: #{tpu_custom_call.1} parent=63 // pred_check
          %p472 = pneg %p244
        $region82: #{tpu_custom_call.1} parent=63 // pred_check_branch
          %474 = sbr.rel (%p472) target = $region84
        $region83: #{tpu_custom_call.1} parent=63 // pred_region
          %475 = dma.done [#allocation10], 1024
        $region84: #{tpu_custom_call.1} parent=63 // pred_fallthru
          _
        %s476 = sand.u32 %s54, 1
        %s477 = scalar_lea.sflag [#allocation4], %s476
        %s478 = sand.u32 %s54, 1
        %s479 = smul.addr %s478, 192
        %s480 = scalar_lea.vmem [#allocation3], %s479
        %p481 = pneg %p67
        %p482 = pneg %p64
        %s483 = sand.u32 %s32, 1
        %s484 = scalar_lea.sflag [#allocation7], %s483
        %s485 = sand.u32 %s84, 1
        %s486 = smul.addr %s485, 192
        %s487 = scalar_lea.vmem [#allocation6], %s486
        %p488 = pneg %p97
        %p489 = pneg %p94
        %p490 = pneg %p118
        %p491 = pneg %p115
        %p492 = pneg %p139
        %p493 = pneg %p136
        %p494 = pneg %p160
        %p495 = pneg %p157
        %p496 = pneg %p181
        %p497 = pneg %p178
        %p498 = pneg %p202
        %p499 = pneg %p199
        %p500 = pneg %p223
        %p501 = pneg %p220
        %p502 = pneg %p244
        %p503 = pneg %p241
        %p504 = pneg %p265
        %p505 = pneg %p262
        %p506 = pneg %p286
        %p507 = pneg %p283
        %p508 = pneg %p314
        %p509 = pneg %p311
        %s510 = sand.u32 %s301, 1
        %s511 = scalar_lea.sflag [#allocation5], %s510
        %s512 = sand.u32 %s301, 1
        %s513 = smul.addr %s512, 128
        %s514 = scalar_lea.vmem [#allocation12], %s513
        %s515 = smul.u32 8, %s37
        %s516 = sadd.s32 %s37, 1
        %s517 = smul.u32 8, %s516
        %s518 = smul.u32 8, %s37
        %v520 = vld [vmem:[%s450] sm:$0xff]
        %v521 = vld [vmem:[%s450 + $0x8] sm:$0xff]
        %v522 = vld [vmem:[%s450 + $0x10] sm:$0xff]
        %v523 = vld [vmem:[%s450 + $0x18] sm:$0xff]
        %v524 = vld [vmem:[%s450 + $0x20] sm:$0xff]
        %v525 = vld [vmem:[%s450 + $0x28] sm:$0xff]
        %v526 = vld [vmem:[%s450 + $0x30] sm:$0xff]
        %v527 = vld [vmem:[%s450 + $0x38] sm:$0xff]
        %v528 = vld [vmem:[%s450 + $0x40] sm:$0xff]
        %v529 = vld [vmem:[%s450 + $0x48] sm:$0xff]
        %v530 = vld [vmem:[%s450 + $0x50] sm:$0xff]
        %v531 = vld [vmem:[%s450 + $0x58] sm:$0xff]
        %v532 = vld [vmem:[%s450 + $0x60] sm:$0xff]
        %v533 = vld [vmem:[%s450 + $0x68] sm:$0xff]
        %v534 = vld [vmem:[%s450 + $0x70] sm:$0xff]
        %v535 = vld [vmem:[%s450 + $0x78] sm:$0xff]
        %v536 = vld [vmem:[%s450 + $0x80] sm:$0xff]
        %v537 = vld [vmem:[%s450 + $0x88] sm:$0xff]
        %v538 = vld [vmem:[%s450 + $0x90] sm:$0xff]
        %v539 = vld [vmem:[%s450 + $0x98] sm:$0xff]
        %v540 = vld [vmem:[%s450 + $0xa0] sm:$0xff]
        %v541 = vld [vmem:[%s450 + $0xa8] sm:$0xff]
        %v542 = vld [vmem:[%s450 + $0xb0] sm:$0xff]
        %v543 = vld [vmem:[%s450 + $0xb8] sm:$0xff]
        %544 = vst [vmem:[#allocation2] sm:$0xff] %v520
        %545 = vst [vmem:[#allocation2 + $0x8] sm:$0xff] %v521
        %546 = vst [vmem:[#allocation2 + $0x10] sm:$0xff] %v522
        %547 = vst [vmem:[#allocation2 + $0x18] sm:$0xff] %v523
        %548 = vst [vmem:[#allocation2 + $0x20] sm:$0xff] %v524
        %549 = vst [vmem:[#allocation2 + $0x28] sm:$0xff] %v525
        %550 = vst [vmem:[#allocation2 + $0x30] sm:$0xff] %v526
        %551 = vst [vmem:[#allocation2 + $0x38] sm:$0xff] %v527
        %552 = vst [vmem:[#allocation2 + $0x40] sm:$0xff] %v528
        %553 = vst [vmem:[#allocation2 + $0x48] sm:$0xff] %v529
        %554 = vst [vmem:[#allocation2 + $0x50] sm:$0xff] %v530
        %555 = vst [vmem:[#allocation2 + $0x58] sm:$0xff] %v531
        %556 = vst [vmem:[#allocation2 + $0x60] sm:$0xff] %v532
        %557 = vst [vmem:[#allocation2 + $0x68] sm:$0xff] %v533
        %558 = vst [vmem:[#allocation2 + $0x70] sm:$0xff] %v534
        %559 = vst [vmem:[#allocation2 + $0x78] sm:$0xff] %v535
        %560 = vst [vmem:[#allocation2 + $0x80] sm:$0xff] %v536
        %561 = vst [vmem:[#allocation2 + $0x88] sm:$0xff] %v537
        %562 = vst [vmem:[#allocation2 + $0x90] sm:$0xff] %v538
        %563 = vst [vmem:[#allocation2 + $0x98] sm:$0xff] %v539
        %564 = vst [vmem:[#allocation2 + $0xa0] sm:$0xff] %v540
        %565 = vst [vmem:[#allocation2 + $0xa8] sm:$0xff] %v541
        %566 = vst [vmem:[#allocation2 + $0xb0] sm:$0xff] %v542
        %567 = vst [vmem:[#allocation2 + $0xb8] sm:$0xff] %v543
        %v568 = vld [vmem:[%s459] sm:$0xff]
        %v569 = vld [vmem:[%s459 + $0x8] sm:$0xff]
        %v570 = vld [vmem:[%s459 + $0x10] sm:$0xff]
        %v571 = vld [vmem:[%s459 + $0x18] sm:$0xff]
        %v572 = vld [vmem:[%s459 + $0x20] sm:$0xff]
        %v573 = vld [vmem:[%s459 + $0x28] sm:$0xff]
        %v574 = vld [vmem:[%s459 + $0x30] sm:$0xff]
        %v575 = vld [vmem:[%s459 + $0x38] sm:$0xff]
        %v576 = vld [vmem:[%s459 + $0x40] sm:$0xff]
        %v577 = vld [vmem:[%s459 + $0x48] sm:$0xff]
        %v578 = vld [vmem:[%s459 + $0x50] sm:$0xff]
        %v579 = vld [vmem:[%s459 + $0x58] sm:$0xff]
        %v580 = vld [vmem:[%s459 + $0x60] sm:$0xff]
        %v581 = vld [vmem:[%s459 + $0x68] sm:$0xff]
        %v582 = vld [vmem:[%s459 + $0x70] sm:$0xff]
        %v583 = vld [vmem:[%s459 + $0x78] sm:$0xff]
        %v584 = vld [vmem:[%s459 + $0x80] sm:$0xff]
        %v585 = vld [vmem:[%s459 + $0x88] sm:$0xff]
        %s586 = scalar_lea.vmem [#allocation2], 192
        %587 = vst [vmem:[%s586] sm:$0xff] %v568
        %588 = vst [vmem:[%s586 + $0x8] sm:$0xff] %v569
        %589 = vst [vmem:[%s586 + $0x10] sm:$0xff] %v570
        %590 = vst [vmem:[%s586 + $0x18] sm:$0xff] %v571
        %591 = vst [vmem:[%s586 + $0x20] sm:$0xff] %v572
        %592 = vst [vmem:[%s586 + $0x28] sm:$0xff] %v573
        %593 = vst [vmem:[%s586 + $0x30] sm:$0xff] %v574
        %594 = vst [vmem:[%s586 + $0x38] sm:$0xff] %v575
        %595 = vst [vmem:[%s586 + $0x40] sm:$0xff] %v576
        %596 = vst [vmem:[%s586 + $0x48] sm:$0xff] %v577
        %597 = vst [vmem:[%s586 + $0x50] sm:$0xff] %v578
        %598 = vst [vmem:[%s586 + $0x58] sm:$0xff] %v579
        %599 = vst [vmem:[%s586 + $0x60] sm:$0xff] %v580
        %600 = vst [vmem:[%s586 + $0x68] sm:$0xff] %v581
        %601 = vst [vmem:[%s586 + $0x70] sm:$0xff] %v582
        %602 = vst [vmem:[%s586 + $0x78] sm:$0xff] %v583
        %603 = vst [vmem:[%s586 + $0x80] sm:$0xff] %v584
        %604 = vst [vmem:[%s586 + $0x88] sm:$0xff] %v585
        %v605 = vld [vmem:[#allocation2] sm:$0xff]
        %v606 = vld [vmem:[#allocation2 + $0x8] sm:$0xff]
        %v607 = vld [vmem:[#allocation2 + $0x10] sm:$0xff]
        %v608 = vld [vmem:[#allocation2 + $0x18] sm:$0xff]
        %v609 = vld [vmem:[#allocation2 + $0x20] sm:$0xff]
        %v610 = vld [vmem:[#allocation2 + $0x28] sm:$0xff]
        %v611 = vld [vmem:[#allocation2 + $0x30] sm:$0xff]
        %v612 = vld [vmem:[#allocation2 + $0x38] sm:$0xff]
        %v613 = vld [vmem:[#allocation2 + $0x40] sm:$0xff]
        %v614 = vld [vmem:[#allocation2 + $0x48] sm:$0xff]
        %v615 = vld [vmem:[#allocation2 + $0x50] sm:$0xff]
        %v616 = vld [vmem:[#allocation2 + $0x58] sm:$0xff]
        %v617 = vld [vmem:[#allocation2 + $0x60] sm:$0xff]
        %v618 = vld [vmem:[#allocation2 + $0x68] sm:$0xff]
        %v619 = vld [vmem:[#allocation2 + $0x70] sm:$0xff]
        %v620 = vld [vmem:[#allocation2 + $0x78] sm:$0xff]
        %v621 = vld [vmem:[#allocation2 + $0x80] sm:$0xff]
        %v622 = vld [vmem:[#allocation2 + $0x88] sm:$0xff]
        %v623 = vld [vmem:[#allocation2 + $0x90] sm:$0xff]
        %v624 = vld [vmem:[#allocation2 + $0x98] sm:$0xff]
        %v625 = vld [vmem:[#allocation2 + $0xa0] sm:$0xff]
        %v626 = vld [vmem:[#allocation2 + $0xa8] sm:$0xff]
        %v627 = vld [vmem:[#allocation2 + $0xb0] sm:$0xff]
        %v628 = vld [vmem:[#allocation2 + $0xb8] sm:$0xff]
        %v629 = vld [vmem:[#allocation2 + $0xc0] sm:$0xff]
        %v630 = vld [vmem:[#allocation2 + $0xc8] sm:$0xff]
        %v631 = vld [vmem:[#allocation2 + $0xd0] sm:$0xff]
        %v632 = vld [vmem:[#allocation2 + $0xd8] sm:$0xff]
        %v633 = vld [vmem:[#allocation2 + $0xe0] sm:$0xff]
        %v634 = vld [vmem:[#allocation2 + $0xe8] sm:$0xff]
        %v635 = vld [vmem:[#allocation2 + $0xf0] sm:$0xff]
        %v636 = vld [vmem:[#allocation2 + $0xf8] sm:$0xff]
        %v637 = vld [vmem:[#allocation2 + $0x100] sm:$0xff]
        %v638 = vld [vmem:[#allocation2 + $0x108] sm:$0xff]
        %v639 = vld [vmem:[#allocation2 + $0x110] sm:$0xff]
        %v640 = vld [vmem:[#allocation2 + $0x118] sm:$0xff]
        %v641 = vld [vmem:[#allocation2 + $0x120] sm:$0xff]
        %v642 = vld [vmem:[#allocation2 + $0x128] sm:$0xff]
        %v643 = vld [vmem:[#allocation2 + $0x130] sm:$0xff]
        %v644 = vld [vmem:[#allocation2 + $0x138] sm:$0xff]
        %v645 = vld [vmem:[#allocation2 + $0x140] sm:$0xff]
        %v646 = vld [vmem:[#allocation2 + $0x148] sm:$0xff]
        %v647 = vld [vmem:[#allocation8] sm:$0x7f]
        %v648 = vld [vmem:[#allocation8 + $0x8] sm:$0x7f]
        %v649 = vld [vmem:[#allocation8 + $0x10] sm:$0x7f]
        %v650 = vld [vmem:[#allocation8 + $0x18] sm:$0x7f]
        %v651 = vld [vmem:[#allocation8 + $0x20] sm:$0x7f]
        %v652 = vld [vmem:[#allocation8 + $0x28] sm:$0x7f]
        %v653 = vld [vmem:[#allocation8 + $0x30] sm:$0x7f]
        %v654 = vlaneseq
        %v655 = vshrl.u32 %v654, 7
        %v656 = vsub.s32 0, %v655
        %v657 = vrot.slane %v647, %v656
        %v658 = vmul.f32 %v605, %v657
        %v659 = vmul.f32 %v606, %v657
        %v660 = vmul.f32 %v608, %v657
        %v661 = vmul.f32 %v609, %v657
        %v662 = vmul.f32 %v611, %v657
        %v663 = vmul.f32 %v612, %v657
        %v664 = vmul.f32 %v614, %v657
        %v665 = vmul.f32 %v615, %v657
        %v666 = vmul.f32 %v617, %v657
        %v667 = vmul.f32 %v618, %v657
        %v668 = vmul.f32 %v620, %v657
        %v669 = vmul.f32 %v621, %v657
        %v670 = vmul.f32 %v623, %v657
        %v671 = vmul.f32 %v624, %v657
        %v672 = vmul.f32 %v626, %v657
        %v673 = vmul.f32 %v627, %v657
        %v674 = vlaneseq
        %v675 = vshrl.u32 %v674, 7
        %v676 = vsub.s32 0, %v675
        %v677 = vrot.slane %v648, %v676
        %v678 = vmul.f32 %v608, %v677
        %v679 = vmul.f32 %v609, %v677
        %v680 = vmul.f32 %v611, %v677
        %v681 = vmul.f32 %v612, %v677
        %v682 = vmul.f32 %v614, %v677
        %v683 = vmul.f32 %v615, %v677
        %v684 = vmul.f32 %v617, %v677
        %v685 = vmul.f32 %v618, %v677
        %v686 = vmul.f32 %v620, %v677
        %v687 = vmul.f32 %v621, %v677
        %v688 = vmul.f32 %v623, %v677
        %v689 = vmul.f32 %v624, %v677
        %v690 = vmul.f32 %v626, %v677
        %v691 = vmul.f32 %v627, %v677
        %v692 = vmul.f32 %v629, %v677
        %v693 = vmul.f32 %v630, %v677
        %v694 = vlaneseq
        %v695 = vshrl.u32 %v694, 7
        %v696 = vsub.s32 0, %v695
        %v697 = vrot.slane %v649, %v696
        %v698 = vmul.f32 %v611, %v697
        %v699 = vmul.f32 %v612, %v697
        %v700 = vmul.f32 %v614, %v697
        %v701 = vmul.f32 %v615, %v697
        %v702 = vmul.f32 %v617, %v697
        %v703 = vmul.f32 %v618, %v697
        %v704 = vmul.f32 %v620, %v697
        %v705 = vmul.f32 %v621, %v697
        %v706 = vmul.f32 %v623, %v697
        %v707 = vmul.f32 %v624, %v697
        %v708 = vmul.f32 %v626, %v697
        %v709 = vmul.f32 %v627, %v697
        %v710 = vmul.f32 %v629, %v697
        %v711 = vmul.f32 %v630, %v697
        %v712 = vmul.f32 %v632, %v697
        %v713 = vmul.f32 %v633, %v697
        %v714 = vlaneseq
        %v715 = vshrl.u32 %v714, 7
        %v716 = vsub.s32 0, %v715
        %v717 = vrot.slane %v650, %v716
        %v718 = vmul.f32 %v614, %v717
        %v719 = vmul.f32 %v615, %v717
        %v720 = vmul.f32 %v617, %v717
        %v721 = vmul.f32 %v618, %v717
        %v722 = vmul.f32 %v620, %v717
        %v723 = vmul.f32 %v621, %v717
        %v724 = vmul.f32 %v623, %v717
        %v725 = vmul.f32 %v624, %v717
        %v726 = vmul.f32 %v626, %v717
        %v727 = vmul.f32 %v627, %v717
        %v728 = vmul.f32 %v629, %v717
        %v729 = vmul.f32 %v630, %v717
        %v730 = vmul.f32 %v632, %v717
        %v731 = vmul.f32 %v633, %v717
        %v732 = vmul.f32 %v635, %v717
        %v733 = vmul.f32 %v636, %v717
        %v734 = vlaneseq
        %v735 = vshrl.u32 %v734, 7
        %v736 = vsub.s32 0, %v735
        %v737 = vrot.slane %v651, %v736
        %v738 = vmul.f32 %v617, %v737
        %v739 = vmul.f32 %v618, %v737
        %v740 = vmul.f32 %v620, %v737
        %v741 = vmul.f32 %v621, %v737
        %v742 = vmul.f32 %v623, %v737
        %v743 = vmul.f32 %v624, %v737
        %v744 = vmul.f32 %v626, %v737
        %v745 = vmul.f32 %v627, %v737
        %v746 = vmul.f32 %v629, %v737
        %v747 = vmul.f32 %v630, %v737
        %v748 = vmul.f32 %v632, %v737
        %v749 = vmul.f32 %v633, %v737
        %v750 = vmul.f32 %v635, %v737
        %v751 = vmul.f32 %v636, %v737
        %v752 = vmul.f32 %v638, %v737
        %v753 = vmul.f32 %v639, %v737
        %v754 = vlaneseq
        %v755 = vshrl.u32 %v754, 7
        %v756 = vsub.s32 0, %v755
        %v757 = vrot.slane %v652, %v756
        %v758 = vmul.f32 %v620, %v757
        %v759 = vmul.f32 %v621, %v757
        %v760 = vmul.f32 %v623, %v757
        %v761 = vmul.f32 %v624, %v757
        %v762 = vmul.f32 %v626, %v757
        %v763 = vmul.f32 %v627, %v757
        %v764 = vmul.f32 %v629, %v757
        %v765 = vmul.f32 %v630, %v757
        %v766 = vmul.f32 %v632, %v757
        %v767 = vmul.f32 %v633, %v757
        %v768 = vmul.f32 %v635, %v757
        %v769 = vmul.f32 %v636, %v757
        %v770 = vmul.f32 %v638, %v757
        %v771 = vmul.f32 %v639, %v757
        %v772 = vmul.f32 %v641, %v757
        %v773 = vmul.f32 %v642, %v757
        %v774 = vlaneseq
        %v775 = vshrl.u32 %v774, 7
        %v776 = vsub.s32 0, %v775
        %v777 = vrot.slane %v653, %v776
        %v778 = vmul.f32 %v623, %v777
        %v779 = vmul.f32 %v624, %v777
        %v780 = vmul.f32 %v626, %v777
        %v781 = vmul.f32 %v627, %v777
        %v782 = vmul.f32 %v629, %v777
        %v783 = vmul.f32 %v630, %v777
        %v784 = vmul.f32 %v632, %v777
        %v785 = vmul.f32 %v633, %v777
        %v786 = vmul.f32 %v635, %v777
        %v787 = vmul.f32 %v636, %v777
        %v788 = vmul.f32 %v638, %v777
        %v789 = vmul.f32 %v639, %v777
        %v790 = vmul.f32 %v641, %v777
        %v791 = vmul.f32 %v642, %v777
        %v792 = vmul.f32 %v644, %v777
        %v793 = vmul.f32 %v645, %v777
        %v794 = vadd.f32 %v658, %v678
        %v795 = vadd.f32 %v659, %v679
        %v796 = vadd.f32 %v660, %v680
        %v797 = vadd.f32 %v661, %v681
        %v798 = vadd.f32 %v662, %v682
        %v799 = vadd.f32 %v663, %v683
        %v800 = vadd.f32 %v664, %v684
        %v801 = vadd.f32 %v665, %v685
        %v802 = vadd.f32 %v666, %v686
        %v803 = vadd.f32 %v667, %v687
        %v804 = vadd.f32 %v668, %v688
        %v805 = vadd.f32 %v669, %v689
        %v806 = vadd.f32 %v670, %v690
        %v807 = vadd.f32 %v671, %v691
        %v808 = vadd.f32 %v672, %v692
        %v809 = vadd.f32 %v673, %v693
        %v810 = vadd.f32 %v698, %v718
        %v811 = vadd.f32 %v699, %v719
        %v812 = vadd.f32 %v700, %v720
        %v813 = vadd.f32 %v701, %v721
        %v814 = vadd.f32 %v702, %v722
        %v815 = vadd.f32 %v703, %v723
        %v816 = vadd.f32 %v704, %v724
        %v817 = vadd.f32 %v705, %v725
        %v818 = vadd.f32 %v706, %v726
        %v819 = vadd.f32 %v707, %v727
        %v820 = vadd.f32 %v708, %v728
        %v821 = vadd.f32 %v709, %v729
        %v822 = vadd.f32 %v710, %v730
        %v823 = vadd.f32 %v711, %v731
        %v824 = vadd.f32 %v712, %v732
        %v825 = vadd.f32 %v713, %v733
        %v826 = vadd.f32 %v738, %v758
        %v827 = vadd.f32 %v739, %v759
        %v828 = vadd.f32 %v740, %v760
        %v829 = vadd.f32 %v741, %v761
        %v830 = vadd.f32 %v742, %v762
        %v831 = vadd.f32 %v743, %v763
        %v832 = vadd.f32 %v744, %v764
        %v833 = vadd.f32 %v745, %v765
        %v834 = vadd.f32 %v746, %v766
        %v835 = vadd.f32 %v747, %v767
        %v836 = vadd.f32 %v748, %v768
        %v837 = vadd.f32 %v749, %v769
        %v838 = vadd.f32 %v750, %v770
        %v839 = vadd.f32 %v751, %v771
        %v840 = vadd.f32 %v752, %v772
        %v841 = vadd.f32 %v753, %v773
        %v842 = vadd.f32 %v794, %v810
        %v843 = vadd.f32 %v795, %v811
        %v844 = vadd.f32 %v796, %v812
        %v845 = vadd.f32 %v797, %v813
        %v846 = vadd.f32 %v798, %v814
        %v847 = vadd.f32 %v799, %v815
        %v848 = vadd.f32 %v800, %v816
        %v849 = vadd.f32 %v801, %v817
        %v850 = vadd.f32 %v802, %v818
        %v851 = vadd.f32 %v803, %v819
        %v852 = vadd.f32 %v804, %v820
        %v853 = vadd.f32 %v805, %v821
        %v854 = vadd.f32 %v806, %v822
        %v855 = vadd.f32 %v807, %v823
        %v856 = vadd.f32 %v808, %v824
        %v857 = vadd.f32 %v809, %v825
        %v858 = vadd.f32 %v826, %v778
        %v859 = vadd.f32 %v827, %v779
        %v860 = vadd.f32 %v828, %v780
        %v861 = vadd.f32 %v829, %v781
        %v862 = vadd.f32 %v830, %v782
        %v863 = vadd.f32 %v831, %v783
        %v864 = vadd.f32 %v832, %v784
        %v865 = vadd.f32 %v833, %v785
        %v866 = vadd.f32 %v834, %v786
        %v867 = vadd.f32 %v835, %v787
        %v868 = vadd.f32 %v836, %v788
        %v869 = vadd.f32 %v837, %v789
        %v870 = vadd.f32 %v838, %v790
        %v871 = vadd.f32 %v839, %v791
        %v872 = vadd.f32 %v840, %v792
        %v873 = vadd.f32 %v841, %v793
        %v874 = vadd.f32 %v842, %v858
        %v875 = vadd.f32 %v843, %v859
        %v876 = vadd.f32 %v844, %v860
        %v877 = vadd.f32 %v845, %v861
        %v878 = vadd.f32 %v846, %v862
        %v879 = vadd.f32 %v847, %v863
        %v880 = vadd.f32 %v848, %v864
        %v881 = vadd.f32 %v849, %v865
        %v882 = vadd.f32 %v850, %v866
        %v883 = vadd.f32 %v851, %v867
        %v884 = vadd.f32 %v852, %v868
        %v885 = vadd.f32 %v853, %v869
        %v886 = vadd.f32 %v854, %v870
        %v887 = vadd.f32 %v855, %v871
        %v888 = vadd.f32 %v856, %v872
        %v889 = vadd.f32 %v857, %v873
        %v890 = vlaneseq
        %v891 = vshrl.u32 %v890, 7
        %v892 = vsub.s32 1, %v891
        %v893 = vrot.slane %v647, %v892
        %v894 = vmul.f32 %v605, %v893
        %v895 = vmul.f32 %v606, %v893
        %v896 = vmul.f32 %v607, %v893
        %v897 = vmul.f32 %v608, %v893
        %v898 = vmul.f32 %v609, %v893
        %v899 = vmul.f32 %v610, %v893
        %v900 = vmul.f32 %v611, %v893
        %v901 = vmul.f32 %v612, %v893
        %v902 = vmul.f32 %v613, %v893
        %v903 = vmul.f32 %v614, %v893
        %v904 = vmul.f32 %v615, %v893
        %v905 = vmul.f32 %v616, %v893
        %v906 = vmul.f32 %v617, %v893
        %v907 = vmul.f32 %v618, %v893
        %v908 = vmul.f32 %v619, %v893
        %v909 = vmul.f32 %v620, %v893
        %v910 = vmul.f32 %v621, %v893
        %v911 = vmul.f32 %v622, %v893
        %v912 = vmul.f32 %v623, %v893
        %v913 = vmul.f32 %v624, %v893
        %v914 = vmul.f32 %v625, %v893
        %v915 = vmul.f32 %v626, %v893
        %v916 = vmul.f32 %v627, %v893
        %v917 = vmul.f32 %v628, %v893
        %v918 = vlaneseq
        %v919 = vshrl.u32 %v918, 7
        %v920 = vsub.s32 1, %v919
        %v921 = vrot.slane %v648, %v920
        %v922 = vmul.f32 %v608, %v921
        %v923 = vmul.f32 %v609, %v921
        %v924 = vmul.f32 %v610, %v921
        %v925 = vmul.f32 %v611, %v921
        %v926 = vmul.f32 %v612, %v921
        %v927 = vmul.f32 %v613, %v921
        %v928 = vmul.f32 %v614, %v921
        %v929 = vmul.f32 %v615, %v921
        %v930 = vmul.f32 %v616, %v921
        %v931 = vmul.f32 %v617, %v921
        %v932 = vmul.f32 %v618, %v921
        %v933 = vmul.f32 %v619, %v921
        %v934 = vmul.f32 %v620, %v921
        %v935 = vmul.f32 %v621, %v921
        %v936 = vmul.f32 %v622, %v921
        %v937 = vmul.f32 %v623, %v921
        %v938 = vmul.f32 %v624, %v921
        %v939 = vmul.f32 %v625, %v921
        %v940 = vmul.f32 %v626, %v921
        %v941 = vmul.f32 %v627, %v921
        %v942 = vmul.f32 %v628, %v921
        %v943 = vmul.f32 %v629, %v921
        %v944 = vmul.f32 %v630, %v921
        %v945 = vmul.f32 %v631, %v921
        %v946 = vlaneseq
        %v947 = vshrl.u32 %v946, 7
        %v948 = vsub.s32 1, %v947
        %v949 = vrot.slane %v649, %v948
        %v950 = vmul.f32 %v611, %v949
        %v951 = vmul.f32 %v612, %v949
        %v952 = vmul.f32 %v613, %v949
        %v953 = vmul.f32 %v614, %v949
        %v954 = vmul.f32 %v615, %v949
        %v955 = vmul.f32 %v616, %v949
        %v956 = vmul.f32 %v617, %v949
        %v957 = vmul.f32 %v618, %v949
        %v958 = vmul.f32 %v619, %v949
        %v959 = vmul.f32 %v620, %v949
        %v960 = vmul.f32 %v621, %v949
        %v961 = vmul.f32 %v622, %v949
        %v962 = vmul.f32 %v623, %v949
        %v963 = vmul.f32 %v624, %v949
        %v964 = vmul.f32 %v625, %v949
        %v965 = vmul.f32 %v626, %v949
        %v966 = vmul.f32 %v627, %v949
        %v967 = vmul.f32 %v628, %v949
        %v968 = vmul.f32 %v629, %v949
        %v969 = vmul.f32 %v630, %v949
        %v970 = vmul.f32 %v631, %v949
        %v971 = vmul.f32 %v632, %v949
        %v972 = vmul.f32 %v633, %v949
        %v973 = vmul.f32 %v634, %v949
        %v974 = vlaneseq
        %v975 = vshrl.u32 %v974, 7
        %v976 = vsub.s32 1, %v975
        %v977 = vrot.slane %v650, %v976
        %v978 = vmul.f32 %v614, %v977
        %v979 = vmul.f32 %v615, %v977
        %v980 = vmul.f32 %v616, %v977
        %v981 = vmul.f32 %v617, %v977
        %v982 = vmul.f32 %v618, %v977
        %v983 = vmul.f32 %v619, %v977
        %v984 = vmul.f32 %v620, %v977
        %v985 = vmul.f32 %v621, %v977
        %v986 = vmul.f32 %v622, %v977
        %v987 = vmul.f32 %v623, %v977
        %v988 = vmul.f32 %v624, %v977
        %v989 = vmul.f32 %v625, %v977
        %v990 = vmul.f32 %v626, %v977
        %v991 = vmul.f32 %v627, %v977
        %v992 = vmul.f32 %v628, %v977
        %v993 = vmul.f32 %v629, %v977
        %v994 = vmul.f32 %v630, %v977
        %v995 = vmul.f32 %v631, %v977
        %v996 = vmul.f32 %v632, %v977
        %v997 = vmul.f32 %v633, %v977
        %v998 = vmul.f32 %v634, %v977
        %v999 = vmul.f32 %v635, %v977
        %v1000 = vmul.f32 %v636, %v977
        %v1001 = vmul.f32 %v637, %v977
        %v1002 = vlaneseq
        %v1003 = vshrl.u32 %v1002, 7
        %v1004 = vsub.s32 1, %v1003
        %v1005 = vrot.slane %v651, %v1004
        %v1006 = vmul.f32 %v617, %v1005
        %v1007 = vmul.f32 %v618, %v1005
        %v1008 = vmul.f32 %v619, %v1005
        %v1009 = vmul.f32 %v620, %v1005
        %v1010 = vmul.f32 %v621, %v1005
        %v1011 = vmul.f32 %v622, %v1005
        %v1012 = vmul.f32 %v623, %v1005
        %v1013 = vmul.f32 %v624, %v1005
        %v1014 = vmul.f32 %v625, %v1005
        %v1015 = vmul.f32 %v626, %v1005
        %v1016 = vmul.f32 %v627, %v1005
        %v1017 = vmul.f32 %v628, %v1005
        %v1018 = vmul.f32 %v629, %v1005
        %v1019 = vmul.f32 %v630, %v1005
        %v1020 = vmul.f32 %v631, %v1005
        %v1021 = vmul.f32 %v632, %v1005
        %v1022 = vmul.f32 %v633, %v1005
        %v1023 = vmul.f32 %v634, %v1005
        %v1024 = vmul.f32 %v635, %v1005
        %v1025 = vmul.f32 %v636, %v1005
        %v1026 = vmul.f32 %v637, %v1005
        %v1027 = vmul.f32 %v638, %v1005
        %v1028 = vmul.f32 %v639, %v1005
        %v1029 = vmul.f32 %v640, %v1005
        %v1030 = vlaneseq
        %v1031 = vshrl.u32 %v1030, 7
        %v1032 = vsub.s32 1, %v1031
        %v1033 = vrot.slane %v652, %v1032
        %v1034 = vmul.f32 %v620, %v1033
        %v1035 = vmul.f32 %v621, %v1033
        %v1036 = vmul.f32 %v622, %v1033
        %v1037 = vmul.f32 %v623, %v1033
        %v1038 = vmul.f32 %v624, %v1033
        %v1039 = vmul.f32 %v625, %v1033
        %v1040 = vmul.f32 %v626, %v1033
        %v1041 = vmul.f32 %v627, %v1033
        %v1042 = vmul.f32 %v628, %v1033
        %v1043 = vmul.f32 %v629, %v1033
        %v1044 = vmul.f32 %v630, %v1033
        %v1045 = vmul.f32 %v631, %v1033
        %v1046 = vmul.f32 %v632, %v1033
        %v1047 = vmul.f32 %v633, %v1033
        %v1048 = vmul.f32 %v634, %v1033
        %v1049 = vmul.f32 %v635, %v1033
        %v1050 = vmul.f32 %v636, %v1033
        %v1051 = vmul.f32 %v637, %v1033
        %v1052 = vmul.f32 %v638, %v1033
        %v1053 = vmul.f32 %v639, %v1033
        %v1054 = vmul.f32 %v640, %v1033
        %v1055 = vmul.f32 %v641, %v1033
        %v1056 = vmul.f32 %v642, %v1033
        %v1057 = vmul.f32 %v643, %v1033
        %v1058 = vlaneseq
        %v1059 = vshrl.u32 %v1058, 7
        %v1060 = vsub.s32 1, %v1059
        %v1061 = vrot.slane %v653, %v1060
        %v1062 = vmul.f32 %v623, %v1061
        %v1063 = vmul.f32 %v624, %v1061
        %v1064 = vmul.f32 %v625, %v1061
        %v1065 = vmul.f32 %v626, %v1061
        %v1066 = vmul.f32 %v627, %v1061
        %v1067 = vmul.f32 %v628, %v1061
        %v1068 = vmul.f32 %v629, %v1061
        %v1069 = vmul.f32 %v630, %v1061
        %v1070 = vmul.f32 %v631, %v1061
        %v1071 = vmul.f32 %v632, %v1061
        %v1072 = vmul.f32 %v633, %v1061
        %v1073 = vmul.f32 %v634, %v1061
        %v1074 = vmul.f32 %v635, %v1061
        %v1075 = vmul.f32 %v636, %v1061
        %v1076 = vmul.f32 %v637, %v1061
        %v1077 = vmul.f32 %v638, %v1061
        %v1078 = vmul.f32 %v639, %v1061
        %v1079 = vmul.f32 %v640, %v1061
        %v1080 = vmul.f32 %v641, %v1061
        %v1081 = vmul.f32 %v642, %v1061
        %v1082 = vmul.f32 %v643, %v1061
        %v1083 = vmul.f32 %v644, %v1061
        %v1084 = vmul.f32 %v645, %v1061
        %v1085 = vmul.f32 %v646, %v1061
        %v1086 = vadd.f32 %v894, %v922
        %v1087 = vadd.f32 %v895, %v923
        %v1088 = vadd.f32 %v896, %v924
        %v1089 = vadd.f32 %v897, %v925
        %v1090 = vadd.f32 %v898, %v926
        %v1091 = vadd.f32 %v899, %v927
        %v1092 = vadd.f32 %v900, %v928
        %v1093 = vadd.f32 %v901, %v929
        %v1094 = vadd.f32 %v902, %v930
        %v1095 = vadd.f32 %v903, %v931
        %v1096 = vadd.f32 %v904, %v932
        %v1097 = vadd.f32 %v905, %v933
        %v1098 = vadd.f32 %v906, %v934
        %v1099 = vadd.f32 %v907, %v935
        %v1100 = vadd.f32 %v908, %v936
        %v1101 = vadd.f32 %v909, %v937
        %v1102 = vadd.f32 %v910, %v938
        %v1103 = vadd.f32 %v911, %v939
        %v1104 = vadd.f32 %v912, %v940
        %v1105 = vadd.f32 %v913, %v941
        %v1106 = vadd.f32 %v914, %v942
        %v1107 = vadd.f32 %v915, %v943
        %v1108 = vadd.f32 %v916, %v944
        %v1109 = vadd.f32 %v917, %v945
        %v1110 = vadd.f32 %v950, %v978
        %v1111 = vadd.f32 %v951, %v979
        %v1112 = vadd.f32 %v952, %v980
        %v1113 = vadd.f32 %v953, %v981
        %v1114 = vadd.f32 %v954, %v982
        %v1115 = vadd.f32 %v955, %v983
        %v1116 = vadd.f32 %v956, %v984
        %v1117 = vadd.f32 %v957, %v985
        %v1118 = vadd.f32 %v958, %v986
        %v1119 = vadd.f32 %v959, %v987
        %v1120 = vadd.f32 %v960, %v988
        %v1121 = vadd.f32 %v961, %v989
        %v1122 = vadd.f32 %v962, %v990
        %v1123 = vadd.f32 %v963, %v991
        %v1124 = vadd.f32 %v964, %v992
        %v1125 = vadd.f32 %v965, %v993
        %v1126 = vadd.f32 %v966, %v994
        %v1127 = vadd.f32 %v967, %v995
        %v1128 = vadd.f32 %v968, %v996
        %v1129 = vadd.f32 %v969, %v997
        %v1130 = vadd.f32 %v970, %v998
        %v1131 = vadd.f32 %v971, %v999
        %v1132 = vadd.f32 %v972, %v1000
        %v1133 = vadd.f32 %v973, %v1001
        %v1134 = vadd.f32 %v1006, %v1034
        %v1135 = vadd.f32 %v1007, %v1035
        %v1136 = vadd.f32 %v1008, %v1036
        %v1137 = vadd.f32 %v1009, %v1037
        %v1138 = vadd.f32 %v1010, %v1038
        %v1139 = vadd.f32 %v1011, %v1039
        %v1140 = vadd.f32 %v1012, %v1040
        %v1141 = vadd.f32 %v1013, %v1041
        %v1142 = vadd.f32 %v1014, %v1042
        %v1143 = vadd.f32 %v1015, %v1043
        %v1144 = vadd.f32 %v1016, %v1044
        %v1145 = vadd.f32 %v1017, %v1045
        %v1146 = vadd.f32 %v1018, %v1046
        %v1147 = vadd.f32 %v1019, %v1047
        %v1148 = vadd.f32 %v1020, %v1048
        %v1149 = vadd.f32 %v1021, %v1049
        %v1150 = vadd.f32 %v1022, %v1050
        %v1151 = vadd.f32 %v1023, %v1051
        %v1152 = vadd.f32 %v1024, %v1052
        %v1153 = vadd.f32 %v1025, %v1053
        %v1154 = vadd.f32 %v1026, %v1054
        %v1155 = vadd.f32 %v1027, %v1055
        %v1156 = vadd.f32 %v1028, %v1056
        %v1157 = vadd.f32 %v1029, %v1057
        %v1158 = vadd.f32 %v1086, %v1110
        %v1159 = vadd.f32 %v1087, %v1111
        %v1160 = vadd.f32 %v1088, %v1112
        %v1161 = vadd.f32 %v1089, %v1113
        %v1162 = vadd.f32 %v1090, %v1114
        %v1163 = vadd.f32 %v1091, %v1115
        %v1164 = vadd.f32 %v1092, %v1116
        %v1165 = vadd.f32 %v1093, %v1117
        %v1166 = vadd.f32 %v1094, %v1118
        %v1167 = vadd.f32 %v1095, %v1119
        %v1168 = vadd.f32 %v1096, %v1120
        %v1169 = vadd.f32 %v1097, %v1121
        %v1170 = vadd.f32 %v1098, %v1122
        %v1171 = vadd.f32 %v1099, %v1123
        %v1172 = vadd.f32 %v1100, %v1124
        %v1173 = vadd.f32 %v1101, %v1125
        %v1174 = vadd.f32 %v1102, %v1126
        %v1175 = vadd.f32 %v1103, %v1127
        %v1176 = vadd.f32 %v1104, %v1128
        %v1177 = vadd.f32 %v1105, %v1129
        %v1178 = vadd.f32 %v1106, %v1130
        %v1179 = vadd.f32 %v1107, %v1131
        %v1180 = vadd.f32 %v1108, %v1132
        %v1181 = vadd.f32 %v1109, %v1133
        %v1182 = vadd.f32 %v1134, %v1062
        %v1183 = vadd.f32 %v1135, %v1063
        %v1184 = vadd.f32 %v1136, %v1064
        %v1185 = vadd.f32 %v1137, %v1065
        %v1186 = vadd.f32 %v1138, %v1066
        %v1187 = vadd.f32 %v1139, %v1067
        %v1188 = vadd.f32 %v1140, %v1068
        %v1189 = vadd.f32 %v1141, %v1069
        %v1190 = vadd.f32 %v1142, %v1070
        %v1191 = vadd.f32 %v1143, %v1071
        %v1192 = vadd.f32 %v1144, %v1072
        %v1193 = vadd.f32 %v1145, %v1073
        %v1194 = vadd.f32 %v1146, %v1074
        %v1195 = vadd.f32 %v1147, %v1075
        %v1196 = vadd.f32 %v1148, %v1076
        %v1197 = vadd.f32 %v1149, %v1077
        %v1198 = vadd.f32 %v1150, %v1078
        %v1199 = vadd.f32 %v1151, %v1079
        %v1200 = vadd.f32 %v1152, %v1080
        %v1201 = vadd.f32 %v1153, %v1081
        %v1202 = vadd.f32 %v1154, %v1082
        %v1203 = vadd.f32 %v1155, %v1083
        %v1204 = vadd.f32 %v1156, %v1084
        %v1205 = vadd.f32 %v1157, %v1085
        %v1206 = vadd.f32 %v1158, %v1182
        %v1207 = vadd.f32 %v1159, %v1183
        %v1208 = vadd.f32 %v1160, %v1184
        %v1209 = vadd.f32 %v1161, %v1185
        %v1210 = vadd.f32 %v1162, %v1186
        %v1211 = vadd.f32 %v1163, %v1187
        %v1212 = vadd.f32 %v1164, %v1188
        %v1213 = vadd.f32 %v1165, %v1189
        %v1214 = vadd.f32 %v1166, %v1190
        %v1215 = vadd.f32 %v1167, %v1191
        %v1216 = vadd.f32 %v1168, %v1192
        %v1217 = vadd.f32 %v1169, %v1193
        %v1218 = vadd.f32 %v1170, %v1194
        %v1219 = vadd.f32 %v1171, %v1195
        %v1220 = vadd.f32 %v1172, %v1196
        %v1221 = vadd.f32 %v1173, %v1197
        %v1222 = vadd.f32 %v1174, %v1198
        %v1223 = vadd.f32 %v1175, %v1199
        %v1224 = vadd.f32 %v1176, %v1200
        %v1225 = vadd.f32 %v1177, %v1201
        %v1226 = vadd.f32 %v1178, %v1202
        %v1227 = vadd.f32 %v1179, %v1203
        %v1228 = vadd.f32 %v1180, %v1204
        %v1229 = vadd.f32 %v1181, %v1205
        %v1230 = vlaneseq
        %v1231 = vshrl.u32 %v1230, 7
        %v1232 = vsub.s32 2, %v1231
        %v1233 = vrot.slane %v647, %v1232
        %v1234 = vmul.f32 %v605, %v1233
        %v1235 = vmul.f32 %v606, %v1233
        %v1236 = vmul.f32 %v607, %v1233
        %v1237 = vmul.f32 %v608, %v1233
        %v1238 = vmul.f32 %v609, %v1233
        %v1239 = vmul.f32 %v610, %v1233
        %v1240 = vmul.f32 %v611, %v1233
        %v1241 = vmul.f32 %v612, %v1233
        %v1242 = vmul.f32 %v613, %v1233
        %v1243 = vmul.f32 %v614, %v1233
        %v1244 = vmul.f32 %v615, %v1233
        %v1245 = vmul.f32 %v616, %v1233
        %v1246 = vmul.f32 %v617, %v1233
        %v1247 = vmul.f32 %v618, %v1233
        %v1248 = vmul.f32 %v619, %v1233
        %v1249 = vmul.f32 %v620, %v1233
        %v1250 = vmul.f32 %v621, %v1233
        %v1251 = vmul.f32 %v622, %v1233
        %v1252 = vmul.f32 %v623, %v1233
        %v1253 = vmul.f32 %v624, %v1233
        %v1254 = vmul.f32 %v625, %v1233
        %v1255 = vmul.f32 %v626, %v1233
        %v1256 = vmul.f32 %v627, %v1233
        %v1257 = vmul.f32 %v628, %v1233
        %v1258 = vlaneseq
        %v1259 = vshrl.u32 %v1258, 7
        %v1260 = vsub.s32 2, %v1259
        %v1261 = vrot.slane %v648, %v1260
        %v1262 = vmul.f32 %v608, %v1261
        %v1263 = vmul.f32 %v609, %v1261
        %v1264 = vmul.f32 %v610, %v1261
        %v1265 = vmul.f32 %v611, %v1261
        %v1266 = vmul.f32 %v612, %v1261
        %v1267 = vmul.f32 %v613, %v1261
        %v1268 = vmul.f32 %v614, %v1261
        %v1269 = vmul.f32 %v615, %v1261
        %v1270 = vmul.f32 %v616, %v1261
        %v1271 = vmul.f32 %v617, %v1261
        %v1272 = vmul.f32 %v618, %v1261
        %v1273 = vmul.f32 %v619, %v1261
        %v1274 = vmul.f32 %v620, %v1261
        %v1275 = vmul.f32 %v621, %v1261
        %v1276 = vmul.f32 %v622, %v1261
        %v1277 = vmul.f32 %v623, %v1261
        %v1278 = vmul.f32 %v624, %v1261
        %v1279 = vmul.f32 %v625, %v1261
        %v1280 = vmul.f32 %v626, %v1261
        %v1281 = vmul.f32 %v627, %v1261
        %v1282 = vmul.f32 %v628, %v1261
        %v1283 = vmul.f32 %v629, %v1261
        %v1284 = vmul.f32 %v630, %v1261
        %v1285 = vmul.f32 %v631, %v1261
        %v1286 = vlaneseq
        %v1287 = vshrl.u32 %v1286, 7
        %v1288 = vsub.s32 2, %v1287
        %v1289 = vrot.slane %v649, %v1288
        %v1290 = vmul.f32 %v611, %v1289
        %v1291 = vmul.f32 %v612, %v1289
        %v1292 = vmul.f32 %v613, %v1289
        %v1293 = vmul.f32 %v614, %v1289
        %v1294 = vmul.f32 %v615, %v1289
        %v1295 = vmul.f32 %v616, %v1289
        %v1296 = vmul.f32 %v617, %v1289
        %v1297 = vmul.f32 %v618, %v1289
        %v1298 = vmul.f32 %v619, %v1289
        %v1299 = vmul.f32 %v620, %v1289
        %v1300 = vmul.f32 %v621, %v1289
        %v1301 = vmul.f32 %v622, %v1289
        %v1302 = vmul.f32 %v623, %v1289
        %v1303 = vmul.f32 %v624, %v1289
        %v1304 = vmul.f32 %v625, %v1289
        %v1305 = vmul.f32 %v626, %v1289
        %v1306 = vmul.f32 %v627, %v1289
        %v1307 = vmul.f32 %v628, %v1289
        %v1308 = vmul.f32 %v629, %v1289
        %v1309 = vmul.f32 %v630, %v1289
        %v1310 = vmul.f32 %v631, %v1289
        %v1311 = vmul.f32 %v632, %v1289
        %v1312 = vmul.f32 %v633, %v1289
        %v1313 = vmul.f32 %v634, %v1289
        %v1314 = vlaneseq
        %v1315 = vshrl.u32 %v1314, 7
        %v1316 = vsub.s32 2, %v1315
        %v1317 = vrot.slane %v650, %v1316
        %v1318 = vmul.f32 %v614, %v1317
        %v1319 = vmul.f32 %v615, %v1317
        %v1320 = vmul.f32 %v616, %v1317
        %v1321 = vmul.f32 %v617, %v1317
        %v1322 = vmul.f32 %v618, %v1317
        %v1323 = vmul.f32 %v619, %v1317
        %v1324 = vmul.f32 %v620, %v1317
        %v1325 = vmul.f32 %v621, %v1317
        %v1326 = vmul.f32 %v622, %v1317
        %v1327 = vmul.f32 %v623, %v1317
        %v1328 = vmul.f32 %v624, %v1317
        %v1329 = vmul.f32 %v625, %v1317
        %v1330 = vmul.f32 %v626, %v1317
        %v1331 = vmul.f32 %v627, %v1317
        %v1332 = vmul.f32 %v628, %v1317
        %v1333 = vmul.f32 %v629, %v1317
        %v1334 = vmul.f32 %v630, %v1317
        %v1335 = vmul.f32 %v631, %v1317
        %v1336 = vmul.f32 %v632, %v1317
        %v1337 = vmul.f32 %v633, %v1317
        %v1338 = vmul.f32 %v634, %v1317
        %v1339 = vmul.f32 %v635, %v1317
        %v1340 = vmul.f32 %v636, %v1317
        %v1341 = vmul.f32 %v637, %v1317
        %v1342 = vlaneseq
        %v1343 = vshrl.u32 %v1342, 7
        %v1344 = vsub.s32 2, %v1343
        %v1345 = vrot.slane %v651, %v1344
        %v1346 = vmul.f32 %v617, %v1345
        %v1347 = vmul.f32 %v618, %v1345
        %v1348 = vmul.f32 %v619, %v1345
        %v1349 = vmul.f32 %v620, %v1345
        %v1350 = vmul.f32 %v621, %v1345
        %v1351 = vmul.f32 %v622, %v1345
        %v1352 = vmul.f32 %v623, %v1345
        %v1353 = vmul.f32 %v624, %v1345
        %v1354 = vmul.f32 %v625, %v1345
        %v1355 = vmul.f32 %v626, %v1345
        %v1356 = vmul.f32 %v627, %v1345
        %v1357 = vmul.f32 %v628, %v1345
        %v1358 = vmul.f32 %v629, %v1345
        %v1359 = vmul.f32 %v630, %v1345
        %v1360 = vmul.f32 %v631, %v1345
        %v1361 = vmul.f32 %v632, %v1345
        %v1362 = vmul.f32 %v633, %v1345
        %v1363 = vmul.f32 %v634, %v1345
        %v1364 = vmul.f32 %v635, %v1345
        %v1365 = vmul.f32 %v636, %v1345
        %v1366 = vmul.f32 %v637, %v1345
        %v1367 = vmul.f32 %v638, %v1345
        %v1368 = vmul.f32 %v639, %v1345
        %v1369 = vmul.f32 %v640, %v1345
        %v1370 = vlaneseq
        %v1371 = vshrl.u32 %v1370, 7
        %v1372 = vsub.s32 2, %v1371
        %v1373 = vrot.slane %v652, %v1372
        %v1374 = vmul.f32 %v620, %v1373
        %v1375 = vmul.f32 %v621, %v1373
        %v1376 = vmul.f32 %v622, %v1373
        %v1377 = vmul.f32 %v623, %v1373
        %v1378 = vmul.f32 %v624, %v1373
        %v1379 = vmul.f32 %v625, %v1373
        %v1380 = vmul.f32 %v626, %v1373
        %v1381 = vmul.f32 %v627, %v1373
        %v1382 = vmul.f32 %v628, %v1373
        %v1383 = vmul.f32 %v629, %v1373
        %v1384 = vmul.f32 %v630, %v1373
        %v1385 = vmul.f32 %v631, %v1373
        %v1386 = vmul.f32 %v632, %v1373
        %v1387 = vmul.f32 %v633, %v1373
        %v1388 = vmul.f32 %v634, %v1373
        %v1389 = vmul.f32 %v635, %v1373
        %v1390 = vmul.f32 %v636, %v1373
        %v1391 = vmul.f32 %v637, %v1373
        %v1392 = vmul.f32 %v638, %v1373
        %v1393 = vmul.f32 %v639, %v1373
        %v1394 = vmul.f32 %v640, %v1373
        %v1395 = vmul.f32 %v641, %v1373
        %v1396 = vmul.f32 %v642, %v1373
        %v1397 = vmul.f32 %v643, %v1373
        %v1398 = vlaneseq
        %v1399 = vshrl.u32 %v1398, 7
        %v1400 = vsub.s32 2, %v1399
        %v1401 = vrot.slane %v653, %v1400
        %v1402 = vmul.f32 %v623, %v1401
        %v1403 = vmul.f32 %v624, %v1401
        %v1404 = vmul.f32 %v625, %v1401
        %v1405 = vmul.f32 %v626, %v1401
        %v1406 = vmul.f32 %v627, %v1401
        %v1407 = vmul.f32 %v628, %v1401
        %v1408 = vmul.f32 %v629, %v1401
        %v1409 = vmul.f32 %v630, %v1401
        %v1410 = vmul.f32 %v631, %v1401
        %v1411 = vmul.f32 %v632, %v1401
        %v1412 = vmul.f32 %v633, %v1401
        %v1413 = vmul.f32 %v634, %v1401
        %v1414 = vmul.f32 %v635, %v1401
        %v1415 = vmul.f32 %v636, %v1401
        %v1416 = vmul.f32 %v637, %v1401
        %v1417 = vmul.f32 %v638, %v1401
        %v1418 = vmul.f32 %v639, %v1401
        %v1419 = vmul.f32 %v640, %v1401
        %v1420 = vmul.f32 %v641, %v1401
        %v1421 = vmul.f32 %v642, %v1401
        %v1422 = vmul.f32 %v643, %v1401
        %v1423 = vmul.f32 %v644, %v1401
        %v1424 = vmul.f32 %v645, %v1401
        %v1425 = vmul.f32 %v646, %v1401
        %v1426 = vadd.f32 %v1234, %v1262
        %v1427 = vadd.f32 %v1235, %v1263
        %v1428 = vadd.f32 %v1236, %v1264
        %v1429 = vadd.f32 %v1237, %v1265
        %v1430 = vadd.f32 %v1238, %v1266
        %v1431 = vadd.f32 %v1239, %v1267
        %v1432 = vadd.f32 %v1240, %v1268
        %v1433 = vadd.f32 %v1241, %v1269
        %v1434 = vadd.f32 %v1242, %v1270
        %v1435 = vadd.f32 %v1243, %v1271
        %v1436 = vadd.f32 %v1244, %v1272
        %v1437 = vadd.f32 %v1245, %v1273
        %v1438 = vadd.f32 %v1246, %v1274
        %v1439 = vadd.f32 %v1247, %v1275
        %v1440 = vadd.f32 %v1248, %v1276
        %v1441 = vadd.f32 %v1249, %v1277
        %v1442 = vadd.f32 %v1250, %v1278
        %v1443 = vadd.f32 %v1251, %v1279
        %v1444 = vadd.f32 %v1252, %v1280
        %v1445 = vadd.f32 %v1253, %v1281
        %v1446 = vadd.f32 %v1254, %v1282
        %v1447 = vadd.f32 %v1255, %v1283
        %v1448 = vadd.f32 %v1256, %v1284
        %v1449 = vadd.f32 %v1257, %v1285
        %v1450 = vadd.f32 %v1290, %v1318
        %v1451 = vadd.f32 %v1291, %v1319
        %v1452 = vadd.f32 %v1292, %v1320
        %v1453 = vadd.f32 %v1293, %v1321
        %v1454 = vadd.f32 %v1294, %v1322
        %v1455 = vadd.f32 %v1295, %v1323
        %v1456 = vadd.f32 %v1296, %v1324
        %v1457 = vadd.f32 %v1297, %v1325
        %v1458 = vadd.f32 %v1298, %v1326
        %v1459 = vadd.f32 %v1299, %v1327
        %v1460 = vadd.f32 %v1300, %v1328
        %v1461 = vadd.f32 %v1301, %v1329
        %v1462 = vadd.f32 %v1302, %v1330
        %v1463 = vadd.f32 %v1303, %v1331
        %v1464 = vadd.f32 %v1304, %v1332
        %v1465 = vadd.f32 %v1305, %v1333
        %v1466 = vadd.f32 %v1306, %v1334
        %v1467 = vadd.f32 %v1307, %v1335
        %v1468 = vadd.f32 %v1308, %v1336
        %v1469 = vadd.f32 %v1309, %v1337
        %v1470 = vadd.f32 %v1310, %v1338
        %v1471 = vadd.f32 %v1311, %v1339
        %v1472 = vadd.f32 %v1312, %v1340
        %v1473 = vadd.f32 %v1313, %v1341
        %v1474 = vadd.f32 %v1346, %v1374
        %v1475 = vadd.f32 %v1347, %v1375
        %v1476 = vadd.f32 %v1348, %v1376
        %v1477 = vadd.f32 %v1349, %v1377
        %v1478 = vadd.f32 %v1350, %v1378
        %v1479 = vadd.f32 %v1351, %v1379
        %v1480 = vadd.f32 %v1352, %v1380
        %v1481 = vadd.f32 %v1353, %v1381
        %v1482 = vadd.f32 %v1354, %v1382
        %v1483 = vadd.f32 %v1355, %v1383
        %v1484 = vadd.f32 %v1356, %v1384
        %v1485 = vadd.f32 %v1357, %v1385
        %v1486 = vadd.f32 %v1358, %v1386
        %v1487 = vadd.f32 %v1359, %v1387
        %v1488 = vadd.f32 %v1360, %v1388
        %v1489 = vadd.f32 %v1361, %v1389
        %v1490 = vadd.f32 %v1362, %v1390
        %v1491 = vadd.f32 %v1363, %v1391
        %v1492 = vadd.f32 %v1364, %v1392
        %v1493 = vadd.f32 %v1365, %v1393
        %v1494 = vadd.f32 %v1366, %v1394
        %v1495 = vadd.f32 %v1367, %v1395
        %v1496 = vadd.f32 %v1368, %v1396
        %v1497 = vadd.f32 %v1369, %v1397
        %v1498 = vadd.f32 %v1426, %v1450
        %v1499 = vadd.f32 %v1427, %v1451
        %v1500 = vadd.f32 %v1428, %v1452
        %v1501 = vadd.f32 %v1429, %v1453
        %v1502 = vadd.f32 %v1430, %v1454
        %v1503 = vadd.f32 %v1431, %v1455
        %v1504 = vadd.f32 %v1432, %v1456
        %v1505 = vadd.f32 %v1433, %v1457
        %v1506 = vadd.f32 %v1434, %v1458
        %v1507 = vadd.f32 %v1435, %v1459
        %v1508 = vadd.f32 %v1436, %v1460
        %v1509 = vadd.f32 %v1437, %v1461
        %v1510 = vadd.f32 %v1438, %v1462
        %v1511 = vadd.f32 %v1439, %v1463
        %v1512 = vadd.f32 %v1440, %v1464
        %v1513 = vadd.f32 %v1441, %v1465
        %v1514 = vadd.f32 %v1442, %v1466
        %v1515 = vadd.f32 %v1443, %v1467
        %v1516 = vadd.f32 %v1444, %v1468
        %v1517 = vadd.f32 %v1445, %v1469
        %v1518 = vadd.f32 %v1446, %v1470
        %v1519 = vadd.f32 %v1447, %v1471
        %v1520 = vadd.f32 %v1448, %v1472
        %v1521 = vadd.f32 %v1449, %v1473
        %v1522 = vadd.f32 %v1474, %v1402
        %v1523 = vadd.f32 %v1475, %v1403
        %v1524 = vadd.f32 %v1476, %v1404
        %v1525 = vadd.f32 %v1477, %v1405
        %v1526 = vadd.f32 %v1478, %v1406
        %v1527 = vadd.f32 %v1479, %v1407
        %v1528 = vadd.f32 %v1480, %v1408
        %v1529 = vadd.f32 %v1481, %v1409
        %v1530 = vadd.f32 %v1482, %v1410
        %v1531 = vadd.f32 %v1483, %v1411
        %v1532 = vadd.f32 %v1484, %v1412
        %v1533 = vadd.f32 %v1485, %v1413
        %v1534 = vadd.f32 %v1486, %v1414
        %v1535 = vadd.f32 %v1487, %v1415
        %v1536 = vadd.f32 %v1488, %v1416
        %v1537 = vadd.f32 %v1489, %v1417
        %v1538 = vadd.f32 %v1490, %v1418
        %v1539 = vadd.f32 %v1491, %v1419
        %v1540 = vadd.f32 %v1492, %v1420
        %v1541 = vadd.f32 %v1493, %v1421
        %v1542 = vadd.f32 %v1494, %v1422
        %v1543 = vadd.f32 %v1495, %v1423
        %v1544 = vadd.f32 %v1496, %v1424
        %v1545 = vadd.f32 %v1497, %v1425
        %v1546 = vadd.f32 %v1498, %v1522
        %v1547 = vadd.f32 %v1499, %v1523
        %v1548 = vadd.f32 %v1500, %v1524
        %v1549 = vadd.f32 %v1501, %v1525
        %v1550 = vadd.f32 %v1502, %v1526
        %v1551 = vadd.f32 %v1503, %v1527
        %v1552 = vadd.f32 %v1504, %v1528
        %v1553 = vadd.f32 %v1505, %v1529
        %v1554 = vadd.f32 %v1506, %v1530
        %v1555 = vadd.f32 %v1507, %v1531
        %v1556 = vadd.f32 %v1508, %v1532
        %v1557 = vadd.f32 %v1509, %v1533
        %v1558 = vadd.f32 %v1510, %v1534
        %v1559 = vadd.f32 %v1511, %v1535
        %v1560 = vadd.f32 %v1512, %v1536
        %v1561 = vadd.f32 %v1513, %v1537
        %v1562 = vadd.f32 %v1514, %v1538
        %v1563 = vadd.f32 %v1515, %v1539
        %v1564 = vadd.f32 %v1516, %v1540
        %v1565 = vadd.f32 %v1517, %v1541
        %v1566 = vadd.f32 %v1518, %v1542
        %v1567 = vadd.f32 %v1519, %v1543
        %v1568 = vadd.f32 %v1520, %v1544
        %v1569 = vadd.f32 %v1521, %v1545
        %v1570 = vlaneseq
        %v1571 = vshrl.u32 %v1570, 7
        %v1572 = vsub.s32 3, %v1571
        %v1573 = vrot.slane %v647, %v1572
        %v1574 = vmul.f32 %v605, %v1573
        %v1575 = vmul.f32 %v606, %v1573
        %v1576 = vmul.f32 %v607, %v1573
        %v1577 = vmul.f32 %v608, %v1573
        %v1578 = vmul.f32 %v609, %v1573
        %v1579 = vmul.f32 %v610, %v1573
        %v1580 = vmul.f32 %v611, %v1573
        %v1581 = vmul.f32 %v612, %v1573
        %v1582 = vmul.f32 %v613, %v1573
        %v1583 = vmul.f32 %v614, %v1573
        %v1584 = vmul.f32 %v615, %v1573
        %v1585 = vmul.f32 %v616, %v1573
        %v1586 = vmul.f32 %v617, %v1573
        %v1587 = vmul.f32 %v618, %v1573
        %v1588 = vmul.f32 %v619, %v1573
        %v1589 = vmul.f32 %v620, %v1573
        %v1590 = vmul.f32 %v621, %v1573
        %v1591 = vmul.f32 %v622, %v1573
        %v1592 = vmul.f32 %v623, %v1573
        %v1593 = vmul.f32 %v624, %v1573
        %v1594 = vmul.f32 %v625, %v1573
        %v1595 = vmul.f32 %v626, %v1573
        %v1596 = vmul.f32 %v627, %v1573
        %v1597 = vmul.f32 %v628, %v1573
        %v1598 = vlaneseq
        %v1599 = vshrl.u32 %v1598, 7
        %v1600 = vsub.s32 3, %v1599
        %v1601 = vrot.slane %v648, %v1600
        %v1602 = vmul.f32 %v608, %v1601
        %v1603 = vmul.f32 %v609, %v1601
        %v1604 = vmul.f32 %v610, %v1601
        %v1605 = vmul.f32 %v611, %v1601
        %v1606 = vmul.f32 %v612, %v1601
        %v1607 = vmul.f32 %v613, %v1601
        %v1608 = vmul.f32 %v614, %v1601
        %v1609 = vmul.f32 %v615, %v1601
        %v1610 = vmul.f32 %v616, %v1601
        %v1611 = vmul.f32 %v617, %v1601
        %v1612 = vmul.f32 %v618, %v1601
        %v1613 = vmul.f32 %v619, %v1601
        %v1614 = vmul.f32 %v620, %v1601
        %v1615 = vmul.f32 %v621, %v1601
        %v1616 = vmul.f32 %v622, %v1601
        %v1617 = vmul.f32 %v623, %v1601
        %v1618 = vmul.f32 %v624, %v1601
        %v1619 = vmul.f32 %v625, %v1601
        %v1620 = vmul.f32 %v626, %v1601
        %v1621 = vmul.f32 %v627, %v1601
        %v1622 = vmul.f32 %v628, %v1601
        %v1623 = vmul.f32 %v629, %v1601
        %v1624 = vmul.f32 %v630, %v1601
        %v1625 = vmul.f32 %v631, %v1601
        %v1626 = vlaneseq
        %v1627 = vshrl.u32 %v1626, 7
        %v1628 = vsub.s32 3, %v1627
        %v1629 = vrot.slane %v649, %v1628
        %v1630 = vmul.f32 %v611, %v1629
        %v1631 = vmul.f32 %v612, %v1629
        %v1632 = vmul.f32 %v613, %v1629
        %v1633 = vmul.f32 %v614, %v1629
        %v1634 = vmul.f32 %v615, %v1629
        %v1635 = vmul.f32 %v616, %v1629
        %v1636 = vmul.f32 %v617, %v1629
        %v1637 = vmul.f32 %v618, %v1629
        %v1638 = vmul.f32 %v619, %v1629
        %v1639 = vmul.f32 %v620, %v1629
        %v1640 = vmul.f32 %v621, %v1629
        %v1641 = vmul.f32 %v622, %v1629
        %v1642 = vmul.f32 %v623, %v1629
        %v1643 = vmul.f32 %v624, %v1629
        %v1644 = vmul.f32 %v625, %v1629
        %v1645 = vmul.f32 %v626, %v1629
        %v1646 = vmul.f32 %v627, %v1629
        %v1647 = vmul.f32 %v628, %v1629
        %v1648 = vmul.f32 %v629, %v1629
        %v1649 = vmul.f32 %v630, %v1629
        %v1650 = vmul.f32 %v631, %v1629
        %v1651 = vmul.f32 %v632, %v1629
        %v1652 = vmul.f32 %v633, %v1629
        %v1653 = vmul.f32 %v634, %v1629
        %v1654 = vlaneseq
        %v1655 = vshrl.u32 %v1654, 7
        %v1656 = vsub.s32 3, %v1655
        %v1657 = vrot.slane %v650, %v1656
        %v1658 = vmul.f32 %v614, %v1657
        %v1659 = vmul.f32 %v615, %v1657
        %v1660 = vmul.f32 %v616, %v1657
        %v1661 = vmul.f32 %v617, %v1657
        %v1662 = vmul.f32 %v618, %v1657
        %v1663 = vmul.f32 %v619, %v1657
        %v1664 = vmul.f32 %v620, %v1657
        %v1665 = vmul.f32 %v621, %v1657
        %v1666 = vmul.f32 %v622, %v1657
        %v1667 = vmul.f32 %v623, %v1657
        %v1668 = vmul.f32 %v624, %v1657
        %v1669 = vmul.f32 %v625, %v1657
        %v1670 = vmul.f32 %v626, %v1657
        %v1671 = vmul.f32 %v627, %v1657
        %v1672 = vmul.f32 %v628, %v1657
        %v1673 = vmul.f32 %v629, %v1657
        %v1674 = vmul.f32 %v630, %v1657
        %v1675 = vmul.f32 %v631, %v1657
        %v1676 = vmul.f32 %v632, %v1657
        %v1677 = vmul.f32 %v633, %v1657
        %v1678 = vmul.f32 %v634, %v1657
        %v1679 = vmul.f32 %v635, %v1657
        %v1680 = vmul.f32 %v636, %v1657
        %v1681 = vmul.f32 %v637, %v1657
        %v1682 = vlaneseq
        %v1683 = vshrl.u32 %v1682, 7
        %v1684 = vsub.s32 3, %v1683
        %v1685 = vrot.slane %v651, %v1684
        %v1686 = vmul.f32 %v617, %v1685
        %v1687 = vmul.f32 %v618, %v1685
        %v1688 = vmul.f32 %v619, %v1685
        %v1689 = vmul.f32 %v620, %v1685
        %v1690 = vmul.f32 %v621, %v1685
        %v1691 = vmul.f32 %v622, %v1685
        %v1692 = vmul.f32 %v623, %v1685
        %v1693 = vmul.f32 %v624, %v1685
        %v1694 = vmul.f32 %v625, %v1685
        %v1695 = vmul.f32 %v626, %v1685
        %v1696 = vmul.f32 %v627, %v1685
        %v1697 = vmul.f32 %v628, %v1685
        %v1698 = vmul.f32 %v629, %v1685
        %v1699 = vmul.f32 %v630, %v1685
        %v1700 = vmul.f32 %v631, %v1685
        %v1701 = vmul.f32 %v632, %v1685
        %v1702 = vmul.f32 %v633, %v1685
        %v1703 = vmul.f32 %v634, %v1685
        %v1704 = vmul.f32 %v635, %v1685
        %v1705 = vmul.f32 %v636, %v1685
        %v1706 = vmul.f32 %v637, %v1685
        %v1707 = vmul.f32 %v638, %v1685
        %v1708 = vmul.f32 %v639, %v1685
        %v1709 = vmul.f32 %v640, %v1685
        %v1710 = vlaneseq
        %v1711 = vshrl.u32 %v1710, 7
        %v1712 = vsub.s32 3, %v1711
        %v1713 = vrot.slane %v652, %v1712
        %v1714 = vmul.f32 %v620, %v1713
        %v1715 = vmul.f32 %v621, %v1713
        %v1716 = vmul.f32 %v622, %v1713
        %v1717 = vmul.f32 %v623, %v1713
        %v1718 = vmul.f32 %v624, %v1713
        %v1719 = vmul.f32 %v625, %v1713
        %v1720 = vmul.f32 %v626, %v1713
        %v1721 = vmul.f32 %v627, %v1713
        %v1722 = vmul.f32 %v628, %v1713
        %v1723 = vmul.f32 %v629, %v1713
        %v1724 = vmul.f32 %v630, %v1713
        %v1725 = vmul.f32 %v631, %v1713
        %v1726 = vmul.f32 %v632, %v1713
        %v1727 = vmul.f32 %v633, %v1713
        %v1728 = vmul.f32 %v634, %v1713
        %v1729 = vmul.f32 %v635, %v1713
        %v1730 = vmul.f32 %v636, %v1713
        %v1731 = vmul.f32 %v637, %v1713
        %v1732 = vmul.f32 %v638, %v1713
        %v1733 = vmul.f32 %v639, %v1713
        %v1734 = vmul.f32 %v640, %v1713
        %v1735 = vmul.f32 %v641, %v1713
        %v1736 = vmul.f32 %v642, %v1713
        %v1737 = vmul.f32 %v643, %v1713
        %v1738 = vlaneseq
        %v1739 = vshrl.u32 %v1738, 7
        %v1740 = vsub.s32 3, %v1739
        %v1741 = vrot.slane %v653, %v1740
        %v1742 = vmul.f32 %v623, %v1741
        %v1743 = vmul.f32 %v624, %v1741
        %v1744 = vmul.f32 %v625, %v1741
        %v1745 = vmul.f32 %v626, %v1741
        %v1746 = vmul.f32 %v627, %v1741
        %v1747 = vmul.f32 %v628, %v1741
        %v1748 = vmul.f32 %v629, %v1741
        %v1749 = vmul.f32 %v630, %v1741
        %v1750 = vmul.f32 %v631, %v1741
        %v1751 = vmul.f32 %v632, %v1741
        %v1752 = vmul.f32 %v633, %v1741
        %v1753 = vmul.f32 %v634, %v1741
        %v1754 = vmul.f32 %v635, %v1741
        %v1755 = vmul.f32 %v636, %v1741
        %v1756 = vmul.f32 %v637, %v1741
        %v1757 = vmul.f32 %v638, %v1741
        %v1758 = vmul.f32 %v639, %v1741
        %v1759 = vmul.f32 %v640, %v1741
        %v1760 = vmul.f32 %v641, %v1741
        %v1761 = vmul.f32 %v642, %v1741
        %v1762 = vmul.f32 %v643, %v1741
        %v1763 = vmul.f32 %v644, %v1741
        %v1764 = vmul.f32 %v645, %v1741
        %v1765 = vmul.f32 %v646, %v1741
        %v1766 = vadd.f32 %v1574, %v1602
        %v1767 = vadd.f32 %v1575, %v1603
        %v1768 = vadd.f32 %v1576, %v1604
        %v1769 = vadd.f32 %v1577, %v1605
        %v1770 = vadd.f32 %v1578, %v1606
        %v1771 = vadd.f32 %v1579, %v1607
        %v1772 = vadd.f32 %v1580, %v1608
        %v1773 = vadd.f32 %v1581, %v1609
        %v1774 = vadd.f32 %v1582, %v1610
        %v1775 = vadd.f32 %v1583, %v1611
        %v1776 = vadd.f32 %v1584, %v1612
        %v1777 = vadd.f32 %v1585, %v1613
        %v1778 = vadd.f32 %v1586, %v1614
        %v1779 = vadd.f32 %v1587, %v1615
        %v1780 = vadd.f32 %v1588, %v1616
        %v1781 = vadd.f32 %v1589, %v1617
        %v1782 = vadd.f32 %v1590, %v1618
        %v1783 = vadd.f32 %v1591, %v1619
        %v1784 = vadd.f32 %v1592, %v1620
        %v1785 = vadd.f32 %v1593, %v1621
        %v1786 = vadd.f32 %v1594, %v1622
        %v1787 = vadd.f32 %v1595, %v1623
        %v1788 = vadd.f32 %v1596, %v1624
        %v1789 = vadd.f32 %v1597, %v1625
        %v1790 = vadd.f32 %v1630, %v1658
        %v1791 = vadd.f32 %v1631, %v1659
        %v1792 = vadd.f32 %v1632, %v1660
        %v1793 = vadd.f32 %v1633, %v1661
        %v1794 = vadd.f32 %v1634, %v1662
        %v1795 = vadd.f32 %v1635, %v1663
        %v1796 = vadd.f32 %v1636, %v1664
        %v1797 = vadd.f32 %v1637, %v1665
        %v1798 = vadd.f32 %v1638, %v1666
        %v1799 = vadd.f32 %v1639, %v1667
        %v1800 = vadd.f32 %v1640, %v1668
        %v1801 = vadd.f32 %v1641, %v1669
        %v1802 = vadd.f32 %v1642, %v1670
        %v1803 = vadd.f32 %v1643, %v1671
        %v1804 = vadd.f32 %v1644, %v1672
        %v1805 = vadd.f32 %v1645, %v1673
        %v1806 = vadd.f32 %v1646, %v1674
        %v1807 = vadd.f32 %v1647, %v1675
        %v1808 = vadd.f32 %v1648, %v1676
        %v1809 = vadd.f32 %v1649, %v1677
        %v1810 = vadd.f32 %v1650, %v1678
        %v1811 = vadd.f32 %v1651, %v1679
        %v1812 = vadd.f32 %v1652, %v1680
        %v1813 = vadd.f32 %v1653, %v1681
        %v1814 = vadd.f32 %v1686, %v1714
        %v1815 = vadd.f32 %v1687, %v1715
        %v1816 = vadd.f32 %v1688, %v1716
        %v1817 = vadd.f32 %v1689, %v1717
        %v1818 = vadd.f32 %v1690, %v1718
        %v1819 = vadd.f32 %v1691, %v1719
        %v1820 = vadd.f32 %v1692, %v1720
        %v1821 = vadd.f32 %v1693, %v1721
        %v1822 = vadd.f32 %v1694, %v1722
        %v1823 = vadd.f32 %v1695, %v1723
        %v1824 = vadd.f32 %v1696, %v1724
        %v1825 = vadd.f32 %v1697, %v1725
        %v1826 = vadd.f32 %v1698, %v1726
        %v1827 = vadd.f32 %v1699, %v1727
        %v1828 = vadd.f32 %v1700, %v1728
        %v1829 = vadd.f32 %v1701, %v1729
        %v1830 = vadd.f32 %v1702, %v1730
        %v1831 = vadd.f32 %v1703, %v1731
        %v1832 = vadd.f32 %v1704, %v1732
        %v1833 = vadd.f32 %v1705, %v1733
        %v1834 = vadd.f32 %v1706, %v1734
        %v1835 = vadd.f32 %v1707, %v1735
        %v1836 = vadd.f32 %v1708, %v1736
        %v1837 = vadd.f32 %v1709, %v1737
        %v1838 = vadd.f32 %v1766, %v1790
        %v1839 = vadd.f32 %v1767, %v1791
        %v1840 = vadd.f32 %v1768, %v1792
        %v1841 = vadd.f32 %v1769, %v1793
        %v1842 = vadd.f32 %v1770, %v1794
        %v1843 = vadd.f32 %v1771, %v1795
        %v1844 = vadd.f32 %v1772, %v1796
        %v1845 = vadd.f32 %v1773, %v1797
        %v1846 = vadd.f32 %v1774, %v1798
        %v1847 = vadd.f32 %v1775, %v1799
        %v1848 = vadd.f32 %v1776, %v1800
        %v1849 = vadd.f32 %v1777, %v1801
        %v1850 = vadd.f32 %v1778, %v1802
        %v1851 = vadd.f32 %v1779, %v1803
        %v1852 = vadd.f32 %v1780, %v1804
        %v1853 = vadd.f32 %v1781, %v1805
        %v1854 = vadd.f32 %v1782, %v1806
        %v1855 = vadd.f32 %v1783, %v1807
        %v1856 = vadd.f32 %v1784, %v1808
        %v1857 = vadd.f32 %v1785, %v1809
        %v1858 = vadd.f32 %v1786, %v1810
        %v1859 = vadd.f32 %v1787, %v1811
        %v1860 = vadd.f32 %v1788, %v1812
        %v1861 = vadd.f32 %v1789, %v1813
        %v1862 = vadd.f32 %v1814, %v1742
        %v1863 = vadd.f32 %v1815, %v1743
        %v1864 = vadd.f32 %v1816, %v1744
        %v1865 = vadd.f32 %v1817, %v1745
        %v1866 = vadd.f32 %v1818, %v1746
        %v1867 = vadd.f32 %v1819, %v1747
        %v1868 = vadd.f32 %v1820, %v1748
        %v1869 = vadd.f32 %v1821, %v1749
        %v1870 = vadd.f32 %v1822, %v1750
        %v1871 = vadd.f32 %v1823, %v1751
        %v1872 = vadd.f32 %v1824, %v1752
        %v1873 = vadd.f32 %v1825, %v1753
        %v1874 = vadd.f32 %v1826, %v1754
        %v1875 = vadd.f32 %v1827, %v1755
        %v1876 = vadd.f32 %v1828, %v1756
        %v1877 = vadd.f32 %v1829, %v1757
        %v1878 = vadd.f32 %v1830, %v1758
        %v1879 = vadd.f32 %v1831, %v1759
        %v1880 = vadd.f32 %v1832, %v1760
        %v1881 = vadd.f32 %v1833, %v1761
        %v1882 = vadd.f32 %v1834, %v1762
        %v1883 = vadd.f32 %v1835, %v1763
        %v1884 = vadd.f32 %v1836, %v1764
        %v1885 = vadd.f32 %v1837, %v1765
        %v1886 = vadd.f32 %v1838, %v1862
        %v1887 = vadd.f32 %v1839, %v1863
        %v1888 = vadd.f32 %v1840, %v1864
        %v1889 = vadd.f32 %v1841, %v1865
        %v1890 = vadd.f32 %v1842, %v1866
        %v1891 = vadd.f32 %v1843, %v1867
        %v1892 = vadd.f32 %v1844, %v1868
        %v1893 = vadd.f32 %v1845, %v1869
        %v1894 = vadd.f32 %v1846, %v1870
        %v1895 = vadd.f32 %v1847, %v1871
        %v1896 = vadd.f32 %v1848, %v1872
        %v1897 = vadd.f32 %v1849, %v1873
        %v1898 = vadd.f32 %v1850, %v1874
        %v1899 = vadd.f32 %v1851, %v1875
        %v1900 = vadd.f32 %v1852, %v1876
        %v1901 = vadd.f32 %v1853, %v1877
        %v1902 = vadd.f32 %v1854, %v1878
        %v1903 = vadd.f32 %v1855, %v1879
        %v1904 = vadd.f32 %v1856, %v1880
        %v1905 = vadd.f32 %v1857, %v1881
        %v1906 = vadd.f32 %v1858, %v1882
        %v1907 = vadd.f32 %v1859, %v1883
        %v1908 = vadd.f32 %v1860, %v1884
        %v1909 = vadd.f32 %v1861, %v1885
        %v1910 = vlaneseq
        %v1911 = vshrl.u32 %v1910, 7
        %v1912 = vsub.s32 4, %v1911
        %v1913 = vrot.slane %v647, %v1912
        %v1914 = vmul.f32 %v605, %v1913
        %v1915 = vmul.f32 %v606, %v1913
        %v1916 = vmul.f32 %v607, %v1913
        %v1917 = vmul.f32 %v608, %v1913
        %v1918 = vmul.f32 %v609, %v1913
        %v1919 = vmul.f32 %v610, %v1913
        %v1920 = vmul.f32 %v611, %v1913
        %v1921 = vmul.f32 %v612, %v1913
        %v1922 = vmul.f32 %v613, %v1913
        %v1923 = vmul.f32 %v614, %v1913
        %v1924 = vmul.f32 %v615, %v1913
        %v1925 = vmul.f32 %v616, %v1913
        %v1926 = vmul.f32 %v617, %v1913
        %v1927 = vmul.f32 %v618, %v1913
        %v1928 = vmul.f32 %v619, %v1913
        %v1929 = vmul.f32 %v620, %v1913
        %v1930 = vmul.f32 %v621, %v1913
        %v1931 = vmul.f32 %v622, %v1913
        %v1932 = vmul.f32 %v623, %v1913
        %v1933 = vmul.f32 %v624, %v1913
        %v1934 = vmul.f32 %v625, %v1913
        %v1935 = vmul.f32 %v626, %v1913
        %v1936 = vmul.f32 %v627, %v1913
        %v1937 = vmul.f32 %v628, %v1913
        %v1938 = vlaneseq
        %v1939 = vshrl.u32 %v1938, 7
        %v1940 = vsub.s32 4, %v1939
        %v1941 = vrot.slane %v648, %v1940
        %v1942 = vmul.f32 %v608, %v1941
        %v1943 = vmul.f32 %v609, %v1941
        %v1944 = vmul.f32 %v610, %v1941
        %v1945 = vmul.f32 %v611, %v1941
        %v1946 = vmul.f32 %v612, %v1941
        %v1947 = vmul.f32 %v613, %v1941
        %v1948 = vmul.f32 %v614, %v1941
        %v1949 = vmul.f32 %v615, %v1941
        %v1950 = vmul.f32 %v616, %v1941
        %v1951 = vmul.f32 %v617, %v1941
        %v1952 = vmul.f32 %v618, %v1941
        %v1953 = vmul.f32 %v619, %v1941
        %v1954 = vmul.f32 %v620, %v1941
        %v1955 = vmul.f32 %v621, %v1941
        %v1956 = vmul.f32 %v622, %v1941
        %v1957 = vmul.f32 %v623, %v1941
        %v1958 = vmul.f32 %v624, %v1941
        %v1959 = vmul.f32 %v625, %v1941
        %v1960 = vmul.f32 %v626, %v1941
        %v1961 = vmul.f32 %v627, %v1941
        %v1962 = vmul.f32 %v628, %v1941
        %v1963 = vmul.f32 %v629, %v1941
        %v1964 = vmul.f32 %v630, %v1941
        %v1965 = vmul.f32 %v631, %v1941
        %v1966 = vlaneseq
        %v1967 = vshrl.u32 %v1966, 7
        %v1968 = vsub.s32 4, %v1967
        %v1969 = vrot.slane %v649, %v1968
        %v1970 = vmul.f32 %v611, %v1969
        %v1971 = vmul.f32 %v612, %v1969
        %v1972 = vmul.f32 %v613, %v1969
        %v1973 = vmul.f32 %v614, %v1969
        %v1974 = vmul.f32 %v615, %v1969
        %v1975 = vmul.f32 %v616, %v1969
        %v1976 = vmul.f32 %v617, %v1969
        %v1977 = vmul.f32 %v618, %v1969
        %v1978 = vmul.f32 %v619, %v1969
        %v1979 = vmul.f32 %v620, %v1969
        %v1980 = vmul.f32 %v621, %v1969
        %v1981 = vmul.f32 %v622, %v1969
        %v1982 = vmul.f32 %v623, %v1969
        %v1983 = vmul.f32 %v624, %v1969
        %v1984 = vmul.f32 %v625, %v1969
        %v1985 = vmul.f32 %v626, %v1969
        %v1986 = vmul.f32 %v627, %v1969
        %v1987 = vmul.f32 %v628, %v1969
        %v1988 = vmul.f32 %v629, %v1969
        %v1989 = vmul.f32 %v630, %v1969
        %v1990 = vmul.f32 %v631, %v1969
        %v1991 = vmul.f32 %v632, %v1969
        %v1992 = vmul.f32 %v633, %v1969
        %v1993 = vmul.f32 %v634, %v1969
        %v1994 = vlaneseq
        %v1995 = vshrl.u32 %v1994, 7
        %v1996 = vsub.s32 4, %v1995
        %v1997 = vrot.slane %v650, %v1996
        %v1998 = vmul.f32 %v614, %v1997
        %v1999 = vmul.f32 %v615, %v1997
        %v2000 = vmul.f32 %v616, %v1997
        %v2001 = vmul.f32 %v617, %v1997
        %v2002 = vmul.f32 %v618, %v1997
        %v2003 = vmul.f32 %v619, %v1997
        %v2004 = vmul.f32 %v620, %v1997
        %v2005 = vmul.f32 %v621, %v1997
        %v2006 = vmul.f32 %v622, %v1997
        %v2007 = vmul.f32 %v623, %v1997
        %v2008 = vmul.f32 %v624, %v1997
        %v2009 = vmul.f32 %v625, %v1997
        %v2010 = vmul.f32 %v626, %v1997
        %v2011 = vmul.f32 %v627, %v1997
        %v2012 = vmul.f32 %v628, %v1997
        %v2013 = vmul.f32 %v629, %v1997
        %v2014 = vmul.f32 %v630, %v1997
        %v2015 = vmul.f32 %v631, %v1997
        %v2016 = vmul.f32 %v632, %v1997
        %v2017 = vmul.f32 %v633, %v1997
        %v2018 = vmul.f32 %v634, %v1997
        %v2019 = vmul.f32 %v635, %v1997
        %v2020 = vmul.f32 %v636, %v1997
        %v2021 = vmul.f32 %v637, %v1997
        %v2022 = vlaneseq
        %v2023 = vshrl.u32 %v2022, 7
        %v2024 = vsub.s32 4, %v2023
        %v2025 = vrot.slane %v651, %v2024
        %v2026 = vmul.f32 %v617, %v2025
        %v2027 = vmul.f32 %v618, %v2025
        %v2028 = vmul.f32 %v619, %v2025
        %v2029 = vmul.f32 %v620, %v2025
        %v2030 = vmul.f32 %v621, %v2025
        %v2031 = vmul.f32 %v622, %v2025
        %v2032 = vmul.f32 %v623, %v2025
        %v2033 = vmul.f32 %v624, %v2025
        %v2034 = vmul.f32 %v625, %v2025
        %v2035 = vmul.f32 %v626, %v2025
        %v2036 = vmul.f32 %v627, %v2025
        %v2037 = vmul.f32 %v628, %v2025
        %v2038 = vmul.f32 %v629, %v2025
        %v2039 = vmul.f32 %v630, %v2025
        %v2040 = vmul.f32 %v631, %v2025
        %v2041 = vmul.f32 %v632, %v2025
        %v2042 = vmul.f32 %v633, %v2025
        %v2043 = vmul.f32 %v634, %v2025
        %v2044 = vmul.f32 %v635, %v2025
        %v2045 = vmul.f32 %v636, %v2025
        %v2046 = vmul.f32 %v637, %v2025
        %v2047 = vmul.f32 %v638, %v2025
        %v2048 = vmul.f32 %v639, %v2025
        %v2049 = vmul.f32 %v640, %v2025
        %v2050 = vlaneseq
        %v2051 = vshrl.u32 %v2050, 7
        %v2052 = vsub.s32 4, %v2051
        %v2053 = vrot.slane %v652, %v2052
        %v2054 = vmul.f32 %v620, %v2053
        %v2055 = vmul.f32 %v621, %v2053
        %v2056 = vmul.f32 %v622, %v2053
        %v2057 = vmul.f32 %v623, %v2053
        %v2058 = vmul.f32 %v624, %v2053
        %v2059 = vmul.f32 %v625, %v2053
        %v2060 = vmul.f32 %v626, %v2053
        %v2061 = vmul.f32 %v627, %v2053
        %v2062 = vmul.f32 %v628, %v2053
        %v2063 = vmul.f32 %v629, %v2053
        %v2064 = vmul.f32 %v630, %v2053
        %v2065 = vmul.f32 %v631, %v2053
        %v2066 = vmul.f32 %v632, %v2053
        %v2067 = vmul.f32 %v633, %v2053
        %v2068 = vmul.f32 %v634, %v2053
        %v2069 = vmul.f32 %v635, %v2053
        %v2070 = vmul.f32 %v636, %v2053
        %v2071 = vmul.f32 %v637, %v2053
        %v2072 = vmul.f32 %v638, %v2053
        %v2073 = vmul.f32 %v639, %v2053
        %v2074 = vmul.f32 %v640, %v2053
        %v2075 = vmul.f32 %v641, %v2053
        %v2076 = vmul.f32 %v642, %v2053
        %v2077 = vmul.f32 %v643, %v2053
        %v2078 = vlaneseq
        %v2079 = vshrl.u32 %v2078, 7
        %v2080 = vsub.s32 4, %v2079
        %v2081 = vrot.slane %v653, %v2080
        %v2082 = vmul.f32 %v623, %v2081
        %v2083 = vmul.f32 %v624, %v2081
        %v2084 = vmul.f32 %v625, %v2081
        %v2085 = vmul.f32 %v626, %v2081
        %v2086 = vmul.f32 %v627, %v2081
        %v2087 = vmul.f32 %v628, %v2081
        %v2088 = vmul.f32 %v629, %v2081
        %v2089 = vmul.f32 %v630, %v2081
        %v2090 = vmul.f32 %v631, %v2081
        %v2091 = vmul.f32 %v632, %v2081
        %v2092 = vmul.f32 %v633, %v2081
        %v2093 = vmul.f32 %v634, %v2081
        %v2094 = vmul.f32 %v635, %v2081
        %v2095 = vmul.f32 %v636, %v2081
        %v2096 = vmul.f32 %v637, %v2081
        %v2097 = vmul.f32 %v638, %v2081
        %v2098 = vmul.f32 %v639, %v2081
        %v2099 = vmul.f32 %v640, %v2081
        %v2100 = vmul.f32 %v641, %v2081
        %v2101 = vmul.f32 %v642, %v2081
        %v2102 = vmul.f32 %v643, %v2081
        %v2103 = vmul.f32 %v644, %v2081
        %v2104 = vmul.f32 %v645, %v2081
        %v2105 = vmul.f32 %v646, %v2081
        %v2106 = vadd.f32 %v1914, %v1942
        %v2107 = vadd.f32 %v1915, %v1943
        %v2108 = vadd.f32 %v1916, %v1944
        %v2109 = vadd.f32 %v1917, %v1945
        %v2110 = vadd.f32 %v1918, %v1946
        %v2111 = vadd.f32 %v1919, %v1947
        %v2112 = vadd.f32 %v1920, %v1948
        %v2113 = vadd.f32 %v1921, %v1949
        %v2114 = vadd.f32 %v1922, %v1950
        %v2115 = vadd.f32 %v1923, %v1951
        %v2116 = vadd.f32 %v1924, %v1952
        %v2117 = vadd.f32 %v1925, %v1953
        %v2118 = vadd.f32 %v1926, %v1954
        %v2119 = vadd.f32 %v1927, %v1955
        %v2120 = vadd.f32 %v1928, %v1956
        %v2121 = vadd.f32 %v1929, %v1957
        %v2122 = vadd.f32 %v1930, %v1958
        %v2123 = vadd.f32 %v1931, %v1959
        %v2124 = vadd.f32 %v1932, %v1960
        %v2125 = vadd.f32 %v1933, %v1961
        %v2126 = vadd.f32 %v1934, %v1962
        %v2127 = vadd.f32 %v1935, %v1963
        %v2128 = vadd.f32 %v1936, %v1964
        %v2129 = vadd.f32 %v1937, %v1965
        %v2130 = vadd.f32 %v1970, %v1998
        %v2131 = vadd.f32 %v1971, %v1999
        %v2132 = vadd.f32 %v1972, %v2000
        %v2133 = vadd.f32 %v1973, %v2001
        %v2134 = vadd.f32 %v1974, %v2002
        %v2135 = vadd.f32 %v1975, %v2003
        %v2136 = vadd.f32 %v1976, %v2004
        %v2137 = vadd.f32 %v1977, %v2005
        %v2138 = vadd.f32 %v1978, %v2006
        %v2139 = vadd.f32 %v1979, %v2007
        %v2140 = vadd.f32 %v1980, %v2008
        %v2141 = vadd.f32 %v1981, %v2009
        %v2142 = vadd.f32 %v1982, %v2010
        %v2143 = vadd.f32 %v1983, %v2011
        %v2144 = vadd.f32 %v1984, %v2012
        %v2145 = vadd.f32 %v1985, %v2013
        %v2146 = vadd.f32 %v1986, %v2014
        %v2147 = vadd.f32 %v1987, %v2015
        %v2148 = vadd.f32 %v1988, %v2016
        %v2149 = vadd.f32 %v1989, %v2017
        %v2150 = vadd.f32 %v1990, %v2018
        %v2151 = vadd.f32 %v1991, %v2019
        %v2152 = vadd.f32 %v1992, %v2020
        %v2153 = vadd.f32 %v1993, %v2021
        %v2154 = vadd.f32 %v2026, %v2054
        %v2155 = vadd.f32 %v2027, %v2055
        %v2156 = vadd.f32 %v2028, %v2056
        %v2157 = vadd.f32 %v2029, %v2057
        %v2158 = vadd.f32 %v2030, %v2058
        %v2159 = vadd.f32 %v2031, %v2059
        %v2160 = vadd.f32 %v2032, %v2060
        %v2161 = vadd.f32 %v2033, %v2061
        %v2162 = vadd.f32 %v2034, %v2062
        %v2163 = vadd.f32 %v2035, %v2063
        %v2164 = vadd.f32 %v2036, %v2064
        %v2165 = vadd.f32 %v2037, %v2065
        %v2166 = vadd.f32 %v2038, %v2066
        %v2167 = vadd.f32 %v2039, %v2067
        %v2168 = vadd.f32 %v2040, %v2068
        %v2169 = vadd.f32 %v2041, %v2069
        %v2170 = vadd.f32 %v2042, %v2070
        %v2171 = vadd.f32 %v2043, %v2071
        %v2172 = vadd.f32 %v2044, %v2072
        %v2173 = vadd.f32 %v2045, %v2073
        %v2174 = vadd.f32 %v2046, %v2074
        %v2175 = vadd.f32 %v2047, %v2075
        %v2176 = vadd.f32 %v2048, %v2076
        %v2177 = vadd.f32 %v2049, %v2077
        %v2178 = vadd.f32 %v2106, %v2130
        %v2179 = vadd.f32 %v2107, %v2131
        %v2180 = vadd.f32 %v2108, %v2132
        %v2181 = vadd.f32 %v2109, %v2133
        %v2182 = vadd.f32 %v2110, %v2134
        %v2183 = vadd.f32 %v2111, %v2135
        %v2184 = vadd.f32 %v2112, %v2136
        %v2185 = vadd.f32 %v2113, %v2137
        %v2186 = vadd.f32 %v2114, %v2138
        %v2187 = vadd.f32 %v2115, %v2139
        %v2188 = vadd.f32 %v2116, %v2140
        %v2189 = vadd.f32 %v2117, %v2141
        %v2190 = vadd.f32 %v2118, %v2142
        %v2191 = vadd.f32 %v2119, %v2143
        %v2192 = vadd.f32 %v2120, %v2144
        %v2193 = vadd.f32 %v2121, %v2145
        %v2194 = vadd.f32 %v2122, %v2146
        %v2195 = vadd.f32 %v2123, %v2147
        %v2196 = vadd.f32 %v2124, %v2148
        %v2197 = vadd.f32 %v2125, %v2149
        %v2198 = vadd.f32 %v2126, %v2150
        %v2199 = vadd.f32 %v2127, %v2151
        %v2200 = vadd.f32 %v2128, %v2152
        %v2201 = vadd.f32 %v2129, %v2153
        %v2202 = vadd.f32 %v2154, %v2082
        %v2203 = vadd.f32 %v2155, %v2083
        %v2204 = vadd.f32 %v2156, %v2084
        %v2205 = vadd.f32 %v2157, %v2085
        %v2206 = vadd.f32 %v2158, %v2086
        %v2207 = vadd.f32 %v2159, %v2087
        %v2208 = vadd.f32 %v2160, %v2088
        %v2209 = vadd.f32 %v2161, %v2089
        %v2210 = vadd.f32 %v2162, %v2090
        %v2211 = vadd.f32 %v2163, %v2091
        %v2212 = vadd.f32 %v2164, %v2092
        %v2213 = vadd.f32 %v2165, %v2093
        %v2214 = vadd.f32 %v2166, %v2094
        %v2215 = vadd.f32 %v2167, %v2095
        %v2216 = vadd.f32 %v2168, %v2096
        %v2217 = vadd.f32 %v2169, %v2097
        %v2218 = vadd.f32 %v2170, %v2098
        %v2219 = vadd.f32 %v2171, %v2099
        %v2220 = vadd.f32 %v2172, %v2100
        %v2221 = vadd.f32 %v2173, %v2101
        %v2222 = vadd.f32 %v2174, %v2102
        %v2223 = vadd.f32 %v2175, %v2103
        %v2224 = vadd.f32 %v2176, %v2104
        %v2225 = vadd.f32 %v2177, %v2105
        %v2226 = vadd.f32 %v2178, %v2202
        %v2227 = vadd.f32 %v2179, %v2203
        %v2228 = vadd.f32 %v2180, %v2204
        %v2229 = vadd.f32 %v2181, %v2205
        %v2230 = vadd.f32 %v2182, %v2206
        %v2231 = vadd.f32 %v2183, %v2207
        %v2232 = vadd.f32 %v2184, %v2208
        %v2233 = vadd.f32 %v2185, %v2209
        %v2234 = vadd.f32 %v2186, %v2210
        %v2235 = vadd.f32 %v2187, %v2211
        %v2236 = vadd.f32 %v2188, %v2212
        %v2237 = vadd.f32 %v2189, %v2213
        %v2238 = vadd.f32 %v2190, %v2214
        %v2239 = vadd.f32 %v2191, %v2215
        %v2240 = vadd.f32 %v2192, %v2216
        %v2241 = vadd.f32 %v2193, %v2217
        %v2242 = vadd.f32 %v2194, %v2218
        %v2243 = vadd.f32 %v2195, %v2219
        %v2244 = vadd.f32 %v2196, %v2220
        %v2245 = vadd.f32 %v2197, %v2221
        %v2246 = vadd.f32 %v2198, %v2222
        %v2247 = vadd.f32 %v2199, %v2223
        %v2248 = vadd.f32 %v2200, %v2224
        %v2249 = vadd.f32 %v2201, %v2225
        %v2250 = vlaneseq
        %v2251 = vshrl.u32 %v2250, 7
        %v2252 = vsub.s32 5, %v2251
        %v2253 = vrot.slane %v647, %v2252
        %v2254 = vmul.f32 %v605, %v2253
        %v2255 = vmul.f32 %v606, %v2253
        %v2256 = vmul.f32 %v607, %v2253
        %v2257 = vmul.f32 %v608, %v2253
        %v2258 = vmul.f32 %v609, %v2253
        %v2259 = vmul.f32 %v610, %v2253
        %v2260 = vmul.f32 %v611, %v2253
        %v2261 = vmul.f32 %v612, %v2253
        %v2262 = vmul.f32 %v613, %v2253
        %v2263 = vmul.f32 %v614, %v2253
        %v2264 = vmul.f32 %v615, %v2253
        %v2265 = vmul.f32 %v616, %v2253
        %v2266 = vmul.f32 %v617, %v2253
        %v2267 = vmul.f32 %v618, %v2253
        %v2268 = vmul.f32 %v619, %v2253
        %v2269 = vmul.f32 %v620, %v2253
        %v2270 = vmul.f32 %v621, %v2253
        %v2271 = vmul.f32 %v622, %v2253
        %v2272 = vmul.f32 %v623, %v2253
        %v2273 = vmul.f32 %v624, %v2253
        %v2274 = vmul.f32 %v625, %v2253
        %v2275 = vmul.f32 %v626, %v2253
        %v2276 = vmul.f32 %v627, %v2253
        %v2277 = vmul.f32 %v628, %v2253
        %v2278 = vlaneseq
        %v2279 = vshrl.u32 %v2278, 7
        %v2280 = vsub.s32 5, %v2279
        %v2281 = vrot.slane %v648, %v2280
        %v2282 = vmul.f32 %v608, %v2281
        %v2283 = vmul.f32 %v609, %v2281
        %v2284 = vmul.f32 %v610, %v2281
        %v2285 = vmul.f32 %v611, %v2281
        %v2286 = vmul.f32 %v612, %v2281
        %v2287 = vmul.f32 %v613, %v2281
        %v2288 = vmul.f32 %v614, %v2281
        %v2289 = vmul.f32 %v615, %v2281
        %v2290 = vmul.f32 %v616, %v2281
        %v2291 = vmul.f32 %v617, %v2281
        %v2292 = vmul.f32 %v618, %v2281
        %v2293 = vmul.f32 %v619, %v2281
        %v2294 = vmul.f32 %v620, %v2281
        %v2295 = vmul.f32 %v621, %v2281
        %v2296 = vmul.f32 %v622, %v2281
        %v2297 = vmul.f32 %v623, %v2281
        %v2298 = vmul.f32 %v624, %v2281
        %v2299 = vmul.f32 %v625, %v2281
        %v2300 = vmul.f32 %v626, %v2281
        %v2301 = vmul.f32 %v627, %v2281
        %v2302 = vmul.f32 %v628, %v2281
        %v2303 = vmul.f32 %v629, %v2281
        %v2304 = vmul.f32 %v630, %v2281
        %v2305 = vmul.f32 %v631, %v2281
        %v2306 = vlaneseq
        %v2307 = vshrl.u32 %v2306, 7
        %v2308 = vsub.s32 5, %v2307
        %v2309 = vrot.slane %v649, %v2308
        %v2310 = vmul.f32 %v611, %v2309
        %v2311 = vmul.f32 %v612, %v2309
        %v2312 = vmul.f32 %v613, %v2309
        %v2313 = vmul.f32 %v614, %v2309
        %v2314 = vmul.f32 %v615, %v2309
        %v2315 = vmul.f32 %v616, %v2309
        %v2316 = vmul.f32 %v617, %v2309
        %v2317 = vmul.f32 %v618, %v2309
        %v2318 = vmul.f32 %v619, %v2309
        %v2319 = vmul.f32 %v620, %v2309
        %v2320 = vmul.f32 %v621, %v2309
        %v2321 = vmul.f32 %v622, %v2309
        %v2322 = vmul.f32 %v623, %v2309
        %v2323 = vmul.f32 %v624, %v2309
        %v2324 = vmul.f32 %v625, %v2309
        %v2325 = vmul.f32 %v626, %v2309
        %v2326 = vmul.f32 %v627, %v2309
        %v2327 = vmul.f32 %v628, %v2309
        %v2328 = vmul.f32 %v629, %v2309
        %v2329 = vmul.f32 %v630, %v2309
        %v2330 = vmul.f32 %v631, %v2309
        %v2331 = vmul.f32 %v632, %v2309
        %v2332 = vmul.f32 %v633, %v2309
        %v2333 = vmul.f32 %v634, %v2309
        %v2334 = vlaneseq
        %v2335 = vshrl.u32 %v2334, 7
        %v2336 = vsub.s32 5, %v2335
        %v2337 = vrot.slane %v650, %v2336
        %v2338 = vmul.f32 %v614, %v2337
        %v2339 = vmul.f32 %v615, %v2337
        %v2340 = vmul.f32 %v616, %v2337
        %v2341 = vmul.f32 %v617, %v2337
        %v2342 = vmul.f32 %v618, %v2337
        %v2343 = vmul.f32 %v619, %v2337
        %v2344 = vmul.f32 %v620, %v2337
        %v2345 = vmul.f32 %v621, %v2337
        %v2346 = vmul.f32 %v622, %v2337
        %v2347 = vmul.f32 %v623, %v2337
        %v2348 = vmul.f32 %v624, %v2337
        %v2349 = vmul.f32 %v625, %v2337
        %v2350 = vmul.f32 %v626, %v2337
        %v2351 = vmul.f32 %v627, %v2337
        %v2352 = vmul.f32 %v628, %v2337
        %v2353 = vmul.f32 %v629, %v2337
        %v2354 = vmul.f32 %v630, %v2337
        %v2355 = vmul.f32 %v631, %v2337
        %v2356 = vmul.f32 %v632, %v2337
        %v2357 = vmul.f32 %v633, %v2337
        %v2358 = vmul.f32 %v634, %v2337
        %v2359 = vmul.f32 %v635, %v2337
        %v2360 = vmul.f32 %v636, %v2337
        %v2361 = vmul.f32 %v637, %v2337
        %v2362 = vlaneseq
        %v2363 = vshrl.u32 %v2362, 7
        %v2364 = vsub.s32 5, %v2363
        %v2365 = vrot.slane %v651, %v2364
        %v2366 = vmul.f32 %v617, %v2365
        %v2367 = vmul.f32 %v618, %v2365
        %v2368 = vmul.f32 %v619, %v2365
        %v2369 = vmul.f32 %v620, %v2365
        %v2370 = vmul.f32 %v621, %v2365
        %v2371 = vmul.f32 %v622, %v2365
        %v2372 = vmul.f32 %v623, %v2365
        %v2373 = vmul.f32 %v624, %v2365
        %v2374 = vmul.f32 %v625, %v2365
        %v2375 = vmul.f32 %v626, %v2365
        %v2376 = vmul.f32 %v627, %v2365
        %v2377 = vmul.f32 %v628, %v2365
        %v2378 = vmul.f32 %v629, %v2365
        %v2379 = vmul.f32 %v630, %v2365
        %v2380 = vmul.f32 %v631, %v2365
        %v2381 = vmul.f32 %v632, %v2365
        %v2382 = vmul.f32 %v633, %v2365
        %v2383 = vmul.f32 %v634, %v2365
        %v2384 = vmul.f32 %v635, %v2365
        %v2385 = vmul.f32 %v636, %v2365
        %v2386 = vmul.f32 %v637, %v2365
        %v2387 = vmul.f32 %v638, %v2365
        %v2388 = vmul.f32 %v639, %v2365
        %v2389 = vmul.f32 %v640, %v2365
        %v2390 = vlaneseq
        %v2391 = vshrl.u32 %v2390, 7
        %v2392 = vsub.s32 5, %v2391
        %v2393 = vrot.slane %v652, %v2392
        %v2394 = vmul.f32 %v620, %v2393
        %v2395 = vmul.f32 %v621, %v2393
        %v2396 = vmul.f32 %v622, %v2393
        %v2397 = vmul.f32 %v623, %v2393
        %v2398 = vmul.f32 %v624, %v2393
        %v2399 = vmul.f32 %v625, %v2393
        %v2400 = vmul.f32 %v626, %v2393
        %v2401 = vmul.f32 %v627, %v2393
        %v2402 = vmul.f32 %v628, %v2393
        %v2403 = vmul.f32 %v629, %v2393
        %v2404 = vmul.f32 %v630, %v2393
        %v2405 = vmul.f32 %v631, %v2393
        %v2406 = vmul.f32 %v632, %v2393
        %v2407 = vmul.f32 %v633, %v2393
        %v2408 = vmul.f32 %v634, %v2393
        %v2409 = vmul.f32 %v635, %v2393
        %v2410 = vmul.f32 %v636, %v2393
        %v2411 = vmul.f32 %v637, %v2393
        %v2412 = vmul.f32 %v638, %v2393
        %v2413 = vmul.f32 %v639, %v2393
        %v2414 = vmul.f32 %v640, %v2393
        %v2415 = vmul.f32 %v641, %v2393
        %v2416 = vmul.f32 %v642, %v2393
        %v2417 = vmul.f32 %v643, %v2393
        %v2418 = vlaneseq
        %v2419 = vshrl.u32 %v2418, 7
        %v2420 = vsub.s32 5, %v2419
        %v2421 = vrot.slane %v653, %v2420
        %v2422 = vmul.f32 %v623, %v2421
        %v2423 = vmul.f32 %v624, %v2421
        %v2424 = vmul.f32 %v625, %v2421
        %v2425 = vmul.f32 %v626, %v2421
        %v2426 = vmul.f32 %v627, %v2421
        %v2427 = vmul.f32 %v628, %v2421
        %v2428 = vmul.f32 %v629, %v2421
        %v2429 = vmul.f32 %v630, %v2421
        %v2430 = vmul.f32 %v631, %v2421
        %v2431 = vmul.f32 %v632, %v2421
        %v2432 = vmul.f32 %v633, %v2421
        %v2433 = vmul.f32 %v634, %v2421
        %v2434 = vmul.f32 %v635, %v2421
        %v2435 = vmul.f32 %v636, %v2421
        %v2436 = vmul.f32 %v637, %v2421
        %v2437 = vmul.f32 %v638, %v2421
        %v2438 = vmul.f32 %v639, %v2421
        %v2439 = vmul.f32 %v640, %v2421
        %v2440 = vmul.f32 %v641, %v2421
        %v2441 = vmul.f32 %v642, %v2421
        %v2442 = vmul.f32 %v643, %v2421
        %v2443 = vmul.f32 %v644, %v2421
        %v2444 = vmul.f32 %v645, %v2421
        %v2445 = vmul.f32 %v646, %v2421
        %v2446 = vadd.f32 %v2254, %v2282
        %v2447 = vadd.f32 %v2255, %v2283
        %v2448 = vadd.f32 %v2256, %v2284
        %v2449 = vadd.f32 %v2257, %v2285
        %v2450 = vadd.f32 %v2258, %v2286
        %v2451 = vadd.f32 %v2259, %v2287
        %v2452 = vadd.f32 %v2260, %v2288
        %v2453 = vadd.f32 %v2261, %v2289
        %v2454 = vadd.f32 %v2262, %v2290
        %v2455 = vadd.f32 %v2263, %v2291
        %v2456 = vadd.f32 %v2264, %v2292
        %v2457 = vadd.f32 %v2265, %v2293
        %v2458 = vadd.f32 %v2266, %v2294
        %v2459 = vadd.f32 %v2267, %v2295
        %v2460 = vadd.f32 %v2268, %v2296
        %v2461 = vadd.f32 %v2269, %v2297
        %v2462 = vadd.f32 %v2270, %v2298
        %v2463 = vadd.f32 %v2271, %v2299
        %v2464 = vadd.f32 %v2272, %v2300
        %v2465 = vadd.f32 %v2273, %v2301
        %v2466 = vadd.f32 %v2274, %v2302
        %v2467 = vadd.f32 %v2275, %v2303
        %v2468 = vadd.f32 %v2276, %v2304
        %v2469 = vadd.f32 %v2277, %v2305
        %v2470 = vadd.f32 %v2310, %v2338
        %v2471 = vadd.f32 %v2311, %v2339
        %v2472 = vadd.f32 %v2312, %v2340
        %v2473 = vadd.f32 %v2313, %v2341
        %v2474 = vadd.f32 %v2314, %v2342
        %v2475 = vadd.f32 %v2315, %v2343
        %v2476 = vadd.f32 %v2316, %v2344
        %v2477 = vadd.f32 %v2317, %v2345
        %v2478 = vadd.f32 %v2318, %v2346
        %v2479 = vadd.f32 %v2319, %v2347
        %v2480 = vadd.f32 %v2320, %v2348
        %v2481 = vadd.f32 %v2321, %v2349
        %v2482 = vadd.f32 %v2322, %v2350
        %v2483 = vadd.f32 %v2323, %v2351
        %v2484 = vadd.f32 %v2324, %v2352
        %v2485 = vadd.f32 %v2325, %v2353
        %v2486 = vadd.f32 %v2326, %v2354
        %v2487 = vadd.f32 %v2327, %v2355
        %v2488 = vadd.f32 %v2328, %v2356
        %v2489 = vadd.f32 %v2329, %v2357
        %v2490 = vadd.f32 %v2330, %v2358
        %v2491 = vadd.f32 %v2331, %v2359
        %v2492 = vadd.f32 %v2332, %v2360
        %v2493 = vadd.f32 %v2333, %v2361
        %v2494 = vadd.f32 %v2366, %v2394
        %v2495 = vadd.f32 %v2367, %v2395
        %v2496 = vadd.f32 %v2368, %v2396
        %v2497 = vadd.f32 %v2369, %v2397
        %v2498 = vadd.f32 %v2370, %v2398
        %v2499 = vadd.f32 %v2371, %v2399
        %v2500 = vadd.f32 %v2372, %v2400
        %v2501 = vadd.f32 %v2373, %v2401
        %v2502 = vadd.f32 %v2374, %v2402
        %v2503 = vadd.f32 %v2375, %v2403
        %v2504 = vadd.f32 %v2376, %v2404
        %v2505 = vadd.f32 %v2377, %v2405
        %v2506 = vadd.f32 %v2378, %v2406
        %v2507 = vadd.f32 %v2379, %v2407
        %v2508 = vadd.f32 %v2380, %v2408
        %v2509 = vadd.f32 %v2381, %v2409
        %v2510 = vadd.f32 %v2382, %v2410
        %v2511 = vadd.f32 %v2383, %v2411
        %v2512 = vadd.f32 %v2384, %v2412
        %v2513 = vadd.f32 %v2385, %v2413
        %v2514 = vadd.f32 %v2386, %v2414
        %v2515 = vadd.f32 %v2387, %v2415
        %v2516 = vadd.f32 %v2388, %v2416
        %v2517 = vadd.f32 %v2389, %v2417
        %v2518 = vadd.f32 %v2446, %v2470
        %v2519 = vadd.f32 %v2447, %v2471
        %v2520 = vadd.f32 %v2448, %v2472
        %v2521 = vadd.f32 %v2449, %v2473
        %v2522 = vadd.f32 %v2450, %v2474
        %v2523 = vadd.f32 %v2451, %v2475
        %v2524 = vadd.f32 %v2452, %v2476
        %v2525 = vadd.f32 %v2453, %v2477
        %v2526 = vadd.f32 %v2454, %v2478
        %v2527 = vadd.f32 %v2455, %v2479
        %v2528 = vadd.f32 %v2456, %v2480
        %v2529 = vadd.f32 %v2457, %v2481
        %v2530 = vadd.f32 %v2458, %v2482
        %v2531 = vadd.f32 %v2459, %v2483
        %v2532 = vadd.f32 %v2460, %v2484
        %v2533 = vadd.f32 %v2461, %v2485
        %v2534 = vadd.f32 %v2462, %v2486
        %v2535 = vadd.f32 %v2463, %v2487
        %v2536 = vadd.f32 %v2464, %v2488
        %v2537 = vadd.f32 %v2465, %v2489
        %v2538 = vadd.f32 %v2466, %v2490
        %v2539 = vadd.f32 %v2467, %v2491
        %v2540 = vadd.f32 %v2468, %v2492
        %v2541 = vadd.f32 %v2469, %v2493
        %v2542 = vadd.f32 %v2494, %v2422
        %v2543 = vadd.f32 %v2495, %v2423
        %v2544 = vadd.f32 %v2496, %v2424
        %v2545 = vadd.f32 %v2497, %v2425
        %v2546 = vadd.f32 %v2498, %v2426
        %v2547 = vadd.f32 %v2499, %v2427
        %v2548 = vadd.f32 %v2500, %v2428
        %v2549 = vadd.f32 %v2501, %v2429
        %v2550 = vadd.f32 %v2502, %v2430
        %v2551 = vadd.f32 %v2503, %v2431
        %v2552 = vadd.f32 %v2504, %v2432
        %v2553 = vadd.f32 %v2505, %v2433
        %v2554 = vadd.f32 %v2506, %v2434
        %v2555 = vadd.f32 %v2507, %v2435
        %v2556 = vadd.f32 %v2508, %v2436
        %v2557 = vadd.f32 %v2509, %v2437
        %v2558 = vadd.f32 %v2510, %v2438
        %v2559 = vadd.f32 %v2511, %v2439
        %v2560 = vadd.f32 %v2512, %v2440
        %v2561 = vadd.f32 %v2513, %v2441
        %v2562 = vadd.f32 %v2514, %v2442
        %v2563 = vadd.f32 %v2515, %v2443
        %v2564 = vadd.f32 %v2516, %v2444
        %v2565 = vadd.f32 %v2517, %v2445
        %v2566 = vadd.f32 %v2518, %v2542
        %v2567 = vadd.f32 %v2519, %v2543
        %v2568 = vadd.f32 %v2520, %v2544
        %v2569 = vadd.f32 %v2521, %v2545
        %v2570 = vadd.f32 %v2522, %v2546
        %v2571 = vadd.f32 %v2523, %v2547
        %v2572 = vadd.f32 %v2524, %v2548
        %v2573 = vadd.f32 %v2525, %v2549
        %v2574 = vadd.f32 %v2526, %v2550
        %v2575 = vadd.f32 %v2527, %v2551
        %v2576 = vadd.f32 %v2528, %v2552
        %v2577 = vadd.f32 %v2529, %v2553
        %v2578 = vadd.f32 %v2530, %v2554
        %v2579 = vadd.f32 %v2531, %v2555
        %v2580 = vadd.f32 %v2532, %v2556
        %v2581 = vadd.f32 %v2533, %v2557
        %v2582 = vadd.f32 %v2534, %v2558
        %v2583 = vadd.f32 %v2535, %v2559
        %v2584 = vadd.f32 %v2536, %v2560
        %v2585 = vadd.f32 %v2537, %v2561
        %v2586 = vadd.f32 %v2538, %v2562
        %v2587 = vadd.f32 %v2539, %v2563
        %v2588 = vadd.f32 %v2540, %v2564
        %v2589 = vadd.f32 %v2541, %v2565
        %v2590 = vlaneseq
        %v2591 = vshrl.u32 %v2590, 7
        %v2592 = vsub.s32 6, %v2591
        %v2593 = vrot.slane %v647, %v2592
        %v2594 = vmul.f32 %v605, %v2593
        %v2595 = vmul.f32 %v606, %v2593
        %v2596 = vmul.f32 %v607, %v2593
        %v2597 = vmul.f32 %v608, %v2593
        %v2598 = vmul.f32 %v609, %v2593
        %v2599 = vmul.f32 %v610, %v2593
        %v2600 = vmul.f32 %v611, %v2593
        %v2601 = vmul.f32 %v612, %v2593
        %v2602 = vmul.f32 %v613, %v2593
        %v2603 = vmul.f32 %v614, %v2593
        %v2604 = vmul.f32 %v615, %v2593
        %v2605 = vmul.f32 %v616, %v2593
        %v2606 = vmul.f32 %v617, %v2593
        %v2607 = vmul.f32 %v618, %v2593
        %v2608 = vmul.f32 %v619, %v2593
        %v2609 = vmul.f32 %v620, %v2593
        %v2610 = vmul.f32 %v621, %v2593
        %v2611 = vmul.f32 %v622, %v2593
        %v2612 = vmul.f32 %v623, %v2593
        %v2613 = vmul.f32 %v624, %v2593
        %v2614 = vmul.f32 %v625, %v2593
        %v2615 = vmul.f32 %v626, %v2593
        %v2616 = vmul.f32 %v627, %v2593
        %v2617 = vmul.f32 %v628, %v2593
        %v2618 = vlaneseq
        %v2619 = vshrl.u32 %v2618, 7
        %v2620 = vsub.s32 6, %v2619
        %v2621 = vrot.slane %v648, %v2620
        %v2622 = vmul.f32 %v608, %v2621
        %v2623 = vmul.f32 %v609, %v2621
        %v2624 = vmul.f32 %v610, %v2621
        %v2625 = vmul.f32 %v611, %v2621
        %v2626 = vmul.f32 %v612, %v2621
        %v2627 = vmul.f32 %v613, %v2621
        %v2628 = vmul.f32 %v614, %v2621
        %v2629 = vmul.f32 %v615, %v2621
        %v2630 = vmul.f32 %v616, %v2621
        %v2631 = vmul.f32 %v617, %v2621
        %v2632 = vmul.f32 %v618, %v2621
        %v2633 = vmul.f32 %v619, %v2621
        %v2634 = vmul.f32 %v620, %v2621
        %v2635 = vmul.f32 %v621, %v2621
        %v2636 = vmul.f32 %v622, %v2621
        %v2637 = vmul.f32 %v623, %v2621
        %v2638 = vmul.f32 %v624, %v2621
        %v2639 = vmul.f32 %v625, %v2621
        %v2640 = vmul.f32 %v626, %v2621
        %v2641 = vmul.f32 %v627, %v2621
        %v2642 = vmul.f32 %v628, %v2621
        %v2643 = vmul.f32 %v629, %v2621
        %v2644 = vmul.f32 %v630, %v2621
        %v2645 = vmul.f32 %v631, %v2621
        %v2646 = vlaneseq
        %v2647 = vshrl.u32 %v2646, 7
        %v2648 = vsub.s32 6, %v2647
        %v2649 = vrot.slane %v649, %v2648
        %v2650 = vmul.f32 %v611, %v2649
        %v2651 = vmul.f32 %v612, %v2649
        %v2652 = vmul.f32 %v613, %v2649
        %v2653 = vmul.f32 %v614, %v2649
        %v2654 = vmul.f32 %v615, %v2649
        %v2655 = vmul.f32 %v616, %v2649
        %v2656 = vmul.f32 %v617, %v2649
        %v2657 = vmul.f32 %v618, %v2649
        %v2658 = vmul.f32 %v619, %v2649
        %v2659 = vmul.f32 %v620, %v2649
        %v2660 = vmul.f32 %v621, %v2649
        %v2661 = vmul.f32 %v622, %v2649
        %v2662 = vmul.f32 %v623, %v2649
        %v2663 = vmul.f32 %v624, %v2649
        %v2664 = vmul.f32 %v625, %v2649
        %v2665 = vmul.f32 %v626, %v2649
        %v2666 = vmul.f32 %v627, %v2649
        %v2667 = vmul.f32 %v628, %v2649
        %v2668 = vmul.f32 %v629, %v2649
        %v2669 = vmul.f32 %v630, %v2649
        %v2670 = vmul.f32 %v631, %v2649
        %v2671 = vmul.f32 %v632, %v2649
        %v2672 = vmul.f32 %v633, %v2649
        %v2673 = vmul.f32 %v634, %v2649
        %v2674 = vlaneseq
        %v2675 = vshrl.u32 %v2674, 7
        %v2676 = vsub.s32 6, %v2675
        %v2677 = vrot.slane %v650, %v2676
        %v2678 = vmul.f32 %v614, %v2677
        %v2679 = vmul.f32 %v615, %v2677
        %v2680 = vmul.f32 %v616, %v2677
        %v2681 = vmul.f32 %v617, %v2677
        %v2682 = vmul.f32 %v618, %v2677
        %v2683 = vmul.f32 %v619, %v2677
        %v2684 = vmul.f32 %v620, %v2677
        %v2685 = vmul.f32 %v621, %v2677
        %v2686 = vmul.f32 %v622, %v2677
        %v2687 = vmul.f32 %v623, %v2677
        %v2688 = vmul.f32 %v624, %v2677
        %v2689 = vmul.f32 %v625, %v2677
        %v2690 = vmul.f32 %v626, %v2677
        %v2691 = vmul.f32 %v627, %v2677
        %v2692 = vmul.f32 %v628, %v2677
        %v2693 = vmul.f32 %v629, %v2677
        %v2694 = vmul.f32 %v630, %v2677
        %v2695 = vmul.f32 %v631, %v2677
        %v2696 = vmul.f32 %v632, %v2677
        %v2697 = vmul.f32 %v633, %v2677
        %v2698 = vmul.f32 %v634, %v2677
        %v2699 = vmul.f32 %v635, %v2677
        %v2700 = vmul.f32 %v636, %v2677
        %v2701 = vmul.f32 %v637, %v2677
        %v2702 = vlaneseq
        %v2703 = vshrl.u32 %v2702, 7
        %v2704 = vsub.s32 6, %v2703
        %v2705 = vrot.slane %v651, %v2704
        %v2706 = vmul.f32 %v617, %v2705
        %v2707 = vmul.f32 %v618, %v2705
        %v2708 = vmul.f32 %v619, %v2705
        %v2709 = vmul.f32 %v620, %v2705
        %v2710 = vmul.f32 %v621, %v2705
        %v2711 = vmul.f32 %v622, %v2705
        %v2712 = vmul.f32 %v623, %v2705
        %v2713 = vmul.f32 %v624, %v2705
        %v2714 = vmul.f32 %v625, %v2705
        %v2715 = vmul.f32 %v626, %v2705
        %v2716 = vmul.f32 %v627, %v2705
        %v2717 = vmul.f32 %v628, %v2705
        %v2718 = vmul.f32 %v629, %v2705
        %v2719 = vmul.f32 %v630, %v2705
        %v2720 = vmul.f32 %v631, %v2705
        %v2721 = vmul.f32 %v632, %v2705
        %v2722 = vmul.f32 %v633, %v2705
        %v2723 = vmul.f32 %v634, %v2705
        %v2724 = vmul.f32 %v635, %v2705
        %v2725 = vmul.f32 %v636, %v2705
        %v2726 = vmul.f32 %v637, %v2705
        %v2727 = vmul.f32 %v638, %v2705
        %v2728 = vmul.f32 %v639, %v2705
        %v2729 = vmul.f32 %v640, %v2705
        %v2730 = vlaneseq
        %v2731 = vshrl.u32 %v2730, 7
        %v2732 = vsub.s32 6, %v2731
        %v2733 = vrot.slane %v652, %v2732
        %v2734 = vmul.f32 %v620, %v2733
        %v2735 = vmul.f32 %v621, %v2733
        %v2736 = vmul.f32 %v622, %v2733
        %v2737 = vmul.f32 %v623, %v2733
        %v2738 = vmul.f32 %v624, %v2733
        %v2739 = vmul.f32 %v625, %v2733
        %v2740 = vmul.f32 %v626, %v2733
        %v2741 = vmul.f32 %v627, %v2733
        %v2742 = vmul.f32 %v628, %v2733
        %v2743 = vmul.f32 %v629, %v2733
        %v2744 = vmul.f32 %v630, %v2733
        %v2745 = vmul.f32 %v631, %v2733
        %v2746 = vmul.f32 %v632, %v2733
        %v2747 = vmul.f32 %v633, %v2733
        %v2748 = vmul.f32 %v634, %v2733
        %v2749 = vmul.f32 %v635, %v2733
        %v2750 = vmul.f32 %v636, %v2733
        %v2751 = vmul.f32 %v637, %v2733
        %v2752 = vmul.f32 %v638, %v2733
        %v2753 = vmul.f32 %v639, %v2733
        %v2754 = vmul.f32 %v640, %v2733
        %v2755 = vmul.f32 %v641, %v2733
        %v2756 = vmul.f32 %v642, %v2733
        %v2757 = vmul.f32 %v643, %v2733
        %v2758 = vlaneseq
        %v2759 = vshrl.u32 %v2758, 7
        %v2760 = vsub.s32 6, %v2759
        %v2761 = vrot.slane %v653, %v2760
        %v2762 = vmul.f32 %v623, %v2761
        %v2763 = vmul.f32 %v624, %v2761
        %v2764 = vmul.f32 %v625, %v2761
        %v2765 = vmul.f32 %v626, %v2761
        %v2766 = vmul.f32 %v627, %v2761
        %v2767 = vmul.f32 %v628, %v2761
        %v2768 = vmul.f32 %v629, %v2761
        %v2769 = vmul.f32 %v630, %v2761
        %v2770 = vmul.f32 %v631, %v2761
        %v2771 = vmul.f32 %v632, %v2761
        %v2772 = vmul.f32 %v633, %v2761
        %v2773 = vmul.f32 %v634, %v2761
        %v2774 = vmul.f32 %v635, %v2761
        %v2775 = vmul.f32 %v636, %v2761
        %v2776 = vmul.f32 %v637, %v2761
        %v2777 = vmul.f32 %v638, %v2761
        %v2778 = vmul.f32 %v639, %v2761
        %v2779 = vmul.f32 %v640, %v2761
        %v2780 = vmul.f32 %v641, %v2761
        %v2781 = vmul.f32 %v642, %v2761
        %v2782 = vmul.f32 %v643, %v2761
        %v2783 = vmul.f32 %v644, %v2761
        %v2784 = vmul.f32 %v645, %v2761
        %v2785 = vmul.f32 %v646, %v2761
        %v2786 = vadd.f32 %v2594, %v2622
        %v2787 = vadd.f32 %v2595, %v2623
        %v2788 = vadd.f32 %v2596, %v2624
        %v2789 = vadd.f32 %v2597, %v2625
        %v2790 = vadd.f32 %v2598, %v2626
        %v2791 = vadd.f32 %v2599, %v2627
        %v2792 = vadd.f32 %v2600, %v2628
        %v2793 = vadd.f32 %v2601, %v2629
        %v2794 = vadd.f32 %v2602, %v2630
        %v2795 = vadd.f32 %v2603, %v2631
        %v2796 = vadd.f32 %v2604, %v2632
        %v2797 = vadd.f32 %v2605, %v2633
        %v2798 = vadd.f32 %v2606, %v2634
        %v2799 = vadd.f32 %v2607, %v2635
        %v2800 = vadd.f32 %v2608, %v2636
        %v2801 = vadd.f32 %v2609, %v2637
        %v2802 = vadd.f32 %v2610, %v2638
        %v2803 = vadd.f32 %v2611, %v2639
        %v2804 = vadd.f32 %v2612, %v2640
        %v2805 = vadd.f32 %v2613, %v2641
        %v2806 = vadd.f32 %v2614, %v2642
        %v2807 = vadd.f32 %v2615, %v2643
        %v2808 = vadd.f32 %v2616, %v2644
        %v2809 = vadd.f32 %v2617, %v2645
        %v2810 = vadd.f32 %v2650, %v2678
        %v2811 = vadd.f32 %v2651, %v2679
        %v2812 = vadd.f32 %v2652, %v2680
        %v2813 = vadd.f32 %v2653, %v2681
        %v2814 = vadd.f32 %v2654, %v2682
        %v2815 = vadd.f32 %v2655, %v2683
        %v2816 = vadd.f32 %v2656, %v2684
        %v2817 = vadd.f32 %v2657, %v2685
        %v2818 = vadd.f32 %v2658, %v2686
        %v2819 = vadd.f32 %v2659, %v2687
        %v2820 = vadd.f32 %v2660, %v2688
        %v2821 = vadd.f32 %v2661, %v2689
        %v2822 = vadd.f32 %v2662, %v2690
        %v2823 = vadd.f32 %v2663, %v2691
        %v2824 = vadd.f32 %v2664, %v2692
        %v2825 = vadd.f32 %v2665, %v2693
        %v2826 = vadd.f32 %v2666, %v2694
        %v2827 = vadd.f32 %v2667, %v2695
        %v2828 = vadd.f32 %v2668, %v2696
        %v2829 = vadd.f32 %v2669, %v2697
        %v2830 = vadd.f32 %v2670, %v2698
        %v2831 = vadd.f32 %v2671, %v2699
        %v2832 = vadd.f32 %v2672, %v2700
        %v2833 = vadd.f32 %v2673, %v2701
        %v2834 = vadd.f32 %v2706, %v2734
        %v2835 = vadd.f32 %v2707, %v2735
        %v2836 = vadd.f32 %v2708, %v2736
        %v2837 = vadd.f32 %v2709, %v2737
        %v2838 = vadd.f32 %v2710, %v2738
        %v2839 = vadd.f32 %v2711, %v2739
        %v2840 = vadd.f32 %v2712, %v2740
        %v2841 = vadd.f32 %v2713, %v2741
        %v2842 = vadd.f32 %v2714, %v2742
        %v2843 = vadd.f32 %v2715, %v2743
        %v2844 = vadd.f32 %v2716, %v2744
        %v2845 = vadd.f32 %v2717, %v2745
        %v2846 = vadd.f32 %v2718, %v2746
        %v2847 = vadd.f32 %v2719, %v2747
        %v2848 = vadd.f32 %v2720, %v2748
        %v2849 = vadd.f32 %v2721, %v2749
        %v2850 = vadd.f32 %v2722, %v2750
        %v2851 = vadd.f32 %v2723, %v2751
        %v2852 = vadd.f32 %v2724, %v2752
        %v2853 = vadd.f32 %v2725, %v2753
        %v2854 = vadd.f32 %v2726, %v2754
        %v2855 = vadd.f32 %v2727, %v2755
        %v2856 = vadd.f32 %v2728, %v2756
        %v2857 = vadd.f32 %v2729, %v2757
        %v2858 = vadd.f32 %v2786, %v2810
        %v2859 = vadd.f32 %v2787, %v2811
        %v2860 = vadd.f32 %v2788, %v2812
        %v2861 = vadd.f32 %v2789, %v2813
        %v2862 = vadd.f32 %v2790, %v2814
        %v2863 = vadd.f32 %v2791, %v2815
        %v2864 = vadd.f32 %v2792, %v2816
        %v2865 = vadd.f32 %v2793, %v2817
        %v2866 = vadd.f32 %v2794, %v2818
        %v2867 = vadd.f32 %v2795, %v2819
        %v2868 = vadd.f32 %v2796, %v2820
        %v2869 = vadd.f32 %v2797, %v2821
        %v2870 = vadd.f32 %v2798, %v2822
        %v2871 = vadd.f32 %v2799, %v2823
        %v2872 = vadd.f32 %v2800, %v2824
        %v2873 = vadd.f32 %v2801, %v2825
        %v2874 = vadd.f32 %v2802, %v2826
        %v2875 = vadd.f32 %v2803, %v2827
        %v2876 = vadd.f32 %v2804, %v2828
        %v2877 = vadd.f32 %v2805, %v2829
        %v2878 = vadd.f32 %v2806, %v2830
        %v2879 = vadd.f32 %v2807, %v2831
        %v2880 = vadd.f32 %v2808, %v2832
        %v2881 = vadd.f32 %v2809, %v2833
        %v2882 = vadd.f32 %v2834, %v2762
        %v2883 = vadd.f32 %v2835, %v2763
        %v2884 = vadd.f32 %v2836, %v2764
        %v2885 = vadd.f32 %v2837, %v2765
        %v2886 = vadd.f32 %v2838, %v2766
        %v2887 = vadd.f32 %v2839, %v2767
        %v2888 = vadd.f32 %v2840, %v2768
        %v2889 = vadd.f32 %v2841, %v2769
        %v2890 = vadd.f32 %v2842, %v2770
        %v2891 = vadd.f32 %v2843, %v2771
        %v2892 = vadd.f32 %v2844, %v2772
        %v2893 = vadd.f32 %v2845, %v2773
        %v2894 = vadd.f32 %v2846, %v2774
        %v2895 = vadd.f32 %v2847, %v2775
        %v2896 = vadd.f32 %v2848, %v2776
        %v2897 = vadd.f32 %v2849, %v2777
        %v2898 = vadd.f32 %v2850, %v2778
        %v2899 = vadd.f32 %v2851, %v2779
        %v2900 = vadd.f32 %v2852, %v2780
        %v2901 = vadd.f32 %v2853, %v2781
        %v2902 = vadd.f32 %v2854, %v2782
        %v2903 = vadd.f32 %v2855, %v2783
        %v2904 = vadd.f32 %v2856, %v2784
        %v2905 = vadd.f32 %v2857, %v2785
        %v2906 = vadd.f32 %v2858, %v2882
        %v2907 = vadd.f32 %v2859, %v2883
        %v2908 = vadd.f32 %v2860, %v2884
        %v2909 = vadd.f32 %v2861, %v2885
        %v2910 = vadd.f32 %v2862, %v2886
        %v2911 = vadd.f32 %v2863, %v2887
        %v2912 = vadd.f32 %v2864, %v2888
        %v2913 = vadd.f32 %v2865, %v2889
        %v2914 = vadd.f32 %v2866, %v2890
        %v2915 = vadd.f32 %v2867, %v2891
        %v2916 = vadd.f32 %v2868, %v2892
        %v2917 = vadd.f32 %v2869, %v2893
        %v2918 = vadd.f32 %v2870, %v2894
        %v2919 = vadd.f32 %v2871, %v2895
        %v2920 = vadd.f32 %v2872, %v2896
        %v2921 = vadd.f32 %v2873, %v2897
        %v2922 = vadd.f32 %v2874, %v2898
        %v2923 = vadd.f32 %v2875, %v2899
        %v2924 = vadd.f32 %v2876, %v2900
        %v2925 = vadd.f32 %v2877, %v2901
        %v2926 = vadd.f32 %v2878, %v2902
        %v2927 = vadd.f32 %v2879, %v2903
        %v2928 = vadd.f32 %v2880, %v2904
        %v2929 = vadd.f32 %v2881, %v2905
        %vm2954 = vcmask 1046528
        %v2955 = vrot.slane %v1206, 1
        %v2956 = vrot.slane %v1207, 1
        %v2957 = vsel %vm2954, %v2955, %v2956
        %v2958 = vrot.slane %v1208, 1
        %v2959 = vsel %vm2954, %v2956, %v2958
        %v2960 = vrot.slane %v1209, 1
        %v2961 = vrot.slane %v1210, 1
        %v2962 = vsel %vm2954, %v2960, %v2961
        %v2963 = vrot.slane %v1211, 1
        %v2964 = vsel %vm2954, %v2961, %v2963
        %v2965 = vrot.slane %v1212, 1
        %v2966 = vrot.slane %v1213, 1
        %v2967 = vsel %vm2954, %v2965, %v2966
        %v2968 = vrot.slane %v1214, 1
        %v2969 = vsel %vm2954, %v2966, %v2968
        %v2970 = vrot.slane %v1215, 1
        %v2971 = vrot.slane %v1216, 1
        %v2972 = vsel %vm2954, %v2970, %v2971
        %v2973 = vrot.slane %v1217, 1
        %v2974 = vsel %vm2954, %v2971, %v2973
        %v2975 = vrot.slane %v1218, 1
        %v2976 = vrot.slane %v1219, 1
        %v2977 = vsel %vm2954, %v2975, %v2976
        %v2978 = vrot.slane %v1220, 1
        %v2979 = vsel %vm2954, %v2976, %v2978
        %v2980 = vrot.slane %v1221, 1
        %v2981 = vrot.slane %v1222, 1
        %v2982 = vsel %vm2954, %v2980, %v2981
        %v2983 = vrot.slane %v1223, 1
        %v2984 = vsel %vm2954, %v2981, %v2983
        %v2985 = vrot.slane %v1224, 1
        %v2986 = vrot.slane %v1225, 1
        %v2987 = vsel %vm2954, %v2985, %v2986
        %v2988 = vrot.slane %v1226, 1
        %v2989 = vsel %vm2954, %v2986, %v2988
        %v2990 = vrot.slane %v1227, 1
        %v2991 = vrot.slane %v1228, 1
        %v2992 = vsel %vm2954, %v2990, %v2991
        %v2993 = vrot.slane %v1229, 1
        %v2994 = vsel %vm2954, %v2991, %v2993
        %v3011 = vadd.f32 %v874, %v2957
        %v3012 = vadd.f32 %v875, %v2959
        %v3013 = vadd.f32 %v876, %v2962
        %v3014 = vadd.f32 %v877, %v2964
        %v3015 = vadd.f32 %v878, %v2967
        %v3016 = vadd.f32 %v879, %v2969
        %v3017 = vadd.f32 %v880, %v2972
        %v3018 = vadd.f32 %v881, %v2974
        %v3019 = vadd.f32 %v882, %v2977
        %v3020 = vadd.f32 %v883, %v2979
        %v3021 = vadd.f32 %v884, %v2982
        %v3022 = vadd.f32 %v885, %v2984
        %v3023 = vadd.f32 %v886, %v2987
        %v3024 = vadd.f32 %v887, %v2989
        %v3025 = vadd.f32 %v888, %v2992
        %v3026 = vadd.f32 %v889, %v2994
        %v3051 = vrot.slane %v1886, 1
        %v3052 = vrot.slane %v1887, 1
        %v3053 = vsel %vm2954, %v3051, %v3052
        %v3054 = vrot.slane %v1888, 1
        %v3055 = vsel %vm2954, %v3052, %v3054
        %v3056 = vrot.slane %v1889, 1
        %v3057 = vrot.slane %v1890, 1
        %v3058 = vsel %vm2954, %v3056, %v3057
        %v3059 = vrot.slane %v1891, 1
        %v3060 = vsel %vm2954, %v3057, %v3059
        %v3061 = vrot.slane %v1892, 1
        %v3062 = vrot.slane %v1893, 1
        %v3063 = vsel %vm2954, %v3061, %v3062
        %v3064 = vrot.slane %v1894, 1
        %v3065 = vsel %vm2954, %v3062, %v3064
        %v3066 = vrot.slane %v1895, 1
        %v3067 = vrot.slane %v1896, 1
        %v3068 = vsel %vm2954, %v3066, %v3067
        %v3069 = vrot.slane %v1897, 1
        %v3070 = vsel %vm2954, %v3067, %v3069
        %v3071 = vrot.slane %v1898, 1
        %v3072 = vrot.slane %v1899, 1
        %v3073 = vsel %vm2954, %v3071, %v3072
        %v3074 = vrot.slane %v1900, 1
        %v3075 = vsel %vm2954, %v3072, %v3074
        %v3076 = vrot.slane %v1901, 1
        %v3077 = vrot.slane %v1902, 1
        %v3078 = vsel %vm2954, %v3076, %v3077
        %v3079 = vrot.slane %v1903, 1
        %v3080 = vsel %vm2954, %v3077, %v3079
        %v3081 = vrot.slane %v1904, 1
        %v3082 = vrot.slane %v1905, 1
        %v3083 = vsel %vm2954, %v3081, %v3082
        %v3084 = vrot.slane %v1906, 1
        %v3085 = vsel %vm2954, %v3082, %v3084
        %v3086 = vrot.slane %v1907, 1
        %v3087 = vrot.slane %v1908, 1
        %v3088 = vsel %vm2954, %v3086, %v3087
        %v3089 = vrot.slane %v1909, 1
        %v3090 = vsel %vm2954, %v3087, %v3089
        %v3115 = vadd.f32 %v1546, %v3053
        %v3116 = vadd.f32 %v1547, %v3055
        %v3117 = vadd.f32 %v1548, %v3054
        %v3118 = vadd.f32 %v1549, %v3058
        %v3119 = vadd.f32 %v1550, %v3060
        %v3120 = vadd.f32 %v1551, %v3059
        %v3121 = vadd.f32 %v1552, %v3063
        %v3122 = vadd.f32 %v1553, %v3065
        %v3123 = vadd.f32 %v1554, %v3064
        %v3124 = vadd.f32 %v1555, %v3068
        %v3125 = vadd.f32 %v1556, %v3070
        %v3126 = vadd.f32 %v1557, %v3069
        %v3127 = vadd.f32 %v1558, %v3073
        %v3128 = vadd.f32 %v1559, %v3075
        %v3129 = vadd.f32 %v1560, %v3074
        %v3130 = vadd.f32 %v1561, %v3078
        %v3131 = vadd.f32 %v1562, %v3080
        %v3132 = vadd.f32 %v1563, %v3079
        %v3133 = vadd.f32 %v1564, %v3083
        %v3134 = vadd.f32 %v1565, %v3085
        %v3135 = vadd.f32 %v1566, %v3084
        %v3136 = vadd.f32 %v1567, %v3088
        %v3137 = vadd.f32 %v1568, %v3090
        %v3138 = vadd.f32 %v1569, %v3089
        %v3163 = vrot.slane %v2566, 1
        %v3164 = vrot.slane %v2567, 1
        %v3165 = vsel %vm2954, %v3163, %v3164
        %v3166 = vrot.slane %v2568, 1
        %v3167 = vsel %vm2954, %v3164, %v3166
        %v3168 = vrot.slane %v2569, 1
        %v3169 = vrot.slane %v2570, 1
        %v3170 = vsel %vm2954, %v3168, %v3169
        %v3171 = vrot.slane %v2571, 1
        %v3172 = vsel %vm2954, %v3169, %v3171
        %v3173 = vrot.slane %v2572, 1
        %v3174 = vrot.slane %v2573, 1
        %v3175 = vsel %vm2954, %v3173, %v3174
        %v3176 = vrot.slane %v2574, 1
        %v3177 = vsel %vm2954, %v3174, %v3176
        %v3178 = vrot.slane %v2575, 1
        %v3179 = vrot.slane %v2576, 1
        %v3180 = vsel %vm2954, %v3178, %v3179
        %v3181 = vrot.slane %v2577, 1
        %v3182 = vsel %vm2954, %v3179, %v3181
        %v3183 = vrot.slane %v2578, 1
        %v3184 = vrot.slane %v2579, 1
        %v3185 = vsel %vm2954, %v3183, %v3184
        %v3186 = vrot.slane %v2580, 1
        %v3187 = vsel %vm2954, %v3184, %v3186
        %v3188 = vrot.slane %v2581, 1
        %v3189 = vrot.slane %v2582, 1
        %v3190 = vsel %vm2954, %v3188, %v3189
        %v3191 = vrot.slane %v2583, 1
        %v3192 = vsel %vm2954, %v3189, %v3191
        %v3193 = vrot.slane %v2584, 1
        %v3194 = vrot.slane %v2585, 1
        %v3195 = vsel %vm2954, %v3193, %v3194
        %v3196 = vrot.slane %v2586, 1
        %v3197 = vsel %vm2954, %v3194, %v3196
        %v3198 = vrot.slane %v2587, 1
        %v3199 = vrot.slane %v2588, 1
        %v3200 = vsel %vm2954, %v3198, %v3199
        %v3201 = vrot.slane %v2589, 1
        %v3202 = vsel %vm2954, %v3199, %v3201
        %v3227 = vadd.f32 %v2226, %v3165
        %v3228 = vadd.f32 %v2227, %v3167
        %v3229 = vadd.f32 %v2228, %v3166
        %v3230 = vadd.f32 %v2229, %v3170
        %v3231 = vadd.f32 %v2230, %v3172
        %v3232 = vadd.f32 %v2231, %v3171
        %v3233 = vadd.f32 %v2232, %v3175
        %v3234 = vadd.f32 %v2233, %v3177
        %v3235 = vadd.f32 %v2234, %v3176
        %v3236 = vadd.f32 %v2235, %v3180
        %v3237 = vadd.f32 %v2236, %v3182
        %v3238 = vadd.f32 %v2237, %v3181
        %v3239 = vadd.f32 %v2238, %v3185
        %v3240 = vadd.f32 %v2239, %v3187
        %v3241 = vadd.f32 %v2240, %v3186
        %v3242 = vadd.f32 %v2241, %v3190
        %v3243 = vadd.f32 %v2242, %v3192
        %v3244 = vadd.f32 %v2243, %v3191
        %v3245 = vadd.f32 %v2244, %v3195
        %v3246 = vadd.f32 %v2245, %v3197
        %v3247 = vadd.f32 %v2246, %v3196
        %v3248 = vadd.f32 %v2247, %v3200
        %v3249 = vadd.f32 %v2248, %v3202
        %v3250 = vadd.f32 %v2249, %v3201
        %vm3275 = vcmask 1045504
        %v3276 = vrot.slane %v3115, 2
        %v3277 = vrot.slane %v3116, 2
        %v3278 = vsel %vm3275, %v3276, %v3277
        %v3279 = vrot.slane %v3117, 2
        %v3280 = vsel %vm3275, %v3277, %v3279
        %v3281 = vrot.slane %v3118, 2
        %v3282 = vrot.slane %v3119, 2
        %v3283 = vsel %vm3275, %v3281, %v3282
        %v3284 = vrot.slane %v3120, 2
        %v3285 = vsel %vm3275, %v3282, %v3284
        %v3286 = vrot.slane %v3121, 2
        %v3287 = vrot.slane %v3122, 2
        %v3288 = vsel %vm3275, %v3286, %v3287
        %v3289 = vrot.slane %v3123, 2
        %v3290 = vsel %vm3275, %v3287, %v3289
        %v3291 = vrot.slane %v3124, 2
        %v3292 = vrot.slane %v3125, 2
        %v3293 = vsel %vm3275, %v3291, %v3292
        %v3294 = vrot.slane %v3126, 2
        %v3295 = vsel %vm3275, %v3292, %v3294
        %v3296 = vrot.slane %v3127, 2
        %v3297 = vrot.slane %v3128, 2
        %v3298 = vsel %vm3275, %v3296, %v3297
        %v3299 = vrot.slane %v3129, 2
        %v3300 = vsel %vm3275, %v3297, %v3299
        %v3301 = vrot.slane %v3130, 2
        %v3302 = vrot.slane %v3131, 2
        %v3303 = vsel %vm3275, %v3301, %v3302
        %v3304 = vrot.slane %v3132, 2
        %v3305 = vsel %vm3275, %v3302, %v3304
        %v3306 = vrot.slane %v3133, 2
        %v3307 = vrot.slane %v3134, 2
        %v3308 = vsel %vm3275, %v3306, %v3307
        %v3309 = vrot.slane %v3135, 2
        %v3310 = vsel %vm3275, %v3307, %v3309
        %v3311 = vrot.slane %v3136, 2
        %v3312 = vrot.slane %v3137, 2
        %v3313 = vsel %vm3275, %v3311, %v3312
        %v3314 = vrot.slane %v3138, 2
        %v3315 = vsel %vm3275, %v3312, %v3314
        %v3332 = vadd.f32 %v3011, %v3278
        %v3333 = vadd.f32 %v3012, %v3280
        %v3334 = vadd.f32 %v3013, %v3283
        %v3335 = vadd.f32 %v3014, %v3285
        %v3336 = vadd.f32 %v3015, %v3288
        %v3337 = vadd.f32 %v3016, %v3290
        %v3338 = vadd.f32 %v3017, %v3293
        %v3339 = vadd.f32 %v3018, %v3295
        %v3340 = vadd.f32 %v3019, %v3298
        %v3341 = vadd.f32 %v3020, %v3300
        %v3342 = vadd.f32 %v3021, %v3303
        %v3343 = vadd.f32 %v3022, %v3305
        %v3344 = vadd.f32 %v3023, %v3308
        %v3345 = vadd.f32 %v3024, %v3310
        %v3346 = vadd.f32 %v3025, %v3313
        %v3347 = vadd.f32 %v3026, %v3315
        %v3372 = vrot.slane %v2906, 2
        %v3373 = vrot.slane %v2907, 2
        %v3374 = vsel %vm3275, %v3372, %v3373
        %v3375 = vrot.slane %v2908, 2
        %v3376 = vsel %vm3275, %v3373, %v3375
        %v3377 = vrot.slane %v2909, 2
        %v3378 = vrot.slane %v2910, 2
        %v3379 = vsel %vm3275, %v3377, %v3378
        %v3380 = vrot.slane %v2911, 2
        %v3381 = vsel %vm3275, %v3378, %v3380
        %v3382 = vrot.slane %v2912, 2
        %v3383 = vrot.slane %v2913, 2
        %v3384 = vsel %vm3275, %v3382, %v3383
        %v3385 = vrot.slane %v2914, 2
        %v3386 = vsel %vm3275, %v3383, %v3385
        %v3387 = vrot.slane %v2915, 2
        %v3388 = vrot.slane %v2916, 2
        %v3389 = vsel %vm3275, %v3387, %v3388
        %v3390 = vrot.slane %v2917, 2
        %v3391 = vsel %vm3275, %v3388, %v3390
        %v3392 = vrot.slane %v2918, 2
        %v3393 = vrot.slane %v2919, 2
        %v3394 = vsel %vm3275, %v3392, %v3393
        %v3395 = vrot.slane %v2920, 2
        %v3396 = vsel %vm3275, %v3393, %v3395
        %v3397 = vrot.slane %v2921, 2
        %v3398 = vrot.slane %v2922, 2
        %v3399 = vsel %vm3275, %v3397, %v3398
        %v3400 = vrot.slane %v2923, 2
        %v3401 = vsel %vm3275, %v3398, %v3400
        %v3402 = vrot.slane %v2924, 2
        %v3403 = vrot.slane %v2925, 2
        %v3404 = vsel %vm3275, %v3402, %v3403
        %v3405 = vrot.slane %v2926, 2
        %v3406 = vsel %vm3275, %v3403, %v3405
        %v3407 = vrot.slane %v2927, 2
        %v3408 = vrot.slane %v2928, 2
        %v3409 = vsel %vm3275, %v3407, %v3408
        %v3410 = vrot.slane %v2929, 2
        %v3411 = vsel %vm3275, %v3408, %v3410
        %v3436 = vadd.f32 %v3227, %v3374
        %v3437 = vadd.f32 %v3228, %v3376
        %v3438 = vadd.f32 %v3229, %v3375
        %v3439 = vadd.f32 %v3230, %v3379
        %v3440 = vadd.f32 %v3231, %v3381
        %v3441 = vadd.f32 %v3232, %v3380
        %v3442 = vadd.f32 %v3233, %v3384
        %v3443 = vadd.f32 %v3234, %v3386
        %v3444 = vadd.f32 %v3235, %v3385
        %v3445 = vadd.f32 %v3236, %v3389
        %v3446 = vadd.f32 %v3237, %v3391
        %v3447 = vadd.f32 %v3238, %v3390
        %v3448 = vadd.f32 %v3239, %v3394
        %v3449 = vadd.f32 %v3240, %v3396
        %v3450 = vadd.f32 %v3241, %v3395
        %v3451 = vadd.f32 %v3242, %v3399
        %v3452 = vadd.f32 %v3243, %v3401
        %v3453 = vadd.f32 %v3244, %v3400
        %v3454 = vadd.f32 %v3245, %v3404
        %v3455 = vadd.f32 %v3246, %v3406
        %v3456 = vadd.f32 %v3247, %v3405
        %v3457 = vadd.f32 %v3248, %v3409
        %v3458 = vadd.f32 %v3249, %v3411
        %v3459 = vadd.f32 %v3250, %v3410
        %vm3484 = vcmask 1043456
        %v3485 = vrot.slane %v3436, 4
        %v3486 = vrot.slane %v3437, 4
        %v3487 = vsel %vm3484, %v3485, %v3486
        %v3488 = vrot.slane %v3438, 4
        %v3489 = vsel %vm3484, %v3486, %v3488
        %v3490 = vrot.slane %v3439, 4
        %v3491 = vrot.slane %v3440, 4
        %v3492 = vsel %vm3484, %v3490, %v3491
        %v3493 = vrot.slane %v3441, 4
        %v3494 = vsel %vm3484, %v3491, %v3493
        %v3495 = vrot.slane %v3442, 4
        %v3496 = vrot.slane %v3443, 4
        %v3497 = vsel %vm3484, %v3495, %v3496
        %v3498 = vrot.slane %v3444, 4
        %v3499 = vsel %vm3484, %v3496, %v3498
        %v3500 = vrot.slane %v3445, 4
        %v3501 = vrot.slane %v3446, 4
        %v3502 = vsel %vm3484, %v3500, %v3501
        %v3503 = vrot.slane %v3447, 4
        %v3504 = vsel %vm3484, %v3501, %v3503
        %v3505 = vrot.slane %v3448, 4
        %v3506 = vrot.slane %v3449, 4
        %v3507 = vsel %vm3484, %v3505, %v3506
        %v3508 = vrot.slane %v3450, 4
        %v3509 = vsel %vm3484, %v3506, %v3508
        %v3510 = vrot.slane %v3451, 4
        %v3511 = vrot.slane %v3452, 4
        %v3512 = vsel %vm3484, %v3510, %v3511
        %v3513 = vrot.slane %v3453, 4
        %v3514 = vsel %vm3484, %v3511, %v3513
        %v3515 = vrot.slane %v3454, 4
        %v3516 = vrot.slane %v3455, 4
        %v3517 = vsel %vm3484, %v3515, %v3516
        %v3518 = vrot.slane %v3456, 4
        %v3519 = vsel %vm3484, %v3516, %v3518
        %v3520 = vrot.slane %v3457, 4
        %v3521 = vrot.slane %v3458, 4
        %v3522 = vsel %vm3484, %v3520, %v3521
        %v3523 = vrot.slane %v3459, 4
        %v3524 = vsel %vm3484, %v3521, %v3523
        %v3541 = vadd.f32 %v3332, %v3487
        %v3542 = vadd.f32 %v3333, %v3489
        %v3543 = vadd.f32 %v3334, %v3492
        %v3544 = vadd.f32 %v3335, %v3494
        %v3545 = vadd.f32 %v3336, %v3497
        %v3546 = vadd.f32 %v3337, %v3499
        %v3547 = vadd.f32 %v3338, %v3502
        %v3548 = vadd.f32 %v3339, %v3504
        %v3549 = vadd.f32 %v3340, %v3507
        %v3550 = vadd.f32 %v3341, %v3509
        %v3551 = vadd.f32 %v3342, %v3512
        %v3552 = vadd.f32 %v3343, %v3514
        %v3553 = vadd.f32 %v3344, %v3517
        %v3554 = vadd.f32 %v3345, %v3519
        %v3555 = vadd.f32 %v3346, %v3522
        %v3556 = vadd.f32 %v3347, %v3524
        %v3557 = vld [vmem:[%s3] sm:$0x1]
        %v3559 = vlaneseq
        %v3560 = vshrl.u32 %v3559, 7
        %v3561 = vsub.s32 0, %v3560
        %v3562 = vrot.slane %v3557, %v3561
        %v3564 = vadd.f32 %v3541, %v3562
        %v3565 = vadd.f32 %v3542, %v3562
        %v3566 = vadd.f32 %v3543, %v3562
        %v3567 = vadd.f32 %v3544, %v3562
        %v3568 = vadd.f32 %v3545, %v3562
        %v3569 = vadd.f32 %v3546, %v3562
        %v3570 = vadd.f32 %v3547, %v3562
        %v3571 = vadd.f32 %v3548, %v3562
        %v3572 = vadd.f32 %v3549, %v3562
        %v3573 = vadd.f32 %v3550, %v3562
        %v3574 = vadd.f32 %v3551, %v3562
        %v3575 = vadd.f32 %v3552, %v3562
        %v3576 = vadd.f32 %v3553, %v3562
        %v3577 = vadd.f32 %v3554, %v3562
        %v3578 = vadd.f32 %v3555, %v3562
        %v3579 = vadd.f32 %v3556, %v3562
        %3580 = vadd.xlane.f32.xlu0 %v3564
        %v3581 = vpop.xlane.xlu0 %3580
        %3582 = vadd.xlane.f32.xlu0 %v3565
        %v3583 = vpop.xlane.xlu0 %3582
        %3584 = vadd.xlane.f32.xlu0 %v3566
        %v3585 = vpop.xlane.xlu0 %3584
        %3586 = vadd.xlane.f32.xlu0 %v3567
        %v3587 = vpop.xlane.xlu0 %3586
        %3588 = vadd.xlane.f32.xlu0 %v3568
        %v3589 = vpop.xlane.xlu0 %3588
        %3590 = vadd.xlane.f32.xlu0 %v3569
        %v3591 = vpop.xlane.xlu0 %3590
        %3592 = vadd.xlane.f32.xlu0 %v3570
        %v3593 = vpop.xlane.xlu0 %3592
        %3594 = vadd.xlane.f32.xlu0 %v3571
        %v3595 = vpop.xlane.xlu0 %3594
        %3596 = vadd.xlane.f32.xlu0 %v3572
        %v3597 = vpop.xlane.xlu0 %3596
        %3598 = vadd.xlane.f32.xlu0 %v3573
        %v3599 = vpop.xlane.xlu0 %3598
        %3600 = vadd.xlane.f32.xlu0 %v3574
        %v3601 = vpop.xlane.xlu0 %3600
        %3602 = vadd.xlane.f32.xlu0 %v3575
        %v3603 = vpop.xlane.xlu0 %3602
        %3604 = vadd.xlane.f32.xlu0 %v3576
        %v3605 = vpop.xlane.xlu0 %3604
        %3606 = vadd.xlane.f32.xlu0 %v3577
        %v3607 = vpop.xlane.xlu0 %3606
        %3608 = vadd.xlane.f32.xlu0 %v3578
        %v3609 = vpop.xlane.xlu0 %3608
        %3610 = vadd.xlane.f32.xlu0 %v3579
        %v3611 = vpop.xlane.xlu0 %3610
        %v3612 = vmul.f32 %v3581, 0.125
        %v3613 = vmul.f32 %v3583, 0.125
        %v3614 = vmul.f32 %v3585, 0.125
        %v3615 = vmul.f32 %v3587, 0.125
        %v3616 = vmul.f32 %v3589, 0.125
        %v3617 = vmul.f32 %v3591, 0.125
        %v3618 = vmul.f32 %v3593, 0.125
        %v3619 = vmul.f32 %v3595, 0.125
        %v3620 = vmul.f32 %v3597, 0.125
        %v3621 = vmul.f32 %v3599, 0.125
        %v3622 = vmul.f32 %v3601, 0.125
        %v3623 = vmul.f32 %v3603, 0.125
        %v3624 = vmul.f32 %v3605, 0.125
        %v3625 = vmul.f32 %v3607, 0.125
        %v3626 = vmul.f32 %v3609, 0.125
        %v3627 = vmul.f32 %v3611, 0.125
        %v3628 = vsub.f32 %v3564, %v3612
        %v3629 = vsub.f32 %v3565, %v3613
        %v3630 = vsub.f32 %v3566, %v3614
        %v3631 = vsub.f32 %v3567, %v3615
        %v3632 = vsub.f32 %v3568, %v3616
        %v3633 = vsub.f32 %v3569, %v3617
        %v3634 = vsub.f32 %v3570, %v3618
        %v3635 = vsub.f32 %v3571, %v3619
        %v3636 = vsub.f32 %v3572, %v3620
        %v3637 = vsub.f32 %v3573, %v3621
        %v3638 = vsub.f32 %v3574, %v3622
        %v3639 = vsub.f32 %v3575, %v3623
        %v3640 = vsub.f32 %v3576, %v3624
        %v3641 = vsub.f32 %v3577, %v3625
        %v3642 = vsub.f32 %v3578, %v3626
        %v3643 = vsub.f32 %v3579, %v3627
        %v3644 = vlaneseq
        %v3645 = vand.u32 %v3644, 127
        %vm3646 = vcmp.lt.s32.totalorder %v3645, 8
        %v3647 = vsel %vm3646, 1, 0
        %vm3648 = vcmp.eq.s32.totalorder %v3647, 1
        %v3649 = vsel %vm3648, %v3628, 0.0
        %v3650 = vsel %vm3648, %v3629, 0.0
        %v3651 = vsel %vm3648, %v3630, 0.0
        %v3652 = vsel %vm3648, %v3631, 0.0
        %v3653 = vsel %vm3648, %v3632, 0.0
        %v3654 = vsel %vm3648, %v3633, 0.0
        %v3655 = vsel %vm3648, %v3634, 0.0
        %v3656 = vsel %vm3648, %v3635, 0.0
        %v3657 = vsel %vm3648, %v3636, 0.0
        %v3658 = vsel %vm3648, %v3637, 0.0
        %v3659 = vsel %vm3648, %v3638, 0.0
        %v3660 = vsel %vm3648, %v3639, 0.0
        %v3661 = vsel %vm3648, %v3640, 0.0
        %v3662 = vsel %vm3648, %v3641, 0.0
        %v3663 = vsel %vm3648, %v3642, 0.0
        %v3664 = vsel %vm3648, %v3643, 0.0
        %v3665 = vmul.f32 %v3649, %v3649
        %v3666 = vmul.f32 %v3650, %v3650
        %v3667 = vmul.f32 %v3651, %v3651
        %v3668 = vmul.f32 %v3652, %v3652
        %v3669 = vmul.f32 %v3653, %v3653
        %v3670 = vmul.f32 %v3654, %v3654
        %v3671 = vmul.f32 %v3655, %v3655
        %v3672 = vmul.f32 %v3656, %v3656
        %v3673 = vmul.f32 %v3657, %v3657
        %v3674 = vmul.f32 %v3658, %v3658
        %v3675 = vmul.f32 %v3659, %v3659
        %v3676 = vmul.f32 %v3660, %v3660
        %v3677 = vmul.f32 %v3661, %v3661
        %v3678 = vmul.f32 %v3662, %v3662
        %v3679 = vmul.f32 %v3663, %v3663
        %v3680 = vmul.f32 %v3664, %v3664
        %3681 = vadd.xlane.f32.xlu0 %v3665
        %v3682 = vpop.xlane.xlu0 %3681
        %3683 = vadd.xlane.f32.xlu0 %v3666
        %v3684 = vpop.xlane.xlu0 %3683
        %3685 = vadd.xlane.f32.xlu0 %v3667
        %v3686 = vpop.xlane.xlu0 %3685
        %3687 = vadd.xlane.f32.xlu0 %v3668
        %v3688 = vpop.xlane.xlu0 %3687
        %3689 = vadd.xlane.f32.xlu0 %v3669
        %v3690 = vpop.xlane.xlu0 %3689
        %3691 = vadd.xlane.f32.xlu0 %v3670
        %v3692 = vpop.xlane.xlu0 %3691
        %3693 = vadd.xlane.f32.xlu0 %v3671
        %v3694 = vpop.xlane.xlu0 %3693
        %3695 = vadd.xlane.f32.xlu0 %v3672
        %v3696 = vpop.xlane.xlu0 %3695
        %3697 = vadd.xlane.f32.xlu0 %v3673
        %v3698 = vpop.xlane.xlu0 %3697
        %3699 = vadd.xlane.f32.xlu0 %v3674
        %v3700 = vpop.xlane.xlu0 %3699
        %3701 = vadd.xlane.f32.xlu0 %v3675
        %v3702 = vpop.xlane.xlu0 %3701
        %3703 = vadd.xlane.f32.xlu0 %v3676
        %v3704 = vpop.xlane.xlu0 %3703
        %3705 = vadd.xlane.f32.xlu0 %v3677
        %v3706 = vpop.xlane.xlu0 %3705
        %3707 = vadd.xlane.f32.xlu0 %v3678
        %v3708 = vpop.xlane.xlu0 %3707
        %3709 = vadd.xlane.f32.xlu0 %v3679
        %v3710 = vpop.xlane.xlu0 %3709
        %3711 = vadd.xlane.f32.xlu0 %v3680
        %v3712 = vpop.xlane.xlu0 %3711
        %v3713 = vmul.f32 %v3682, 0.125
        %v3714 = vmul.f32 %v3684, 0.125
        %v3715 = vmul.f32 %v3686, 0.125
        %v3716 = vmul.f32 %v3688, 0.125
        %v3717 = vmul.f32 %v3690, 0.125
        %v3718 = vmul.f32 %v3692, 0.125
        %v3719 = vmul.f32 %v3694, 0.125
        %v3720 = vmul.f32 %v3696, 0.125
        %v3721 = vmul.f32 %v3698, 0.125
        %v3722 = vmul.f32 %v3700, 0.125
        %v3723 = vmul.f32 %v3702, 0.125
        %v3724 = vmul.f32 %v3704, 0.125
        %v3725 = vmul.f32 %v3706, 0.125
        %v3726 = vmul.f32 %v3708, 0.125
        %v3727 = vmul.f32 %v3710, 0.125
        %v3728 = vmul.f32 %v3712, 0.125
        %v3729 = vadd.f32 %v3713, 1e-06
        %v3730 = vadd.f32 %v3714, 1e-06
        %v3731 = vadd.f32 %v3715, 1e-06
        %v3732 = vadd.f32 %v3716, 1e-06
        %v3733 = vadd.f32 %v3717, 1e-06
        %v3734 = vadd.f32 %v3718, 1e-06
        %v3735 = vadd.f32 %v3719, 1e-06
        %v3736 = vadd.f32 %v3720, 1e-06
        %v3737 = vadd.f32 %v3721, 1e-06
        %v3738 = vadd.f32 %v3722, 1e-06
        %v3739 = vadd.f32 %v3723, 1e-06
        %v3740 = vadd.f32 %v3724, 1e-06
        %v3741 = vadd.f32 %v3725, 1e-06
        %v3742 = vadd.f32 %v3726, 1e-06
        %v3743 = vadd.f32 %v3727, 1e-06
        %v3744 = vadd.f32 %v3728, 1e-06
        %v3745 = vrsqrt.pop %v3729
        %v3746 = vrsqrt.pop %v3730
        %v3747 = vrsqrt.pop %v3731
        %v3748 = vrsqrt.pop %v3732
        %v3749 = vrsqrt.pop %v3733
        %v3750 = vrsqrt.pop %v3734
        %v3751 = vrsqrt.pop %v3735
        %v3752 = vrsqrt.pop %v3736
        %v3753 = vrsqrt.pop %v3737
        %v3754 = vrsqrt.pop %v3738
        %v3755 = vrsqrt.pop %v3739
        %v3756 = vrsqrt.pop %v3740
        %v3757 = vrsqrt.pop %v3741
        %v3758 = vrsqrt.pop %v3742
        %v3759 = vrsqrt.pop %v3743
        %v3760 = vrsqrt.pop %v3744
        %v3761 = vmul.f32 %v3649, %v3745
        %v3762 = vmul.f32 %v3650, %v3746
        %v3763 = vmul.f32 %v3651, %v3747
        %v3764 = vmul.f32 %v3652, %v3748
        %v3765 = vmul.f32 %v3653, %v3749
        %v3766 = vmul.f32 %v3654, %v3750
        %v3767 = vmul.f32 %v3655, %v3751
        %v3768 = vmul.f32 %v3656, %v3752
        %v3769 = vmul.f32 %v3657, %v3753
        %v3770 = vmul.f32 %v3658, %v3754
        %v3771 = vmul.f32 %v3659, %v3755
        %v3772 = vmul.f32 %v3660, %v3756
        %v3773 = vmul.f32 %v3661, %v3757
        %v3774 = vmul.f32 %v3662, %v3758
        %v3775 = vmul.f32 %v3663, %v3759
        %v3776 = vmul.f32 %v3664, %v3760
        %v3777 = vld [vmem:[%s4] sm:$0x1]
        %v3779 = vlaneseq
        %v3780 = vshrl.u32 %v3779, 7
        %v3781 = vsub.s32 0, %v3780
        %v3782 = vrot.slane %v3777, %v3781
        %v3784 = vmul.f32 %v3761, %v3782
        %v3785 = vmul.f32 %v3762, %v3782
        %v3786 = vmul.f32 %v3763, %v3782
        %v3787 = vmul.f32 %v3764, %v3782
        %v3788 = vmul.f32 %v3765, %v3782
        %v3789 = vmul.f32 %v3766, %v3782
        %v3790 = vmul.f32 %v3767, %v3782
        %v3791 = vmul.f32 %v3768, %v3782
        %v3792 = vmul.f32 %v3769, %v3782
        %v3793 = vmul.f32 %v3770, %v3782
        %v3794 = vmul.f32 %v3771, %v3782
        %v3795 = vmul.f32 %v3772, %v3782
        %v3796 = vmul.f32 %v3773, %v3782
        %v3797 = vmul.f32 %v3774, %v3782
        %v3798 = vmul.f32 %v3775, %v3782
        %v3799 = vmul.f32 %v3776, %v3782
        %v3800 = vld [vmem:[%s5] sm:$0x1]
        %v3802 = vlaneseq
        %v3803 = vshrl.u32 %v3802, 7
        %v3804 = vsub.s32 0, %v3803
        %v3805 = vrot.slane %v3800, %v3804
        %v3807 = vadd.f32 %v3784, %v3805
        %v3808 = vadd.f32 %v3785, %v3805
        %v3809 = vadd.f32 %v3786, %v3805
        %v3810 = vadd.f32 %v3787, %v3805
        %v3811 = vadd.f32 %v3788, %v3805
        %v3812 = vadd.f32 %v3789, %v3805
        %v3813 = vadd.f32 %v3790, %v3805
        %v3814 = vadd.f32 %v3791, %v3805
        %v3815 = vadd.f32 %v3792, %v3805
        %v3816 = vadd.f32 %v3793, %v3805
        %v3817 = vadd.f32 %v3794, %v3805
        %v3818 = vadd.f32 %v3795, %v3805
        %v3819 = vadd.f32 %v3796, %v3805
        %v3820 = vadd.f32 %v3797, %v3805
        %v3821 = vadd.f32 %v3798, %v3805
        %v3822 = vadd.f32 %v3799, %v3805
        %v3823 = vpack.c.bf16 %v3808, %v3807
        %v3824 = vpack.c.bf16 %v3810, %v3809
        %v3825 = vpack.c.bf16 %v3812, %v3811
        %v3826 = vpack.c.bf16 %v3814, %v3813
        %v3827 = vpack.c.bf16 %v3816, %v3815
        %v3828 = vpack.c.bf16 %v3818, %v3817
        %v3829 = vpack.c.bf16 %v3820, %v3819
        %v3830 = vpack.c.bf16 %v3822, %v3821
        %v3831 = vld [vmem:[#allocation9] sm:$0xf]
        %v3832 = vld [vmem:[#allocation9 + $0x4] sm:$0xf]
        %v3833 = vld [vmem:[#allocation9 + $0x8] sm:$0xf]
        %v3834 = vld [vmem:[#allocation9 + $0xc] sm:$0xf]
        %v3835 = vld [vmem:[#allocation9 + $0x10] sm:$0xf]
        %v3836 = vld [vmem:[#allocation9 + $0x14] sm:$0xf]
        %v3837 = vld [vmem:[#allocation9 + $0x18] sm:$0xf]
        %v3838 = vld [vmem:[#allocation9 + $0x1c] sm:$0xf]
        %v3839 = vld [vmem:[#allocation9 + $0x20] sm:$0xf]
        %v3840 = vld [vmem:[#allocation9 + $0x24] sm:$0xf]
        %v3841 = vld [vmem:[#allocation9 + $0x28] sm:$0xf]
        %v3842 = vld [vmem:[#allocation9 + $0x2c] sm:$0xf]
        %v3843 = vld [vmem:[#allocation9 + $0x30] sm:$0xf]
        %v3844 = vld [vmem:[#allocation9 + $0x34] sm:$0xf]
        %v3845 = vld [vmem:[#allocation9 + $0x38] sm:$0xf]
        %v3846 = vld [vmem:[#allocation9 + $0x3c] sm:$0xf]
        %v3847 = vld [vmem:[%s7] sm:$0x1]
        %v3849 = vlaneseq
        %v3850 = vshrl.u32 %v3849, 7
        %v3851 = vsub.s32 0, %v3850
        %v3852 = vrot.slane %v3847, %v3851
        %v3870 = vunpack.c.l.b16 %v3831
        %v3871 = vunpack.c.l.b16 %v3832
        %v3872 = vunpack.c.l.b16 %v3833
        %v3873 = vunpack.c.l.b16 %v3834
        %v3874 = vunpack.c.l.b16 %v3835
        %v3875 = vunpack.c.l.b16 %v3836
        %v3876 = vunpack.c.l.b16 %v3837
        %v3877 = vunpack.c.l.b16 %v3838
        %v3878 = vunpack.c.l.b16 %v3839
        %v3879 = vunpack.c.l.b16 %v3840
        %v3880 = vunpack.c.l.b16 %v3841
        %v3881 = vunpack.c.l.b16 %v3842
        %v3882 = vunpack.c.l.b16 %v3843
        %v3883 = vunpack.c.l.b16 %v3844
        %v3884 = vunpack.c.l.b16 %v3845
        %v3885 = vunpack.c.l.b16 %v3846
        %v3886 = vpack.c.b16 %v3871, %v3870
        %v3887 = vpack.c.b16 %v3873, %v3872
        %v3888 = vpack.c.b16 %v3875, %v3874
        %v3889 = vpack.c.b16 %v3877, %v3876
        %v3890 = vpack.c.b16 %v3879, %v3878
        %v3891 = vpack.c.b16 %v3881, %v3880
        %v3892 = vpack.c.b16 %v3883, %v3882
        %v3893 = vpack.c.b16 %v3885, %v3884
        %3902 = vmatprep.subr.bf16.mxu0 0
        %3903 = vmatpush1.bf16.msra.mxu0 %v3886
        %3904 = vmatprep.subr.bf16.mxu0 0
        %3905 = vmatpush1.bf16.msra.mxu0 %v3887
        %3906 = vmatprep.subr.bf16.mxu0 0
        %3907 = vmatpush1.bf16.msra.mxu0 %v3888
        %3908 = vmatprep.subr.bf16.mxu0 0
        %3909 = vmatpush1.bf16.msra.mxu0 %v3889
        %3910 = vmatprep.subr.bf16.mxu0 0
        %3911 = vmatpush1.bf16.msra.mxu0 %v3890
        %3912 = vmatprep.subr.bf16.mxu0 0
        %3913 = vmatpush1.bf16.msra.mxu0 %v3891
        %3914 = vmatprep.subr.bf16.mxu0 0
        %3915 = vmatpush1.bf16.msra.mxu0 %v3892
        %3916 = vmatprep.subr.bf16.mxu0 0
        %3917 = vmatpush1.bf16.msra.mxu0 %v3893
        %3918 = vmatprep.subr.bf16.mxu0 0
        %3919 = vmatpush1.bf16.msra.mxu0 0
        %3920 = vmatprep.subr.bf16.mxu0 0
        %3921 = vmatpush1.bf16.msra.mxu0 0
        %3922 = vmatprep.subr.bf16.mxu0 0
        %3923 = vmatpush1.bf16.msra.mxu0 0
        %3924 = vmatprep.subr.bf16.mxu0 0
        %3925 = vmatpush1.bf16.msra.mxu0 0
        %3926 = vmatprep.subr.bf16.mxu0 0
        %3927 = vmatpush1.bf16.msra.mxu0 0
        %3928 = vmatprep.subr.bf16.mxu0 0
        %3929 = vmatpush1.bf16.msra.mxu0 0
        %3930 = vmatprep.subr.bf16.mxu0 0
        %3931 = vmatpush1.bf16.msra.mxu0 0
        %3932 = vmatprep.subr.bf16.mxu0 0
        %3933 = vmatpush1.bf16.msra.mxu0 0
        %3934 = vmatprep.mubr.bf16.mxu0 0
        %3935 = vmatmul.mubr.bf16.gmra.mrb[0].mxu0 %v3823
        %v3936 = vpop.f32.mrb[0].mxu0
        %v3937 = vadd.f32 %v3852, %v3936
        %v3938 = vpop.f32.mrb[0].mxu0
        %v3939 = vpop.f32.mrb[0].mxu0
        %v3940 = vadd.f32 %v3852, %v3939
        %v3941 = vpop.f32.mrb[0].mxu0
        %3942 = vmatprep.mubr.bf16.mxu0 0
        %3943 = vmatmul.mubr.bf16.gmra.mrb[0].mxu0 %v3824
        %v3944 = vpop.f32.mrb[0].mxu0
        %v3945 = vadd.f32 %v3852, %v3944
        %v3946 = vpop.f32.mrb[0].mxu0
        %v3947 = vpop.f32.mrb[0].mxu0
        %v3948 = vadd.f32 %v3852, %v3947
        %v3949 = vpop.f32.mrb[0].mxu0
        %3950 = vmatprep.mubr.bf16.mxu0 0
        %3951 = vmatmul.mubr.bf16.gmra.mrb[0].mxu0 %v3825
        %v3952 = vpop.f32.mrb[0].mxu0
        %v3953 = vadd.f32 %v3852, %v3952
        %v3954 = vpop.f32.mrb[0].mxu0
        %v3955 = vpop.f32.mrb[0].mxu0
        %v3956 = vadd.f32 %v3852, %v3955
        %v3957 = vpop.f32.mrb[0].mxu0
        %3958 = vmatprep.mubr.bf16.mxu0 0
        %3959 = vmatmul.mubr.bf16.gmra.mrb[0].mxu0 %v3826
        %v3960 = vpop.f32.mrb[0].mxu0
        %v3961 = vadd.f32 %v3852, %v3960
        %v3962 = vpop.f32.mrb[0].mxu0
        %v3963 = vpop.f32.mrb[0].mxu0
        %v3964 = vadd.f32 %v3852, %v3963
        %v3965 = vpop.f32.mrb[0].mxu0
        %3966 = vmatprep.mubr.bf16.mxu0 0
        %3967 = vmatmul.mubr.bf16.gmra.mrb[0].mxu0 %v3827
        %v3968 = vpop.f32.mrb[0].mxu0
        %v3969 = vadd.f32 %v3852, %v3968
        %v3970 = vpop.f32.mrb[0].mxu0
        %v3971 = vpop.f32.mrb[0].mxu0
        %v3972 = vadd.f32 %v3852, %v3971
        %v3973 = vpop.f32.mrb[0].mxu0
        %3974 = vmatprep.mubr.bf16.mxu0 0
        %3975 = vmatmul.mubr.bf16.gmra.mrb[0].mxu0 %v3828
        %v3976 = vpop.f32.mrb[0].mxu0
        %v3977 = vadd.f32 %v3852, %v3976
        %v3978 = vpop.f32.mrb[0].mxu0
        %v3979 = vpop.f32.mrb[0].mxu0
        %v3980 = vadd.f32 %v3852, %v3979
        %v3981 = vpop.f32.mrb[0].mxu0
        %3982 = vmatprep.mubr.bf16.mxu0 0
        %3983 = vmatmul.mubr.bf16.gmra.mrb[0].mxu0 %v3829
        %v3984 = vpop.f32.mrb[0].mxu0
        %v3985 = vadd.f32 %v3852, %v3984
        %v3986 = vpop.f32.mrb[0].mxu0
        %v3987 = vpop.f32.mrb[0].mxu0
        %v3988 = vadd.f32 %v3852, %v3987
        %v3989 = vpop.f32.mrb[0].mxu0
        %3990 = vmatprep.mubr.bf16.mxu0 0
        %3991 = vmatmul.mubr.bf16.gmra.mrb[0].mxu0 %v3830
        %v3992 = vpop.f32.mrb[0].mxu0
        %v3993 = vadd.f32 %v3852, %v3992
        %v3994 = vpop.f32.mrb[0].mxu0
        %v3995 = vpop.f32.mrb[0].mxu0
        %v3996 = vadd.f32 %v3852, %v3995
        %v3997 = vpop.f32.mrb[0].mxu0
        %3998 = vdwg.mxu0
        %v3999 = vmul.f32 %v3937, %v3937
        %v4000 = vmul.f32 %v3940, %v3940
        %v4001 = vmul.f32 %v3945, %v3945
        %v4002 = vmul.f32 %v3948, %v3948
        %v4003 = vmul.f32 %v3953, %v3953
        %v4004 = vmul.f32 %v3956, %v3956
        %v4005 = vmul.f32 %v3961, %v3961
        %v4006 = vmul.f32 %v3964, %v3964
        %v4007 = vmul.f32 %v3969, %v3969
        %v4008 = vmul.f32 %v3972, %v3972
        %v4009 = vmul.f32 %v3977, %v3977
        %v4010 = vmul.f32 %v3980, %v3980
        %v4011 = vmul.f32 %v3985, %v3985
        %v4012 = vmul.f32 %v3988, %v3988
        %v4013 = vmul.f32 %v3993, %v3993
        %v4014 = vmul.f32 %v3996, %v3996
        %v4015 = vmul.f32 %v3937, %v3999
        %v4016 = vmul.f32 %v3940, %v4000
        %v4017 = vmul.f32 %v3945, %v4001
        %v4018 = vmul.f32 %v3948, %v4002
        %v4019 = vmul.f32 %v3953, %v4003
        %v4020 = vmul.f32 %v3956, %v4004
        %v4021 = vmul.f32 %v3961, %v4005
        %v4022 = vmul.f32 %v3964, %v4006
        %v4023 = vmul.f32 %v3969, %v4007
        %v4024 = vmul.f32 %v3972, %v4008
        %v4025 = vmul.f32 %v3977, %v4009
        %v4026 = vmul.f32 %v3980, %v4010
        %v4027 = vmul.f32 %v3985, %v4011
        %v4028 = vmul.f32 %v3988, %v4012
        %v4029 = vmul.f32 %v3993, %v4013
        %v4030 = vmul.f32 %v3996, %v4014
        %v4031 = vmul.f32 %v4015, 0.044715
        %v4032 = vmul.f32 %v4016, 0.044715
        %v4033 = vmul.f32 %v4017, 0.044715
        %v4034 = vmul.f32 %v4018, 0.044715
        %v4035 = vmul.f32 %v4019, 0.044715
        %v4036 = vmul.f32 %v4020, 0.044715
        %v4037 = vmul.f32 %v4021, 0.044715
        %v4038 = vmul.f32 %v4022, 0.044715
        %v4039 = vmul.f32 %v4023, 0.044715
        %v4040 = vmul.f32 %v4024, 0.044715
        %v4041 = vmul.f32 %v4025, 0.044715
        %v4042 = vmul.f32 %v4026, 0.044715
        %v4043 = vmul.f32 %v4027, 0.044715
        %v4044 = vmul.f32 %v4028, 0.044715
        %v4045 = vmul.f32 %v4029, 0.044715
        %v4046 = vmul.f32 %v4030, 0.044715
        %v4047 = vadd.f32 %v3937, %v4031
        %v4048 = vadd.f32 %v3940, %v4032
        %v4049 = vadd.f32 %v3945, %v4033
        %v4050 = vadd.f32 %v3948, %v4034
        %v4051 = vadd.f32 %v3953, %v4035
        %v4052 = vadd.f32 %v3956, %v4036
        %v4053 = vadd.f32 %v3961, %v4037
        %v4054 = vadd.f32 %v3964, %v4038
        %v4055 = vadd.f32 %v3969, %v4039
        %v4056 = vadd.f32 %v3972, %v4040
        %v4057 = vadd.f32 %v3977, %v4041
        %v4058 = vadd.f32 %v3980, %v4042
        %v4059 = vadd.f32 %v3985, %v4043
        %v4060 = vadd.f32 %v3988, %v4044
        %v4061 = vadd.f32 %v3993, %v4045
        %v4062 = vadd.f32 %v3996, %v4046
        %v4063 = vmul.f32 %v4047, 0.7978846
        %v4064 = vmul.f32 %v4048, 0.7978846
        %v4065 = vmul.f32 %v4049, 0.7978846
        %v4066 = vmul.f32 %v4050, 0.7978846
        %v4067 = vmul.f32 %v4051, 0.7978846
        %v4068 = vmul.f32 %v4052, 0.7978846
        %v4069 = vmul.f32 %v4053, 0.7978846
        %v4070 = vmul.f32 %v4054, 0.7978846
        %v4071 = vmul.f32 %v4055, 0.7978846
        %v4072 = vmul.f32 %v4056, 0.7978846
        %v4073 = vmul.f32 %v4057, 0.7978846
        %v4074 = vmul.f32 %v4058, 0.7978846
        %v4075 = vmul.f32 %v4059, 0.7978846
        %v4076 = vmul.f32 %v4060, 0.7978846
        %v4077 = vmul.f32 %v4061, 0.7978846
        %v4078 = vmul.f32 %v4062, 0.7978846
        %v4079 = vtanh.pop %v4063
        %v4080 = vtanh.pop %v4064
        %v4081 = vtanh.pop %v4065
        %v4082 = vtanh.pop %v4066
        %v4083 = vtanh.pop %v4067
        %v4084 = vtanh.pop %v4068
        %v4085 = vtanh.pop %v4069
        %v4086 = vtanh.pop %v4070
        %v4087 = vtanh.pop %v4071
        %v4088 = vtanh.pop %v4072
        %v4089 = vtanh.pop %v4073
        %v4090 = vtanh.pop %v4074
        %v4091 = vtanh.pop %v4075
        %v4092 = vtanh.pop %v4076
        %v4093 = vtanh.pop %v4077
        %v4094 = vtanh.pop %v4078
        %v4095 = vadd.f32 %v4079, 1.0
        %v4096 = vadd.f32 %v4080, 1.0
        %v4097 = vadd.f32 %v4081, 1.0
        %v4098 = vadd.f32 %v4082, 1.0
        %v4099 = vadd.f32 %v4083, 1.0
        %v4100 = vadd.f32 %v4084, 1.0
        %v4101 = vadd.f32 %v4085, 1.0
        %v4102 = vadd.f32 %v4086, 1.0
        %v4103 = vadd.f32 %v4087, 1.0
        %v4104 = vadd.f32 %v4088, 1.0
        %v4105 = vadd.f32 %v4089, 1.0
        %v4106 = vadd.f32 %v4090, 1.0
        %v4107 = vadd.f32 %v4091, 1.0
        %v4108 = vadd.f32 %v4092, 1.0
        %v4109 = vadd.f32 %v4093, 1.0
        %v4110 = vadd.f32 %v4094, 1.0
        %v4111 = vmul.f32 %v4095, 0.5
        %v4112 = vmul.f32 %v4096, 0.5
        %v4113 = vmul.f32 %v4097, 0.5
        %v4114 = vmul.f32 %v4098, 0.5
        %v4115 = vmul.f32 %v4099, 0.5
        %v4116 = vmul.f32 %v4100, 0.5
        %v4117 = vmul.f32 %v4101, 0.5
        %v4118 = vmul.f32 %v4102, 0.5
        %v4119 = vmul.f32 %v4103, 0.5
        %v4120 = vmul.f32 %v4104, 0.5
        %v4121 = vmul.f32 %v4105, 0.5
        %v4122 = vmul.f32 %v4106, 0.5
        %v4123 = vmul.f32 %v4107, 0.5
        %v4124 = vmul.f32 %v4108, 0.5
        %v4125 = vmul.f32 %v4109, 0.5
        %v4126 = vmul.f32 %v4110, 0.5
        %v4127 = vmul.f32 %v3937, %v4111
        %v4128 = vmul.f32 %v3940, %v4112
        %v4129 = vmul.f32 %v3945, %v4113
        %v4130 = vmul.f32 %v3948, %v4114
        %v4131 = vmul.f32 %v3953, %v4115
        %v4132 = vmul.f32 %v3956, %v4116
        %v4133 = vmul.f32 %v3961, %v4117
        %v4134 = vmul.f32 %v3964, %v4118
        %v4135 = vmul.f32 %v3969, %v4119
        %v4136 = vmul.f32 %v3972, %v4120
        %v4137 = vmul.f32 %v3977, %v4121
        %v4138 = vmul.f32 %v3980, %v4122
        %v4139 = vmul.f32 %v3985, %v4123
        %v4140 = vmul.f32 %v3988, %v4124
        %v4141 = vmul.f32 %v3993, %v4125
        %v4142 = vmul.f32 %v3996, %v4126
        %v4143 = vpack.c.bf16 %v4128, %v4127
        %v4144 = vpack.c.bf16 %v4130, %v4129
        %v4145 = vpack.c.bf16 %v4132, %v4131
        %v4146 = vpack.c.bf16 %v4134, %v4133
        %v4147 = vpack.c.bf16 %v4136, %v4135
        %v4148 = vpack.c.bf16 %v4138, %v4137
        %v4149 = vpack.c.bf16 %v4140, %v4139
        %v4150 = vpack.c.bf16 %v4142, %v4141
        %v4151 = vld [vmem:[#allocation11] sm:$0xf]
        %v4152 = vld [vmem:[#allocation11 + $0x4] sm:$0xf]
        %v4153 = vld [vmem:[#allocation11 + $0x8] sm:$0xf]
        %v4154 = vld [vmem:[#allocation11 + $0xc] sm:$0xf]
        %v4155 = vld [vmem:[#allocation11 + $0x10] sm:$0xf]
        %v4156 = vld [vmem:[#allocation11 + $0x14] sm:$0xf]
        %v4157 = vld [vmem:[#allocation11 + $0x18] sm:$0xf]
        %v4158 = vld [vmem:[#allocation11 + $0x1c] sm:$0xf]
        %v4159 = vld [vmem:[#allocation11 + $0x20] sm:$0xf]
        %v4160 = vld [vmem:[#allocation11 + $0x24] sm:$0xf]
        %v4161 = vld [vmem:[#allocation11 + $0x28] sm:$0xf]
        %v4162 = vld [vmem:[#allocation11 + $0x2c] sm:$0xf]
        %v4163 = vld [vmem:[#allocation11 + $0x30] sm:$0xf]
        %v4164 = vld [vmem:[#allocation11 + $0x34] sm:$0xf]
        %v4165 = vld [vmem:[#allocation11 + $0x38] sm:$0xf]
        %v4166 = vld [vmem:[#allocation11 + $0x3c] sm:$0xf]
        %v4167 = vld [vmem:[%s9] sm:$0x1]
        %v4169 = vlaneseq
        %v4170 = vshrl.u32 %v4169, 7
        %v4171 = vsub.s32 0, %v4170
        %v4172 = vrot.slane %v4167, %v4171
        %v4190 = vunpack.c.l.b16 %v4151
        %v4191 = vunpack.c.l.b16 %v4152
        %v4192 = vunpack.c.l.b16 %v4153
        %v4193 = vunpack.c.l.b16 %v4154
        %v4194 = vunpack.c.l.b16 %v4155
        %v4195 = vunpack.c.l.b16 %v4156
        %v4196 = vunpack.c.l.b16 %v4157
        %v4197 = vunpack.c.l.b16 %v4158
        %v4198 = vunpack.c.l.b16 %v4159
        %v4199 = vunpack.c.l.b16 %v4160
        %v4200 = vunpack.c.l.b16 %v4161
        %v4201 = vunpack.c.l.b16 %v4162
        %v4202 = vunpack.c.l.b16 %v4163
        %v4203 = vunpack.c.l.b16 %v4164
        %v4204 = vunpack.c.l.b16 %v4165
        %v4205 = vunpack.c.l.b16 %v4166
        %v4206 = vpack.c.b16 %v4191, %v4190
        %v4207 = vpack.c.b16 %v4193, %v4192
        %v4208 = vpack.c.b16 %v4195, %v4194
        %v4209 = vpack.c.b16 %v4197, %v4196
        %v4210 = vpack.c.b16 %v4199, %v4198
        %v4211 = vpack.c.b16 %v4201, %v4200
        %v4212 = vpack.c.b16 %v4203, %v4202
        %v4213 = vpack.c.b16 %v4205, %v4204
        %4222 = vmatprep.subr.bf16.mxu0 0
        %4223 = vmatpush1.bf16.msra.mxu0 %v4206
        %4224 = vmatprep.subr.bf16.mxu0 0
        %4225 = vmatpush1.bf16.msra.mxu0 %v4207
        %4226 = vmatprep.subr.bf16.mxu0 0
        %4227 = vmatpush1.bf16.msra.mxu0 %v4208
        %4228 = vmatprep.subr.bf16.mxu0 0
        %4229 = vmatpush1.bf16.msra.mxu0 %v4209
        %4230 = vmatprep.subr.bf16.mxu0 0
        %4231 = vmatpush1.bf16.msra.mxu0 %v4210
        %4232 = vmatprep.subr.bf16.mxu0 0
        %4233 = vmatpush1.bf16.msra.mxu0 %v4211
        %4234 = vmatprep.subr.bf16.mxu0 0
        %4235 = vmatpush1.bf16.msra.mxu0 %v4212
        %4236 = vmatprep.subr.bf16.mxu0 0
        %4237 = vmatpush1.bf16.msra.mxu0 %v4213
        %4238 = vmatprep.subr.bf16.mxu0 0
        %4239 = vmatpush1.bf16.msra.mxu0 0
        %4240 = vmatprep.subr.bf16.mxu0 0
        %4241 = vmatpush1.bf16.msra.mxu0 0
        %4242 = vmatprep.subr.bf16.mxu0 0
        %4243 = vmatpush1.bf16.msra.mxu0 0
        %4244 = vmatprep.subr.bf16.mxu0 0
        %4245 = vmatpush1.bf16.msra.mxu0 0
        %4246 = vmatprep.subr.bf16.mxu0 0
        %4247 = vmatpush1.bf16.msra.mxu0 0
        %4248 = vmatprep.subr.bf16.mxu0 0
        %4249 = vmatpush1.bf16.msra.mxu0 0
        %4250 = vmatprep.subr.bf16.mxu0 0
        %4251 = vmatpush1.bf16.msra.mxu0 0
        %4252 = vmatprep.subr.bf16.mxu0 0
        %4253 = vmatpush1.bf16.msra.mxu0 0
        %4254 = vmatprep.mubr.bf16.mxu0 0
        %4255 = vmatmul.mubr.bf16.gmra.mrb[0].mxu0 %v4143
        %v4256 = vpop.f32.mrb[0].mxu0
        %v4257 = vadd.f32 %v4172, %v4256
        %v4258 = vpop.f32.mrb[0].mxu0
        %v4259 = vpop.f32.mrb[0].mxu0
        %v4260 = vadd.f32 %v4172, %v4259
        %v4261 = vpop.f32.mrb[0].mxu0
        %4262 = vmatprep.mubr.bf16.mxu0 0
        %4263 = vmatmul.mubr.bf16.gmra.mrb[0].mxu0 %v4144
        %v4264 = vpop.f32.mrb[0].mxu0
        %v4265 = vadd.f32 %v4172, %v4264
        %v4266 = vpop.f32.mrb[0].mxu0
        %v4267 = vpop.f32.mrb[0].mxu0
        %v4268 = vadd.f32 %v4172, %v4267
        %v4269 = vpop.f32.mrb[0].mxu0
        %4270 = vmatprep.mubr.bf16.mxu0 0
        %4271 = vmatmul.mubr.bf16.gmra.mrb[0].mxu0 %v4145
        %v4272 = vpop.f32.mrb[0].mxu0
        %v4273 = vadd.f32 %v4172, %v4272
        %v4274 = vpop.f32.mrb[0].mxu0
        %v4275 = vpop.f32.mrb[0].mxu0
        %v4276 = vadd.f32 %v4172, %v4275
        %v4277 = vpop.f32.mrb[0].mxu0
        %4278 = vmatprep.mubr.bf16.mxu0 0
        %4279 = vmatmul.mubr.bf16.gmra.mrb[0].mxu0 %v4146
        %v4280 = vpop.f32.mrb[0].mxu0
        %v4281 = vadd.f32 %v4172, %v4280
        %v4282 = vpop.f32.mrb[0].mxu0
        %v4283 = vpop.f32.mrb[0].mxu0
        %v4284 = vadd.f32 %v4172, %v4283
        %v4285 = vpop.f32.mrb[0].mxu0
        %4286 = vmatprep.mubr.bf16.mxu0 0
        %4287 = vmatmul.mubr.bf16.gmra.mrb[0].mxu0 %v4147
        %v4288 = vpop.f32.mrb[0].mxu0
        %v4289 = vadd.f32 %v4172, %v4288
        %v4290 = vpop.f32.mrb[0].mxu0
        %v4291 = vpop.f32.mrb[0].mxu0
        %v4292 = vadd.f32 %v4172, %v4291
        %v4293 = vpop.f32.mrb[0].mxu0
        %4294 = vmatprep.mubr.bf16.mxu0 0
        %4295 = vmatmul.mubr.bf16.gmra.mrb[0].mxu0 %v4148
        %v4296 = vpop.f32.mrb[0].mxu0
        %v4297 = vadd.f32 %v4172, %v4296
        %v4298 = vpop.f32.mrb[0].mxu0
        %v4299 = vpop.f32.mrb[0].mxu0
        %v4300 = vadd.f32 %v4172, %v4299
        %v4301 = vpop.f32.mrb[0].mxu0
        %4302 = vmatprep.mubr.bf16.mxu0 0
        %4303 = vmatmul.mubr.bf16.gmra.mrb[0].mxu0 %v4149
        %v4304 = vpop.f32.mrb[0].mxu0
        %v4305 = vadd.f32 %v4172, %v4304
        %v4306 = vpop.f32.mrb[0].mxu0
        %v4307 = vpop.f32.mrb[0].mxu0
        %v4308 = vadd.f32 %v4172, %v4307
        %v4309 = vpop.f32.mrb[0].mxu0
        %4310 = vmatprep.mubr.bf16.mxu0 0
        %4311 = vmatmul.mubr.bf16.gmra.mrb[0].mxu0 %v4150
        %v4312 = vpop.f32.mrb[0].mxu0
        %v4313 = vadd.f32 %v4172, %v4312
        %v4314 = vpop.f32.mrb[0].mxu0
        %v4315 = vpop.f32.mrb[0].mxu0
        %v4316 = vadd.f32 %v4172, %v4315
        %v4317 = vpop.f32.mrb[0].mxu0
        %4318 = vdwg.mxu0
        %s4319 = scalar_lea.vmem [#allocation2], 72
        %v4320 = vld [vmem:[%s4319 + $0x3] sm:$0xff]
        %v4321 = vld [vmem:[%s4319 + $0xb] sm:$0xff]
        %v4322 = vld [vmem:[%s4319 + $0x1b] sm:$0xff]
        %v4323 = vld [vmem:[%s4319 + $0x23] sm:$0xff]
        %v4324 = vld [vmem:[%s4319 + $0x33] sm:$0xff]
        %v4325 = vld [vmem:[%s4319 + $0x3b] sm:$0xff]
        %v4326 = vld [vmem:[%s4319 + $0x4b] sm:$0xff]
        %v4327 = vld [vmem:[%s4319 + $0x53] sm:$0xff]
        %v4328 = vld [vmem:[%s4319 + $0x63] sm:$0xff]
        %v4329 = vld [vmem:[%s4319 + $0x6b] sm:$0xff]
        %v4330 = vld [vmem:[%s4319 + $0x7b] sm:$0xff]
        %v4331 = vld [vmem:[%s4319 + $0x83] sm:$0xff]
        %v4332 = vld [vmem:[%s4319 + $0x93] sm:$0xff]
        %v4333 = vld [vmem:[%s4319 + $0x9b] sm:$0xff]
        %v4334 = vld [vmem:[%s4319 + $0xab] sm:$0xff]
        %v4335 = vld [vmem:[%s4319 + $0xb3] sm:$0xff]
        %v4336 = vld [vmem:[%s10] sm:$0x1]
        %v4338 = vlaneseq
        %v4339 = vshrl.u32 %v4338, 7
        %v4340 = vsub.s32 0, %v4339
        %v4341 = vrot.slane %v4336, %v4340
        %v4343 = vmul.f32 %v4257, %v4341
        %v4344 = vmul.f32 %v4260, %v4341
        %v4345 = vmul.f32 %v4265, %v4341
        %v4346 = vmul.f32 %v4268, %v4341
        %v4347 = vmul.f32 %v4273, %v4341
        %v4348 = vmul.f32 %v4276, %v4341
        %v4349 = vmul.f32 %v4281, %v4341
        %v4350 = vmul.f32 %v4284, %v4341
        %v4351 = vmul.f32 %v4289, %v4341
        %v4352 = vmul.f32 %v4292, %v4341
        %v4353 = vmul.f32 %v4297, %v4341
        %v4354 = vmul.f32 %v4300, %v4341
        %v4355 = vmul.f32 %v4305, %v4341
        %v4356 = vmul.f32 %v4308, %v4341
        %v4357 = vmul.f32 %v4313, %v4341
        %v4358 = vmul.f32 %v4316, %v4341
        %v4359 = vadd.f32 %v4343, %v4320
        %v4360 = vadd.f32 %v4344, %v4321
        %v4361 = vadd.f32 %v4345, %v4322
        %v4362 = vadd.f32 %v4346, %v4323
        %v4363 = vadd.f32 %v4347, %v4324
        %v4364 = vadd.f32 %v4348, %v4325
        %v4365 = vadd.f32 %v4349, %v4326
        %v4366 = vadd.f32 %v4350, %v4327
        %v4367 = vadd.f32 %v4351, %v4328
        %v4368 = vadd.f32 %v4352, %v4329
        %v4369 = vadd.f32 %v4353, %v4330
        %v4370 = vadd.f32 %v4354, %v4331
        %v4371 = vadd.f32 %v4355, %v4332
        %v4372 = vadd.f32 %v4356, %v4333
        %v4373 = vadd.f32 %v4357, %v4334
        %v4374 = vadd.f32 %v4358, %v4335
        %4375 = vst [vmem:[%s514] sm:$0xff] %v4359
        %4376 = vst [vmem:[%s514 + $0x8] sm:$0xff] %v4360
        %4377 = vst [vmem:[%s514 + $0x10] sm:$0xff] %v4361
        %4378 = vst [vmem:[%s514 + $0x18] sm:$0xff] %v4362
        %4379 = vst [vmem:[%s514 + $0x20] sm:$0xff] %v4363
        %4380 = vst [vmem:[%s514 + $0x28] sm:$0xff] %v4364
        %4381 = vst [vmem:[%s514 + $0x30] sm:$0xff] %v4365
        %4382 = vst [vmem:[%s514 + $0x38] sm:$0xff] %v4366
        %4383 = vst [vmem:[%s514 + $0x40] sm:$0xff] %v4367
        %4384 = vst [vmem:[%s514 + $0x48] sm:$0xff] %v4368
        %4385 = vst [vmem:[%s514 + $0x50] sm:$0xff] %v4369
        %4386 = vst [vmem:[%s514 + $0x58] sm:$0xff] %v4370
        %4387 = vst [vmem:[%s514 + $0x60] sm:$0xff] %v4371
        %4388 = vst [vmem:[%s514 + $0x68] sm:$0xff] %v4372
        %4389 = vst [vmem:[%s514 + $0x70] sm:$0xff] %v4373
        %4390 = vst [vmem:[%s514 + $0x78] sm:$0xff] %v4374
        %s4391 = sand.u32 %s301, 1
        %s4392 = scalar_lea.sflag [#allocation5], %s4391
        %s4393 = sand.u32 %s301, 1
        %s4394 = smul.addr %s4393, 128
        %s4395 = scalar_lea.vmem [#allocation12], %s4394
        // Predicated region
        $region85: #{tpu_custom_call.1} parent=63 // pred_check
          %p4396 = pneg %p311
        $region86: #{tpu_custom_call.1} parent=63 // pred_check_branch
          %4398 = sbr.rel (%p4396) target = $region88
        $region87: #{tpu_custom_call.1} parent=63 // pred_region
          %s4399 = smul.u32 8, %s37
          %s4401 = ssub.s32 2048, 2048
          %4402 = vsyncadd %s4392, %s4401
          %s4403 = smul.addr %s4399, 2
          %s4404 = smul.addr %s36, 32
          %s4405 = sadd.s32 %s4403, %s4404
          %s4406 = smul.addr %s4405, 128
          %s4407 = scalar_lea.hbm %s11, %s4406
          %s4408 = sshll.u32 %s4395, 4
          %s4409 = int_to_ptr.vmem [resolvable:$true] %s4408
          %4414 = dma.vmem_to_hbm [thread:$0]  %s4409, 2048, %s4407, %s4392, 128, 128, 8
        $region88: #{tpu_custom_call.1} parent=63 // pred_fallthru
          _
      $region64: #{tpu_custom_call.1} parent=5 // pred_fallthru
        _
      %p4415 = scmp.le.s32.totalorder 2, %s27
      // Predicated region
      $region89: #{tpu_custom_call.1} parent=5 // pred_check
        %p4416 = pneg %p4415
      $region90: #{tpu_custom_call.1} parent=5 // pred_check_branch
        %4418 = sbr.rel (%p4416) target = $region92
      $region91: #{tpu_custom_call.1} parent=5 // pred_region
        %s4419 = ssub.s32 %s27, 2
        // Predicated region
        $region93: #{tpu_custom_call.1} parent=91 // pred_check
          %p4420 = pneg %p317
        $region94: #{tpu_custom_call.1} parent=91 // pred_check_branch
          %4422 = sbr.rel (%p4420) target = $region96
        $region95: #{tpu_custom_call.1} parent=91 // pred_region
          %s4423 = sand.u32 %s302, 1
          %s4424 = scalar_lea.sflag [#allocation5], %s4423
          %s4425 = sand.u32 %s302, 1
          %s4426 = smul.addr %s4425, 128
          %s4427 = scalar_lea.vmem [#allocation12], %s4426
          %4428 = dma.done %s4424, 2048
        $region96: #{tpu_custom_call.1} parent=91 // pred_fallthru
          _
      $region92: #{tpu_custom_call.1} parent=5 // pred_fallthru
        _
    $region6: #{tpu_custom_call.1} parent=1 // loop_footer
      %s31 = sadd.s32 1, %s27
    $region7: #{tpu_custom_call.1} parent=1 // loop_footer_branch
      %26 = sbr.rel target = $region3
    $region8: #{tpu_custom_call.1} parent=1 // loop_exit
      _
    %4429 = vsyncpa [#allocation4], 1
    %s4430 = scalar_lea.sflag [#allocation4], 1
    %4431 = vsyncpa %s4430, 1
    %4432 = vsyncpa [#allocation7], 1
    %s4433 = scalar_lea.sflag [#allocation7], 1
    %4434 = vsyncpa %s4433, 1
    %4435 = vsyncpa [#allocation10], 1
    %4436 = vsyncpa [#allocation5], 1
    %s4437 = scalar_lea.sflag [#allocation5], 1
    %4438 = vsyncpa %s4437, 1

</llo_original>
